<compile_context>
chip_gen: v5e
topology: v5e:2x2
jax: 0.10.0
libtpu: 0.0.40
codegen_flags: <defaults>
</compile_context>

<pallas_src>
import functools

import jax
import jax.numpy as jnp
from jax.experimental import pallas as pl
from jax.experimental.pallas import tpu as pltpu

_BIG = 3.0e38   # sentinel (< f32 max) for "no positive label"
_NEG = -1.0e30  # score padding value; sigmoid(_NEG - s) == 0 exactly in f32


def _round_up(x, m):
    return ((x + m - 1) // m) * m


def smooth_mrr_kernel(si_ref, sj_ref, li_ref, loss_ref,
                      ranks_acc, minr_acc, *, compute_dtype):
    i = pl.program_id(1)
    j = pl.program_id(2)
    ni = pl.num_programs(1)
    nj = pl.num_programs(2)

    # New batch tile: reset the running min of positive ranks.
    @pl.when(jnp.logical_and(i == 0, j == 0))
    def _():
        minr_acc[...] = jnp.full_like(minr_acc, _BIG)

    # New i tile: reset the rank accumulator (the +0.5 is baked into the init).
    @pl.when(j == 0)
    def _():
        ranks_acc[...] = jnp.full_like(ranks_acc, 0.5)

    si = si_ref[...].astype(compute_dtype)          # (TB, TI)  "rank of" docs
    sj = sj_ref[...].astype(compute_dtype)          # (TB, TJ)  "compared to" docs
    diff = sj[:, None, :] - si[:, :, None]          # (TB, TI, TJ)
    is_lower = jax.nn.sigmoid(diff)                 # EUP transcendental
    ranks_acc[...] += jnp.sum(is_lower.astype(jnp.float32), axis=-1)

    # Last j tile: ranks for this i tile are complete -> fold into the row min.
    @pl.when(j == nj - 1)
    def _():
        lab = li_ref[...]                                        # (TB, TI)
        ranks_pos = jnp.where(lab > 0, ranks_acc[...], _BIG)
        tile_min = jnp.min(ranks_pos, axis=-1, keepdims=True)    # (TB, 1)
        minr_acc[...] = jnp.minimum(minr_acc[...], tile_min)

    # Last (i, j) tile for this batch tile: emit the per-row loss.
    @pl.when(jnp.logical_and(i == ni - 1, j == nj - 1))
    def _():
        minr = minr_acc[...]
        rr_max = jnp.where(minr < _BIG,
                           pl.reciprocal(minr, approx=True),
                           0.0)
        loss_ref[...] = 1.0 - rr_max


def smooth_mrr_loss(scores, labels, agg=True, compute_dtype=jnp.float32):
    """Pallas implementation of SmoothMRRLoss.forward.

    compute_dtype: f32 everywhere by default; pass jnp.bfloat16 on v6e/v7x to
    halve vreg pressure for the dominant N^2 sigmoid (ranks still accumulate
    in f32).
    """
    scores = jnp.asarray(scores, jnp.float32)
    labels = jnp.asarray(labels, jnp.float32)
    B, N = scores.shape

    # Lane-dense candidate axis, padded with a sentinel that contributes 0.
    LANE = 128
    N_pad = _round_up(max(N, LANE), LANE)
    # Candidate tile size (both i and j): 256 when it divides, else 128.
    T = 256 if N_pad % 256 == 0 else 128
    # Batch tile: multiple of 8 sublanes, capped so the (TB, T, T) f32 sigmoid
    # tile stays well inside every generation's scoped VMEM (incl. v7x 64 MiB).
    TB = min(_round_up(B, 8), 16)
    B_pad = _round_up(B, TB)

    scores_p = jnp.full((B_pad, N_pad), _NEG, jnp.float32).at[:B, :N].set(scores)
    labels_p = jnp.zeros((B_pad, N_pad), jnp.float32).at[:B, :N].set(labels)

    grid = (B_pad // TB, N_pad // T, N_pad // T)
    kernel = functools.partial(smooth_mrr_kernel, compute_dtype=compute_dtype)

    per_row = pl.pallas_call(
        kernel,
        out_shape=jax.ShapeDtypeStruct((B_pad, 1), jnp.float32),
        grid=grid,
        in_specs=[
            pl.BlockSpec((TB, T), lambda b, i, j: (b, i)),   # scores: i tile
            pl.BlockSpec((TB, T), lambda b, i, j: (b, j)),   # scores: j tile
            pl.BlockSpec((TB, T), lambda b, i, j: (b, i)),   # labels: i tile
        ],
        out_specs=pl.BlockSpec((TB, 1), lambda b, i, j: (b, 0)),
        scratch_shapes=[
            pltpu.VMEM((TB, T), jnp.float32),   # ranks accumulator (over j)
            pltpu.VMEM((TB, 1), jnp.float32),   # running min positive rank
        ],
        compiler_params=pltpu.CompilerParams(
            dimension_semantics=("parallel", "arbitrary", "arbitrary"),
            vmem_limit_bytes=32 * 1024 * 1024,
        ),
        cost_estimate=pl.CostEstimate(
            flops=4 * B_pad * N_pad * N_pad,
            transcendentals=B_pad * N_pad * N_pad,
            bytes_accessed=8 * B_pad * N_pad + 4 * B_pad,
        ),
    )(scores_p, scores_p, labels_p)

    loss = per_row[:B, 0]
    if agg:
        loss = jnp.mean(loss)
    return loss


def smooth_mrr_loss_ref(scores, labels, agg=True):
    """Pure-JAX reference mirroring the PyTorch forward, for validation."""
    scores = scores.astype(jnp.float32)
    labels = labels.astype(jnp.float32)
    diff = scores[..., None, :] - scores[..., :, None]
    ranks = jnp.sum(jax.nn.sigmoid(diff), axis=-1) + 0.5
    labels_bin = jnp.where(labels > 0, 1.0, 0.0)
    rr = labels_bin / ranks
    loss = 1.0 - jnp.max(rr, axis=-1)
    if agg:
        loss = jnp.mean(loss)
    return loss


if __name__ == "__main__":
    key = jax.random.PRNGKey(0)
    k_scores, k_labels = jax.random.split(key)

    B, N = 8, 16  # small demo: 8 queries, 16 candidate docs each
    scores = jax.random.normal(k_scores, (B, N), dtype=jnp.float32)
    labels = (jax.random.uniform(k_labels, (B, N)) > 0.7).astype(jnp.float32)

    loss = smooth_mrr_loss(scores, labels, agg=True)
    jax.block_until_ready(loss)
    loss_ref = smooth_mrr_loss_ref(scores, labels, agg=True)
    # tolerance loosened slightly for pl.reciprocal(approx=True)
    assert jnp.allclose(loss, loss_ref, atol=2e-3, rtol=2e-3), (loss, loss_ref)

    loss_rows = smooth_mrr_loss(scores, labels, agg=False)
    jax.block_until_ready(loss_rows)
    loss_rows_ref = smooth_mrr_loss_ref(scores, labels, agg=False)
    assert jnp.allclose(loss_rows, loss_rows_ref, atol=2e-3, rtol=2e-3), (
        loss_rows, loss_rows_ref)

    print("KERNEL_OK")
</pallas_src>

<mosaic_0001>
module attributes {stable_mosaic.version = 11 : i64} {
  func.func @smooth_mrr_kernel(%arg0: i32, %arg1: i32, %arg2: i32, %arg3: memref<8x128xf32, #tpu.memory_space<vmem>>, %arg4: memref<8x128xf32, #tpu.memory_space<vmem>>, %arg5: memref<8x128xf32, #tpu.memory_space<vmem>>, %arg6: memref<8x1xf32, #tpu.memory_space<vmem>>, %arg7: memref<8x128xf32, #tpu.memory_space<vmem>>, %arg8: memref<8x1xf32, #tpu.memory_space<vmem>>) attributes {dimension_semantics = [#tpu.dimension_semantics<parallel>, #tpu.dimension_semantics<arbitrary>, #tpu.dimension_semantics<arbitrary>], iteration_bounds = array<i64: 1, 1, 1>, scalar_prefetch = 0 : i64, scratch_operands = 2 : i64, tpu.core_type = #tpu.core_type<tc>, window_params = [{transform_indices = @transform_0, window_bounds = array<i64: 8, 128>}, {transform_indices = @transform_1, window_bounds = array<i64: 8, 128>}, {transform_indices = @transform_2, window_bounds = array<i64: 8, 128>}, {transform_indices = @transform_3, window_bounds = array<i64: 8, 1>}]} {
    %c0_i32 = arith.constant 0 : i32
    %0 = arith.cmpi eq, %arg1, %c0_i32 : i32
    %c0_i32_0 = arith.constant 0 : i32
    %1 = arith.cmpi eq, %arg2, %c0_i32_0 : i32
    %2 = arith.andi %0, %1 : i1
    %3 = arith.extui %2 : i1 to i32
    %c0_i32_1 = arith.constant 0 : i32
    %4 = arith.cmpi ne, %3, %c0_i32_1 : i32
    scf.if %4 {
      %cst_17 = arith.constant 3.000000e+38 : f32
      %32 = vector.broadcast %cst_17 : f32 to vector<8x1xf32>
      %c0_18 = arith.constant 0 : index
      %c0_19 = arith.constant 0 : index
      %33 = vector.load %arg8[%c0_18, %c0_19] : memref<8x1xf32, #tpu.memory_space<vmem>>, vector<8x1xf32>
      tpu.vector_store %arg8[%c0_18, %c0_19], %32 {strides = array<i32>} : memref<8x1xf32, #tpu.memory_space<vmem>>, vector<8x1xf32>,
    } else {
    }
    %c0_i32_2 = arith.constant 0 : i32
    %5 = arith.cmpi eq, %arg2, %c0_i32_2 : i32
    %6 = arith.extui %5 : i1 to i32
    %c0_i32_3 = arith.constant 0 : i32
    %7 = arith.cmpi ne, %6, %c0_i32_3 : i32
    scf.if %7 {
      %cst_17 = arith.constant 5.000000e-01 : f32
      %32 = vector.broadcast %cst_17 : f32 to vector<8x128xf32>
      %c0_18 = arith.constant 0 : index
      %c0_19 = arith.constant 0 : index
      %33 = vector.load %arg7[%c0_18, %c0_19] : memref<8x128xf32, #tpu.memory_space<vmem>>, vector<8x128xf32>
      tpu.vector_store %arg7[%c0_18, %c0_19], %32 {strides = array<i32>} : memref<8x128xf32, #tpu.memory_space<vmem>>, vector<8x128xf32>,
    } else {
    }
    %c0 = arith.constant 0 : index
    %c0_4 = arith.constant 0 : index
    %8 = vector.load %arg3[%c0, %c0_4] : memref<8x128xf32, #tpu.memory_space<vmem>>, vector<8x128xf32>
    %c0_5 = arith.constant 0 : index
    %c0_6 = arith.constant 0 : index
    %9 = vector.load %arg4[%c0_5, %c0_6] : memref<8x128xf32, #tpu.memory_space<vmem>>, vector<8x128xf32>
    %10 = vector.shape_cast %9 : vector<8x128xf32> to vector<8x1x128xf32>
    %11 = vector.shape_cast %8 : vector<8x128xf32> to vector<8x128x1xf32>
    %12 = vector.broadcast %10 : vector<8x1x128xf32> to vector<8x128x128xf32>
    %13 = vector.broadcast %11 : vector<8x128x1xf32> to vector<8x128x128xf32>
    %14 = arith.subf %12, %13 : vector<8x128x128xf32>
    %15 = arith.negf %14 : vector<8x128x128xf32>
    %16 = math.exp %15 : vector<8x128x128xf32>
    %cst = arith.constant 1.000000e+00 : f32
    %17 = vector.broadcast %cst : f32 to vector<8x128x128xf32>
    %18 = arith.addf %17, %16 : vector<8x128x128xf32>
    %19 = arith.divf %17, %18 : vector<8x128x128xf32>
    %c0_7 = arith.constant 0 : index
    %c0_8 = arith.constant 0 : index
    %20 = vector.load %arg7[%c0_7, %c0_8] : memref<8x128xf32, #tpu.memory_space<vmem>>, vector<8x128xf32>
    %cst_9 = arith.constant dense<0.000000e+00> : vector<8x128xf32>
    %21 = vector.multi_reduction <add>, %19, %cst_9 [2] : vector<8x128x128xf32> to vector<8x128xf32>
    %22 = arith.addf %20, %21 : vector<8x128xf32>
    %c0_10 = arith.constant 0 : index
    %c0_11 = arith.constant 0 : index
    %23 = vector.load %arg7[%c0_10, %c0_11] : memref<8x128xf32, #tpu.memory_space<vmem>>, vector<8x128xf32>
    tpu.vector_store %arg7[%c0_10, %c0_11], %22 {strides = array<i32>} : memref<8x128xf32, #tpu.memory_space<vmem>>, vector<8x128xf32>,
    %c0_i32_12 = arith.constant 0 : i32
    %24 = arith.cmpi eq, %arg2, %c0_i32_12 : i32
    %25 = arith.extui %24 : i1 to i32
    %c0_i32_13 = arith.constant 0 : i32
    %26 = arith.cmpi ne, %25, %c0_i32_13 : i32
    scf.if %26 {
      %c0_17 = arith.constant 0 : index
      %c0_18 = arith.constant 0 : index
      %32 = vector.load %arg5[%c0_17, %c0_18] : memref<8x128xf32, #tpu.memory_space<vmem>>, vector<8x128xf32>
      %cst_19 = arith.constant 0.000000e+00 : f32
      %33 = vector.broadcast %cst_19 : f32 to vector<8x128xf32>
      %34 = arith.cmpf ogt, %32, %33 : vector<8x128xf32>
      %c0_20 = arith.constant 0 : index
      %c0_21 = arith.constant 0 : index
      %35 = vector.load %arg7[%c0_20, %c0_21] : memref<8x128xf32, #tpu.memory_space<vmem>>, vector<8x128xf32>
      %cst_22 = arith.constant 3.000000e+38 : f32
      %36 = vector.broadcast %cst_22 : f32 to vector<8x128xf32>
      %37 = arith.select %34, %35, %36 : vector<8x128xi1>, vector<8x128xf32>
      %cst_23 = arith.constant dense<0x7F800000> : vector<8xf32>
      %38 = vector.multi_reduction <minimumf>, %37, %cst_23 [1] : vector<8x128xf32> to vector<8xf32>
      %39 = vector.shape_cast %38 : vector<8xf32> to vector<8x1xf32>
      %c0_24 = arith.constant 0 : index
      %c0_25 = arith.constant 0 : index
      %40 = vector.load %arg8[%c0_24, %c0_25] : memref<8x1xf32, #tpu.memory_space<vmem>>, vector<8x1xf32>
      %41 = arith.minimumf %40, %39 : vector<8x1xf32>
      %c0_26 = arith.constant 0 : index
      %c0_27 = arith.constant 0 : index
      %42 = vector.load %arg8[%c0_26, %c0_27] : memref<8x1xf32, #tpu.memory_space<vmem>>, vector<8x1xf32>
      tpu.vector_store %arg8[%c0_26, %c0_27], %41 {strides = array<i32>} : memref<8x1xf32, #tpu.memory_space<vmem>>, vector<8x1xf32>,
    } else {
    }
    %c0_i32_14 = arith.constant 0 : i32
    %27 = arith.cmpi eq, %arg1, %c0_i32_14 : i32
    %c0_i32_15 = arith.constant 0 : i32
    %28 = arith.cmpi eq, %arg2, %c0_i32_15 : i32
    %29 = arith.andi %27, %28 : i1
    %30 = arith.extui %29 : i1 to i32
    %c0_i32_16 = arith.constant 0 : i32
    %31 = arith.cmpi ne, %30, %c0_i32_16 : i32
    scf.if %31 {
      %c0_17 = arith.constant 0 : index
      %c0_18 = arith.constant 0 : index
      %32 = vector.load %arg8[%c0_17, %c0_18] : memref<8x1xf32, #tpu.memory_space<vmem>>, vector<8x1xf32>
      %cst_19 = arith.constant 3.000000e+38 : f32
      %33 = vector.broadcast %cst_19 : f32 to vector<8x1xf32>
      %34 = arith.cmpf olt, %32, %33 : vector<8x1xf32>
      %35 = tpu.reciprocal %32 {approx = true} : vector<8x1xf32> -> vector<8x1xf32>
      %cst_20 = arith.constant 0.000000e+00 : f32
      %36 = vector.broadcast %cst_20 : f32 to vector<8x1xf32>
      %37 = arith.select %34, %35, %36 : vector<8x1xi1>, vector<8x1xf32>
      %cst_21 = arith.constant 1.000000e+00 : f32
      %38 = vector.broadcast %cst_21 : f32 to vector<8x1xf32>
      %39 = arith.subf %38, %37 : vector<8x1xf32>
      %c0_22 = arith.constant 0 : index
      %c0_23 = arith.constant 0 : index
      %40 = vector.load %arg6[%c0_22, %c0_23] : memref<8x1xf32, #tpu.memory_space<vmem>>, vector<8x1xf32>
      tpu.vector_store %arg6[%c0_22, %c0_23], %39 {strides = array<i32>} : memref<8x1xf32, #tpu.memory_space<vmem>>, vector<8x1xf32>,
    } else {
    }
    return
  }
  func.func @transform_0(%arg0: i32, %arg1: i32, %arg2: i32) -> (i32, i32) {
    %c0_i32 = arith.constant 0 : i32
    return %arg0, %arg1 : i32, i32
  }
  func.func @transform_1(%arg0: i32, %arg1: i32, %arg2: i32) -> (i32, i32) {
    %c0_i32 = arith.constant 0 : i32
    return %arg0, %arg2 : i32, i32
  }
  func.func @transform_2(%arg0: i32, %arg1: i32, %arg2: i32) -> (i32, i32) {
    %c0_i32 = arith.constant 0 : i32
    return %arg0, %arg1 : i32, i32
  }
  func.func @transform_3(%arg0: i32, %arg1: i32, %arg2: i32) -> (i32, i32) {
    %c0_i32 = arith.constant 0 : i32
    %c0_i32_0 = arith.constant 0 : i32
    return %arg0, %c0_i32 : i32, i32
  }
}

</mosaic_0001>

<llo_original>
// kernel: tpu_custom_call.1
$region0: #{tpu_custom_call.1}
  #allocation0 [shape = 'u32[]', space=smem, size = 0x4, offset = 0x4, fixed_abs, tag = 'smem constant byte address 0x4 - core index']
  #allocation1 [shape = 'u32[72,128]{1,0:T(1,128)}', space=vmem, size = 0x9000, scoped, tag = 'internal scratch']
  #allocation2 [shape = 'f32[8,128]{1,0:T(8,128)}', space=vmem, size = 0x1000, scoped, tag = 'scratch operand']
  #allocation3 [shape = 'f32[8,1]{1,0:T(8,128)}', space=vmem, size = 0x1000, scoped, tag = 'scratch operand']
  %s0 = inlined_call_operand.hbm [shape: f32[8,128], index: 0, kind: input, shape index: {}]
  %s1 = inlined_call_operand.hbm [shape: f32[8,128], index: 1, kind: input, shape index: {}]
  %s2 = inlined_call_operand.hbm [shape: f32[8,128], index: 2, kind: input, shape index: {}]
  %s3 = inlined_call_operand.vmem [shape: f32[8,1], index: 3, kind: output, shape index: {}]
  %s4 = sld [smem:[#allocation0]]
  $region50: #{tpu_custom_call.1} parent=0
    _
  %s6 = ssub.s32 1, %s4
  %s7 = scalar_select 0, %s6, %s4
  $region1: #{tpu_custom_call.1} parent=0
    #allocation4 [shape = 'u8[4096]{0}', space=vmem, size = 0x1000, scoped, tag = 'input window, operand 0, single buffered']
    #allocation5 [shape = 's32[1]{0}', space=sflag, size = 0x4, scoped, tag = 'scoped memory for tpu_custom_call.1']
    #allocation6 [shape = 'u8[4096]{0}', space=vmem, size = 0x1000, scoped, tag = 'input window, operand 1, single buffered']
    #allocation7 [shape = 's32[1]{0}', space=sflag, size = 0x4, scoped, tag = 'scoped memory for tpu_custom_call.1']
    #allocation8 [shape = 'u8[4096]{0}', space=vmem, size = 0x1000, scoped, tag = 'input window, operand 2, single buffered']
    %8 = vsyncpa [#allocation5], 0
    %9 = vsyncpa [#allocation7], 0
    // Predicated region
    $region2: #{tpu_custom_call.1} parent=1 // pred_check
      _
    $region3: #{tpu_custom_call.1} parent=1 // pred_check_branch
      %11 = sbr.rel (0) target = $region5
    $region4: #{tpu_custom_call.1} parent=1 // pred_region
      %13 = vsyncadd [#allocation5], 0
      %s15 = sshll.u32 %s0, 4
      %s16 = int_to_ptr.hbm [resolvable:$true] %s15
      %s17 = sshll.u32 [#allocation4], 4
      %s18 = int_to_ptr.vmem [resolvable:$true] %s17
      %20 = dma.hbm_to_vmem [thread:$0]  %s16, 128, %s18, [#allocation5]
    $region5: #{tpu_custom_call.1} parent=1 // pred_fallthru
      _
    // Predicated region
    $region6: #{tpu_custom_call.1} parent=1 // pred_check
      _
    $region7: #{tpu_custom_call.1} parent=1 // pred_check_branch
      %22 = sbr.rel (0) target = $region9
    $region8: #{tpu_custom_call.1} parent=1 // pred_region
      %24 = vsyncadd [#allocation7], 0
      %s26 = sshll.u32 %s1, 4
      %s27 = int_to_ptr.hbm [resolvable:$true] %s26
      %s28 = sshll.u32 [#allocation6], 4
      %s29 = int_to_ptr.vmem [resolvable:$true] %s28
      %31 = dma.hbm_to_vmem [thread:$0]  %s27, 128, %s29, [#allocation7]
    $region9: #{tpu_custom_call.1} parent=1 // pred_fallthru
      _
    // Predicated region
    $region10: #{tpu_custom_call.1} parent=1 // pred_check
      _
    $region11: #{tpu_custom_call.1} parent=1 // pred_check_branch
      %33 = sbr.rel (0) target = $region13
    $region12: #{tpu_custom_call.1} parent=1 // pred_region
      %35 = vsyncadd [#allocation7], 0
      %s37 = sshll.u32 %s2, 4
      %s38 = int_to_ptr.hbm [resolvable:$true] %s37
      %s39 = sshll.u32 [#allocation8], 4
      %s40 = int_to_ptr.vmem [resolvable:$true] %s39
      %42 = dma.hbm_to_vmem [thread:$0]  %s38, 128, %s40, [#allocation7]
    $region13: #{tpu_custom_call.1} parent=1 // pred_fallthru
      _
    // Predicated region
    $region14: #{tpu_custom_call.1} parent=1 // pred_check
      _
    $region15: #{tpu_custom_call.1} parent=1 // pred_check_branch
      %44 = sbr.rel (0) target = $region17
    $region16: #{tpu_custom_call.1} parent=1 // pred_region
      %46 = dma.done [#allocation5], 128
    $region17: #{tpu_custom_call.1} parent=1 // pred_fallthru
      _
    // Predicated region
    $region18: #{tpu_custom_call.1} parent=1 // pred_check
      _
    $region19: #{tpu_custom_call.1} parent=1 // pred_check_branch
      %48 = sbr.rel (0) target = $region21
    $region20: #{tpu_custom_call.1} parent=1 // pred_region
      %50 = dma.done [#allocation7], 128
    $region21: #{tpu_custom_call.1} parent=1 // pred_fallthru
      _
    // Predicated region
    $region22: #{tpu_custom_call.1} parent=1 // pred_check
      _
    $region23: #{tpu_custom_call.1} parent=1 // pred_check_branch
      %52 = sbr.rel (0) target = $region25
    $region24: #{tpu_custom_call.1} parent=1 // pred_region
      %54 = dma.done [#allocation7], 128
    $region25: #{tpu_custom_call.1} parent=1 // pred_fallthru
      _
    %p55 = scmp.eq.s32.totalorder 0, 0
    %p56 = scmp.eq.s32.totalorder 0, 0
    %p57 = pnand %p55, %p56
    %p58 = pneg %p57
    // Predicated region
    $region26: #{tpu_custom_call.1} parent=1 // pred_check
      _
    $region27: #{tpu_custom_call.1} parent=1 // pred_check_branch
      %60 = sbr.rel (%p57) target = $region29
    $region28: #{tpu_custom_call.1} parent=1 // pred_region
      %vm61 = vcmask 7168
      %62 = vst.msk [vmem:[#allocation3] sm:$0xff] %vm61, 3e+38
    $region29: #{tpu_custom_call.1} parent=1 // pred_fallthru
      _
    // Predicated region
    $region30: #{tpu_custom_call.1} parent=1 // pred_check
      %p63 = pneg %p56
    $region31: #{tpu_custom_call.1} parent=1 // pred_check_branch
      %65 = sbr.rel (%p63) target = $region33
    $region32: #{tpu_custom_call.1} parent=1 // pred_region
      %66 = vst [vmem:[#allocation2] sm:$0xff] 0.5
    $region33: #{tpu_custom_call.1} parent=1 // pred_fallthru
      _
    %v67 = vld [vmem:[#allocation4] sm:$0xff]
    %v68 = vld [vmem:[#allocation6] sm:$0xff]
    %v70 = vrot.slane %v68, 1
    %v71 = vrot.slane %v68, 2
    %v72 = vrot.slane %v68, 3
    %v73 = vrot.slane %v68, 4
    %v74 = vrot.slane %v68, 5
    %v75 = vrot.slane %v68, 6
    %v76 = vrot.slane %v68, 7
    %v77 = vperm.slane %v67, 0
    %v78 = vlaneseq
    %v79 = vshrl.u32 %v78, 7
    %81 = vset.pattern.permute.xlu0 %v79
    %82 = vperm.xlu0 %81, %v77
    %v83 = vpop.permute.xlu0 %82
    %v84 = vlaneseq
    %v85 = vshrl.u32 %v84, 7
    %v86 = vadd.s32 %v85, 8
    %87 = vset.pattern.permute.xlu0 %v86
    %88 = vperm.xlu0 %87, %v77
    %v89 = vpop.permute.xlu0 %88
    %v90 = vlaneseq
    %v91 = vshrl.u32 %v90, 7
    %v92 = vadd.s32 %v91, 16
    %93 = vset.pattern.permute.xlu0 %v92
    %94 = vperm.xlu0 %93, %v77
    %v95 = vpop.permute.xlu0 %94
    %v96 = vlaneseq
    %v97 = vshrl.u32 %v96, 7
    %v98 = vadd.s32 %v97, 24
    %99 = vset.pattern.permute.xlu0 %v98
    %100 = vperm.xlu0 %99, %v77
    %v101 = vpop.permute.xlu0 %100
    %v102 = vlaneseq
    %v103 = vshrl.u32 %v102, 7
    %v104 = vadd.s32 %v103, 32
    %105 = vset.pattern.permute.xlu0 %v104
    %106 = vperm.xlu0 %105, %v77
    %v107 = vpop.permute.xlu0 %106
    %v108 = vlaneseq
    %v109 = vshrl.u32 %v108, 7
    %v110 = vadd.s32 %v109, 40
    %111 = vset.pattern.permute.xlu0 %v110
    %112 = vperm.xlu0 %111, %v77
    %v113 = vpop.permute.xlu0 %112
    %v114 = vlaneseq
    %v115 = vshrl.u32 %v114, 7
    %v116 = vadd.s32 %v115, 48
    %117 = vset.pattern.permute.xlu0 %v116
    %118 = vperm.xlu0 %117, %v77
    %v119 = vpop.permute.xlu0 %118
    %v120 = vlaneseq
    %v121 = vshrl.u32 %v120, 7
    %v122 = vadd.s32 %v121, 56
    %123 = vset.pattern.permute.xlu0 %v122
    %124 = vperm.xlu0 %123, %v77
    %v125 = vpop.permute.xlu0 %124
    %v126 = vlaneseq
    %v127 = vshrl.u32 %v126, 7
    %v128 = vadd.s32 %v127, 64
    %129 = vset.pattern.permute.xlu0 %v128
    %130 = vperm.xlu0 %129, %v77
    %v131 = vpop.permute.xlu0 %130
    %v132 = vlaneseq
    %v133 = vshrl.u32 %v132, 7
    %v134 = vadd.s32 %v133, 72
    %135 = vset.pattern.permute.xlu0 %v134
    %136 = vperm.xlu0 %135, %v77
    %v137 = vpop.permute.xlu0 %136
    %v138 = vlaneseq
    %v139 = vshrl.u32 %v138, 7
    %v140 = vadd.s32 %v139, 80
    %141 = vset.pattern.permute.xlu0 %v140
    %142 = vperm.xlu0 %141, %v77
    %v143 = vpop.permute.xlu0 %142
    %v144 = vlaneseq
    %v145 = vshrl.u32 %v144, 7
    %v146 = vadd.s32 %v145, 88
    %147 = vset.pattern.permute.xlu0 %v146
    %148 = vperm.xlu0 %147, %v77
    %v149 = vpop.permute.xlu0 %148
    %v150 = vlaneseq
    %v151 = vshrl.u32 %v150, 7
    %v152 = vadd.s32 %v151, 96
    %153 = vset.pattern.permute.xlu0 %v152
    %154 = vperm.xlu0 %153, %v77
    %v155 = vpop.permute.xlu0 %154
    %v156 = vlaneseq
    %v157 = vshrl.u32 %v156, 7
    %v158 = vadd.s32 %v157, 104
    %159 = vset.pattern.permute.xlu0 %v158
    %160 = vperm.xlu0 %159, %v77
    %v161 = vpop.permute.xlu0 %160
    %v162 = vlaneseq
    %v163 = vshrl.u32 %v162, 7
    %v164 = vadd.s32 %v163, 112
    %165 = vset.pattern.permute.xlu0 %v164
    %166 = vperm.xlu0 %165, %v77
    %v167 = vpop.permute.xlu0 %166
    %v168 = vlaneseq
    %v169 = vshrl.u32 %v168, 7
    %v170 = vadd.s32 %v169, 120
    %171 = vset.pattern.permute.xlu0 %v170
    %172 = vperm.xlu0 %171, %v77
    %v173 = vpop.permute.xlu0 %172
    %v174 = vperm.slane %v67, 1
    %v175 = vlaneseq
    %v176 = vshrl.u32 %v175, 7
    %178 = vset.pattern.permute.xlu0 %v176
    %179 = vperm.xlu0 %178, %v174
    %v180 = vpop.permute.xlu0 %179
    %v181 = vlaneseq
    %v182 = vshrl.u32 %v181, 7
    %v183 = vadd.s32 %v182, 8
    %184 = vset.pattern.permute.xlu0 %v183
    %185 = vperm.xlu0 %184, %v174
    %v186 = vpop.permute.xlu0 %185
    %v187 = vlaneseq
    %v188 = vshrl.u32 %v187, 7
    %v189 = vadd.s32 %v188, 16
    %190 = vset.pattern.permute.xlu0 %v189
    %191 = vperm.xlu0 %190, %v174
    %v192 = vpop.permute.xlu0 %191
    %v193 = vlaneseq
    %v194 = vshrl.u32 %v193, 7
    %v195 = vadd.s32 %v194, 24
    %196 = vset.pattern.permute.xlu0 %v195
    %197 = vperm.xlu0 %196, %v174
    %v198 = vpop.permute.xlu0 %197
    %v199 = vlaneseq
    %v200 = vshrl.u32 %v199, 7
    %v201 = vadd.s32 %v200, 32
    %202 = vset.pattern.permute.xlu0 %v201
    %203 = vperm.xlu0 %202, %v174
    %v204 = vpop.permute.xlu0 %203
    %v205 = vlaneseq
    %v206 = vshrl.u32 %v205, 7
    %v207 = vadd.s32 %v206, 40
    %208 = vset.pattern.permute.xlu0 %v207
    %209 = vperm.xlu0 %208, %v174
    %v210 = vpop.permute.xlu0 %209
    %v211 = vlaneseq
    %v212 = vshrl.u32 %v211, 7
    %v213 = vadd.s32 %v212, 48
    %214 = vset.pattern.permute.xlu0 %v213
    %215 = vperm.xlu0 %214, %v174
    %v216 = vpop.permute.xlu0 %215
    %v217 = vlaneseq
    %v218 = vshrl.u32 %v217, 7
    %v219 = vadd.s32 %v218, 56
    %220 = vset.pattern.permute.xlu0 %v219
    %221 = vperm.xlu0 %220, %v174
    %v222 = vpop.permute.xlu0 %221
    %v223 = vlaneseq
    %v224 = vshrl.u32 %v223, 7
    %v225 = vadd.s32 %v224, 64
    %226 = vset.pattern.permute.xlu0 %v225
    %227 = vperm.xlu0 %226, %v174
    %v228 = vpop.permute.xlu0 %227
    %v229 = vlaneseq
    %v230 = vshrl.u32 %v229, 7
    %v231 = vadd.s32 %v230, 72
    %232 = vset.pattern.permute.xlu0 %v231
    %233 = vperm.xlu0 %232, %v174
    %v234 = vpop.permute.xlu0 %233
    %v235 = vlaneseq
    %v236 = vshrl.u32 %v235, 7
    %v237 = vadd.s32 %v236, 80
    %238 = vset.pattern.permute.xlu0 %v237
    %239 = vperm.xlu0 %238, %v174
    %v240 = vpop.permute.xlu0 %239
    %v241 = vlaneseq
    %v242 = vshrl.u32 %v241, 7
    %v243 = vadd.s32 %v242, 88
    %244 = vset.pattern.permute.xlu0 %v243
    %245 = vperm.xlu0 %244, %v174
    %v246 = vpop.permute.xlu0 %245
    %v247 = vlaneseq
    %v248 = vshrl.u32 %v247, 7
    %v249 = vadd.s32 %v248, 96
    %250 = vset.pattern.permute.xlu0 %v249
    %251 = vperm.xlu0 %250, %v174
    %v252 = vpop.permute.xlu0 %251
    %v253 = vlaneseq
    %v254 = vshrl.u32 %v253, 7
    %v255 = vadd.s32 %v254, 104
    %256 = vset.pattern.permute.xlu0 %v255
    %257 = vperm.xlu0 %256, %v174
    %v258 = vpop.permute.xlu0 %257
    %v259 = vlaneseq
    %v260 = vshrl.u32 %v259, 7
    %v261 = vadd.s32 %v260, 112
    %262 = vset.pattern.permute.xlu0 %v261
    %263 = vperm.xlu0 %262, %v174
    %v264 = vpop.permute.xlu0 %263
    %v265 = vlaneseq
    %v266 = vshrl.u32 %v265, 7
    %v267 = vadd.s32 %v266, 120
    %268 = vset.pattern.permute.xlu0 %v267
    %269 = vperm.xlu0 %268, %v174
    %v270 = vpop.permute.xlu0 %269
    %v271 = vperm.slane %v67, 2
    %v272 = vlaneseq
    %v273 = vshrl.u32 %v272, 7
    %275 = vset.pattern.permute.xlu0 %v273
    %276 = vperm.xlu0 %275, %v271
    %v277 = vpop.permute.xlu0 %276
    %v278 = vlaneseq
    %v279 = vshrl.u32 %v278, 7
    %v280 = vadd.s32 %v279, 8
    %281 = vset.pattern.permute.xlu0 %v280
    %282 = vperm.xlu0 %281, %v271
    %v283 = vpop.permute.xlu0 %282
    %v284 = vlaneseq
    %v285 = vshrl.u32 %v284, 7
    %v286 = vadd.s32 %v285, 16
    %287 = vset.pattern.permute.xlu0 %v286
    %288 = vperm.xlu0 %287, %v271
    %v289 = vpop.permute.xlu0 %288
    %v290 = vlaneseq
    %v291 = vshrl.u32 %v290, 7
    %v292 = vadd.s32 %v291, 24
    %293 = vset.pattern.permute.xlu0 %v292
    %294 = vperm.xlu0 %293, %v271
    %v295 = vpop.permute.xlu0 %294
    %v296 = vlaneseq
    %v297 = vshrl.u32 %v296, 7
    %v298 = vadd.s32 %v297, 32
    %299 = vset.pattern.permute.xlu0 %v298
    %300 = vperm.xlu0 %299, %v271
    %v301 = vpop.permute.xlu0 %300
    %v302 = vlaneseq
    %v303 = vshrl.u32 %v302, 7
    %v304 = vadd.s32 %v303, 40
    %305 = vset.pattern.permute.xlu0 %v304
    %306 = vperm.xlu0 %305, %v271
    %v307 = vpop.permute.xlu0 %306
    %v308 = vlaneseq
    %v309 = vshrl.u32 %v308, 7
    %v310 = vadd.s32 %v309, 48
    %311 = vset.pattern.permute.xlu0 %v310
    %312 = vperm.xlu0 %311, %v271
    %v313 = vpop.permute.xlu0 %312
    %v314 = vlaneseq
    %v315 = vshrl.u32 %v314, 7
    %v316 = vadd.s32 %v315, 56
    %317 = vset.pattern.permute.xlu0 %v316
    %318 = vperm.xlu0 %317, %v271
    %v319 = vpop.permute.xlu0 %318
    %v320 = vlaneseq
    %v321 = vshrl.u32 %v320, 7
    %v322 = vadd.s32 %v321, 64
    %323 = vset.pattern.permute.xlu0 %v322
    %324 = vperm.xlu0 %323, %v271
    %v325 = vpop.permute.xlu0 %324
    %v326 = vlaneseq
    %v327 = vshrl.u32 %v326, 7
    %v328 = vadd.s32 %v327, 72
    %329 = vset.pattern.permute.xlu0 %v328
    %330 = vperm.xlu0 %329, %v271
    %v331 = vpop.permute.xlu0 %330
    %v332 = vlaneseq
    %v333 = vshrl.u32 %v332, 7
    %v334 = vadd.s32 %v333, 80
    %335 = vset.pattern.permute.xlu0 %v334
    %336 = vperm.xlu0 %335, %v271
    %v337 = vpop.permute.xlu0 %336
    %v338 = vlaneseq
    %v339 = vshrl.u32 %v338, 7
    %v340 = vadd.s32 %v339, 88
    %341 = vset.pattern.permute.xlu0 %v340
    %342 = vperm.xlu0 %341, %v271
    %v343 = vpop.permute.xlu0 %342
    %v344 = vlaneseq
    %v345 = vshrl.u32 %v344, 7
    %v346 = vadd.s32 %v345, 96
    %347 = vset.pattern.permute.xlu0 %v346
    %348 = vperm.xlu0 %347, %v271
    %v349 = vpop.permute.xlu0 %348
    %v350 = vlaneseq
    %v351 = vshrl.u32 %v350, 7
    %v352 = vadd.s32 %v351, 104
    %353 = vset.pattern.permute.xlu0 %v352
    %354 = vperm.xlu0 %353, %v271
    %v355 = vpop.permute.xlu0 %354
    %v356 = vlaneseq
    %v357 = vshrl.u32 %v356, 7
    %v358 = vadd.s32 %v357, 112
    %359 = vset.pattern.permute.xlu0 %v358
    %360 = vperm.xlu0 %359, %v271
    %v361 = vpop.permute.xlu0 %360
    %v362 = vlaneseq
    %v363 = vshrl.u32 %v362, 7
    %v364 = vadd.s32 %v363, 120
    %365 = vset.pattern.permute.xlu0 %v364
    %366 = vperm.xlu0 %365, %v271
    %v367 = vpop.permute.xlu0 %366
    %v368 = vperm.slane %v67, 3
    %v369 = vlaneseq
    %v370 = vshrl.u32 %v369, 7
    %372 = vset.pattern.permute.xlu0 %v370
    %373 = vperm.xlu0 %372, %v368
    %v374 = vpop.permute.xlu0 %373
    %v375 = vlaneseq
    %v376 = vshrl.u32 %v375, 7
    %v377 = vadd.s32 %v376, 8
    %378 = vset.pattern.permute.xlu0 %v377
    %379 = vperm.xlu0 %378, %v368
    %v380 = vpop.permute.xlu0 %379
    %v381 = vlaneseq
    %v382 = vshrl.u32 %v381, 7
    %v383 = vadd.s32 %v382, 16
    %384 = vset.pattern.permute.xlu0 %v383
    %385 = vperm.xlu0 %384, %v368
    %v386 = vpop.permute.xlu0 %385
    %v387 = vlaneseq
    %v388 = vshrl.u32 %v387, 7
    %v389 = vadd.s32 %v388, 24
    %390 = vset.pattern.permute.xlu0 %v389
    %391 = vperm.xlu0 %390, %v368
    %v392 = vpop.permute.xlu0 %391
    %v393 = vlaneseq
    %v394 = vshrl.u32 %v393, 7
    %v395 = vadd.s32 %v394, 32
    %396 = vset.pattern.permute.xlu0 %v395
    %397 = vperm.xlu0 %396, %v368
    %v398 = vpop.permute.xlu0 %397
    %v399 = vlaneseq
    %v400 = vshrl.u32 %v399, 7
    %v401 = vadd.s32 %v400, 40
    %402 = vset.pattern.permute.xlu0 %v401
    %403 = vperm.xlu0 %402, %v368
    %v404 = vpop.permute.xlu0 %403
    %v405 = vlaneseq
    %v406 = vshrl.u32 %v405, 7
    %v407 = vadd.s32 %v406, 48
    %408 = vset.pattern.permute.xlu0 %v407
    %409 = vperm.xlu0 %408, %v368
    %v410 = vpop.permute.xlu0 %409
    %v411 = vlaneseq
    %v412 = vshrl.u32 %v411, 7
    %v413 = vadd.s32 %v412, 56
    %414 = vset.pattern.permute.xlu0 %v413
    %415 = vperm.xlu0 %414, %v368
    %v416 = vpop.permute.xlu0 %415
    %v417 = vlaneseq
    %v418 = vshrl.u32 %v417, 7
    %v419 = vadd.s32 %v418, 64
    %420 = vset.pattern.permute.xlu0 %v419
    %421 = vperm.xlu0 %420, %v368
    %v422 = vpop.permute.xlu0 %421
    %v423 = vlaneseq
    %v424 = vshrl.u32 %v423, 7
    %v425 = vadd.s32 %v424, 72
    %426 = vset.pattern.permute.xlu0 %v425
    %427 = vperm.xlu0 %426, %v368
    %v428 = vpop.permute.xlu0 %427
    %v429 = vlaneseq
    %v430 = vshrl.u32 %v429, 7
    %v431 = vadd.s32 %v430, 80
    %432 = vset.pattern.permute.xlu0 %v431
    %433 = vperm.xlu0 %432, %v368
    %v434 = vpop.permute.xlu0 %433
    %v435 = vlaneseq
    %v436 = vshrl.u32 %v435, 7
    %v437 = vadd.s32 %v436, 88
    %438 = vset.pattern.permute.xlu0 %v437
    %439 = vperm.xlu0 %438, %v368
    %v440 = vpop.permute.xlu0 %439
    %v441 = vlaneseq
    %v442 = vshrl.u32 %v441, 7
    %v443 = vadd.s32 %v442, 96
    %444 = vset.pattern.permute.xlu0 %v443
    %445 = vperm.xlu0 %444, %v368
    %v446 = vpop.permute.xlu0 %445
    %v447 = vlaneseq
    %v448 = vshrl.u32 %v447, 7
    %v449 = vadd.s32 %v448, 104
    %450 = vset.pattern.permute.xlu0 %v449
    %451 = vperm.xlu0 %450, %v368
    %v452 = vpop.permute.xlu0 %451
    %v453 = vlaneseq
    %v454 = vshrl.u32 %v453, 7
    %v455 = vadd.s32 %v454, 112
    %456 = vset.pattern.permute.xlu0 %v455
    %457 = vperm.xlu0 %456, %v368
    %v458 = vpop.permute.xlu0 %457
    %v459 = vlaneseq
    %v460 = vshrl.u32 %v459, 7
    %v461 = vadd.s32 %v460, 120
    %462 = vset.pattern.permute.xlu0 %v461
    %463 = vperm.xlu0 %462, %v368
    %v464 = vpop.permute.xlu0 %463
    %v465 = vperm.slane %v67, 4
    %v466 = vlaneseq
    %v467 = vshrl.u32 %v466, 7
    %469 = vset.pattern.permute.xlu0 %v467
    %470 = vperm.xlu0 %469, %v465
    %v471 = vpop.permute.xlu0 %470
    %v472 = vlaneseq
    %v473 = vshrl.u32 %v472, 7
    %v474 = vadd.s32 %v473, 8
    %475 = vset.pattern.permute.xlu0 %v474
    %476 = vperm.xlu0 %475, %v465
    %v477 = vpop.permute.xlu0 %476
    %v478 = vlaneseq
    %v479 = vshrl.u32 %v478, 7
    %v480 = vadd.s32 %v479, 16
    %481 = vset.pattern.permute.xlu0 %v480
    %482 = vperm.xlu0 %481, %v465
    %v483 = vpop.permute.xlu0 %482
    %v484 = vlaneseq
    %v485 = vshrl.u32 %v484, 7
    %v486 = vadd.s32 %v485, 24
    %487 = vset.pattern.permute.xlu0 %v486
    %488 = vperm.xlu0 %487, %v465
    %v489 = vpop.permute.xlu0 %488
    %v490 = vlaneseq
    %v491 = vshrl.u32 %v490, 7
    %v492 = vadd.s32 %v491, 32
    %493 = vset.pattern.permute.xlu0 %v492
    %494 = vperm.xlu0 %493, %v465
    %v495 = vpop.permute.xlu0 %494
    %v496 = vlaneseq
    %v497 = vshrl.u32 %v496, 7
    %v498 = vadd.s32 %v497, 40
    %499 = vset.pattern.permute.xlu0 %v498
    %500 = vperm.xlu0 %499, %v465
    %v501 = vpop.permute.xlu0 %500
    %v502 = vlaneseq
    %v503 = vshrl.u32 %v502, 7
    %v504 = vadd.s32 %v503, 48
    %505 = vset.pattern.permute.xlu0 %v504
    %506 = vperm.xlu0 %505, %v465
    %v507 = vpop.permute.xlu0 %506
    %v508 = vlaneseq
    %v509 = vshrl.u32 %v508, 7
    %v510 = vadd.s32 %v509, 56
    %511 = vset.pattern.permute.xlu0 %v510
    %512 = vperm.xlu0 %511, %v465
    %v513 = vpop.permute.xlu0 %512
    %v514 = vlaneseq
    %v515 = vshrl.u32 %v514, 7
    %v516 = vadd.s32 %v515, 64
    %517 = vset.pattern.permute.xlu0 %v516
    %518 = vperm.xlu0 %517, %v465
    %v519 = vpop.permute.xlu0 %518
    %v520 = vlaneseq
    %v521 = vshrl.u32 %v520, 7
    %v522 = vadd.s32 %v521, 72
    %523 = vset.pattern.permute.xlu0 %v522
    %524 = vperm.xlu0 %523, %v465
    %v525 = vpop.permute.xlu0 %524
    %v526 = vlaneseq
    %v527 = vshrl.u32 %v526, 7
    %v528 = vadd.s32 %v527, 80
    %529 = vset.pattern.permute.xlu0 %v528
    %530 = vperm.xlu0 %529, %v465
    %v531 = vpop.permute.xlu0 %530
    %v532 = vlaneseq
    %v533 = vshrl.u32 %v532, 7
    %v534 = vadd.s32 %v533, 88
    %535 = vset.pattern.permute.xlu0 %v534
    %536 = vperm.xlu0 %535, %v465
    %v537 = vpop.permute.xlu0 %536
    %v538 = vlaneseq
    %v539 = vshrl.u32 %v538, 7
    %v540 = vadd.s32 %v539, 96
    %541 = vset.pattern.permute.xlu0 %v540
    %542 = vperm.xlu0 %541, %v465
    %v543 = vpop.permute.xlu0 %542
    %v544 = vlaneseq
    %v545 = vshrl.u32 %v544, 7
    %v546 = vadd.s32 %v545, 104
    %547 = vset.pattern.permute.xlu0 %v546
    %548 = vperm.xlu0 %547, %v465
    %v549 = vpop.permute.xlu0 %548
    %v550 = vlaneseq
    %v551 = vshrl.u32 %v550, 7
    %v552 = vadd.s32 %v551, 112
    %553 = vset.pattern.permute.xlu0 %v552
    %554 = vperm.xlu0 %553, %v465
    %v555 = vpop.permute.xlu0 %554
    %v556 = vlaneseq
    %v557 = vshrl.u32 %v556, 7
    %v558 = vadd.s32 %v557, 120
    %559 = vset.pattern.permute.xlu0 %v558
    %560 = vperm.xlu0 %559, %v465
    %v561 = vpop.permute.xlu0 %560
    %v562 = vperm.slane %v67, 5
    %v563 = vlaneseq
    %v564 = vshrl.u32 %v563, 7
    %566 = vset.pattern.permute.xlu0 %v564
    %567 = vperm.xlu0 %566, %v562
    %v568 = vpop.permute.xlu0 %567
    %v569 = vlaneseq
    %v570 = vshrl.u32 %v569, 7
    %v571 = vadd.s32 %v570, 8
    %572 = vset.pattern.permute.xlu0 %v571
    %573 = vperm.xlu0 %572, %v562
    %v574 = vpop.permute.xlu0 %573
    %v575 = vlaneseq
    %v576 = vshrl.u32 %v575, 7
    %v577 = vadd.s32 %v576, 16
    %578 = vset.pattern.permute.xlu0 %v577
    %579 = vperm.xlu0 %578, %v562
    %v580 = vpop.permute.xlu0 %579
    %v581 = vlaneseq
    %v582 = vshrl.u32 %v581, 7
    %v583 = vadd.s32 %v582, 24
    %584 = vset.pattern.permute.xlu0 %v583
    %585 = vperm.xlu0 %584, %v562
    %v586 = vpop.permute.xlu0 %585
    %v587 = vlaneseq
    %v588 = vshrl.u32 %v587, 7
    %v589 = vadd.s32 %v588, 32
    %590 = vset.pattern.permute.xlu0 %v589
    %591 = vperm.xlu0 %590, %v562
    %v592 = vpop.permute.xlu0 %591
    %v593 = vlaneseq
    %v594 = vshrl.u32 %v593, 7
    %v595 = vadd.s32 %v594, 40
    %596 = vset.pattern.permute.xlu0 %v595
    %597 = vperm.xlu0 %596, %v562
    %v598 = vpop.permute.xlu0 %597
    %v599 = vlaneseq
    %v600 = vshrl.u32 %v599, 7
    %v601 = vadd.s32 %v600, 48
    %602 = vset.pattern.permute.xlu0 %v601
    %603 = vperm.xlu0 %602, %v562
    %v604 = vpop.permute.xlu0 %603
    %v605 = vlaneseq
    %v606 = vshrl.u32 %v605, 7
    %v607 = vadd.s32 %v606, 56
    %608 = vset.pattern.permute.xlu0 %v607
    %609 = vperm.xlu0 %608, %v562
    %v610 = vpop.permute.xlu0 %609
    %v611 = vlaneseq
    %v612 = vshrl.u32 %v611, 7
    %v613 = vadd.s32 %v612, 64
    %614 = vset.pattern.permute.xlu0 %v613
    %615 = vperm.xlu0 %614, %v562
    %v616 = vpop.permute.xlu0 %615
    %v617 = vlaneseq
    %v618 = vshrl.u32 %v617, 7
    %v619 = vadd.s32 %v618, 72
    %620 = vset.pattern.permute.xlu0 %v619
    %621 = vperm.xlu0 %620, %v562
    %v622 = vpop.permute.xlu0 %621
    %v623 = vlaneseq
    %v624 = vshrl.u32 %v623, 7
    %v625 = vadd.s32 %v624, 80
    %626 = vset.pattern.permute.xlu0 %v625
    %627 = vperm.xlu0 %626, %v562
    %v628 = vpop.permute.xlu0 %627
    %v629 = vlaneseq
    %v630 = vshrl.u32 %v629, 7
    %v631 = vadd.s32 %v630, 88
    %632 = vset.pattern.permute.xlu0 %v631
    %633 = vperm.xlu0 %632, %v562
    %v634 = vpop.permute.xlu0 %633
    %v635 = vlaneseq
    %v636 = vshrl.u32 %v635, 7
    %v637 = vadd.s32 %v636, 96
    %638 = vset.pattern.permute.xlu0 %v637
    %639 = vperm.xlu0 %638, %v562
    %v640 = vpop.permute.xlu0 %639
    %v641 = vlaneseq
    %v642 = vshrl.u32 %v641, 7
    %v643 = vadd.s32 %v642, 104
    %644 = vset.pattern.permute.xlu0 %v643
    %645 = vperm.xlu0 %644, %v562
    %v646 = vpop.permute.xlu0 %645
    %v647 = vlaneseq
    %v648 = vshrl.u32 %v647, 7
    %v649 = vadd.s32 %v648, 112
    %650 = vset.pattern.permute.xlu0 %v649
    %651 = vperm.xlu0 %650, %v562
    %v652 = vpop.permute.xlu0 %651
    %v653 = vlaneseq
    %v654 = vshrl.u32 %v653, 7
    %v655 = vadd.s32 %v654, 120
    %656 = vset.pattern.permute.xlu0 %v655
    %657 = vperm.xlu0 %656, %v562
    %v658 = vpop.permute.xlu0 %657
    %v659 = vperm.slane %v67, 6
    %v660 = vlaneseq
    %v661 = vshrl.u32 %v660, 7
    %663 = vset.pattern.permute.xlu0 %v661
    %664 = vperm.xlu0 %663, %v659
    %v665 = vpop.permute.xlu0 %664
    %v666 = vlaneseq
    %v667 = vshrl.u32 %v666, 7
    %v668 = vadd.s32 %v667, 8
    %669 = vset.pattern.permute.xlu0 %v668
    %670 = vperm.xlu0 %669, %v659
    %v671 = vpop.permute.xlu0 %670
    %v672 = vlaneseq
    %v673 = vshrl.u32 %v672, 7
    %v674 = vadd.s32 %v673, 16
    %675 = vset.pattern.permute.xlu0 %v674
    %676 = vperm.xlu0 %675, %v659
    %v677 = vpop.permute.xlu0 %676
    %v678 = vlaneseq
    %v679 = vshrl.u32 %v678, 7
    %v680 = vadd.s32 %v679, 24
    %681 = vset.pattern.permute.xlu0 %v680
    %682 = vperm.xlu0 %681, %v659
    %v683 = vpop.permute.xlu0 %682
    %v684 = vlaneseq
    %v685 = vshrl.u32 %v684, 7
    %v686 = vadd.s32 %v685, 32
    %687 = vset.pattern.permute.xlu0 %v686
    %688 = vperm.xlu0 %687, %v659
    %v689 = vpop.permute.xlu0 %688
    %v690 = vlaneseq
    %v691 = vshrl.u32 %v690, 7
    %v692 = vadd.s32 %v691, 40
    %693 = vset.pattern.permute.xlu0 %v692
    %694 = vperm.xlu0 %693, %v659
    %v695 = vpop.permute.xlu0 %694
    %v696 = vlaneseq
    %v697 = vshrl.u32 %v696, 7
    %v698 = vadd.s32 %v697, 48
    %699 = vset.pattern.permute.xlu0 %v698
    %700 = vperm.xlu0 %699, %v659
    %v701 = vpop.permute.xlu0 %700
    %v702 = vlaneseq
    %v703 = vshrl.u32 %v702, 7
    %v704 = vadd.s32 %v703, 56
    %705 = vset.pattern.permute.xlu0 %v704
    %706 = vperm.xlu0 %705, %v659
    %v707 = vpop.permute.xlu0 %706
    %v708 = vlaneseq
    %v709 = vshrl.u32 %v708, 7
    %v710 = vadd.s32 %v709, 64
    %711 = vset.pattern.permute.xlu0 %v710
    %712 = vperm.xlu0 %711, %v659
    %v713 = vpop.permute.xlu0 %712
    %v714 = vlaneseq
    %v715 = vshrl.u32 %v714, 7
    %v716 = vadd.s32 %v715, 72
    %717 = vset.pattern.permute.xlu0 %v716
    %718 = vperm.xlu0 %717, %v659
    %v719 = vpop.permute.xlu0 %718
    %v720 = vlaneseq
    %v721 = vshrl.u32 %v720, 7
    %v722 = vadd.s32 %v721, 80
    %723 = vset.pattern.permute.xlu0 %v722
    %724 = vperm.xlu0 %723, %v659
    %v725 = vpop.permute.xlu0 %724
    %v726 = vlaneseq
    %v727 = vshrl.u32 %v726, 7
    %v728 = vadd.s32 %v727, 88
    %729 = vset.pattern.permute.xlu0 %v728
    %730 = vperm.xlu0 %729, %v659
    %v731 = vpop.permute.xlu0 %730
    %v732 = vlaneseq
    %v733 = vshrl.u32 %v732, 7
    %v734 = vadd.s32 %v733, 96
    %735 = vset.pattern.permute.xlu0 %v734
    %736 = vperm.xlu0 %735, %v659
    %v737 = vpop.permute.xlu0 %736
    %v738 = vlaneseq
    %v739 = vshrl.u32 %v738, 7
    %v740 = vadd.s32 %v739, 104
    %741 = vset.pattern.permute.xlu0 %v740
    %742 = vperm.xlu0 %741, %v659
    %v743 = vpop.permute.xlu0 %742
    %v744 = vlaneseq
    %v745 = vshrl.u32 %v744, 7
    %v746 = vadd.s32 %v745, 112
    %747 = vset.pattern.permute.xlu0 %v746
    %748 = vperm.xlu0 %747, %v659
    %v749 = vpop.permute.xlu0 %748
    %v750 = vlaneseq
    %v751 = vshrl.u32 %v750, 7
    %v752 = vadd.s32 %v751, 120
    %753 = vset.pattern.permute.xlu0 %v752
    %754 = vperm.xlu0 %753, %v659
    %v755 = vpop.permute.xlu0 %754
    %v756 = vperm.slane %v67, 7
    %v757 = vlaneseq
    %v758 = vshrl.u32 %v757, 7
    %760 = vset.pattern.permute.xlu0 %v758
    %761 = vperm.xlu0 %760, %v756
    %v762 = vpop.permute.xlu0 %761
    %v763 = vlaneseq
    %v764 = vshrl.u32 %v763, 7
    %v765 = vadd.s32 %v764, 8
    %766 = vset.pattern.permute.xlu0 %v765
    %767 = vperm.xlu0 %766, %v756
    %v768 = vpop.permute.xlu0 %767
    %v769 = vlaneseq
    %v770 = vshrl.u32 %v769, 7
    %v771 = vadd.s32 %v770, 16
    %772 = vset.pattern.permute.xlu0 %v771
    %773 = vperm.xlu0 %772, %v756
    %v774 = vpop.permute.xlu0 %773
    %v775 = vlaneseq
    %v776 = vshrl.u32 %v775, 7
    %v777 = vadd.s32 %v776, 24
    %778 = vset.pattern.permute.xlu0 %v777
    %779 = vperm.xlu0 %778, %v756
    %v780 = vpop.permute.xlu0 %779
    %v781 = vlaneseq
    %v782 = vshrl.u32 %v781, 7
    %v783 = vadd.s32 %v782, 32
    %784 = vset.pattern.permute.xlu0 %v783
    %785 = vperm.xlu0 %784, %v756
    %v786 = vpop.permute.xlu0 %785
    %v787 = vlaneseq
    %v788 = vshrl.u32 %v787, 7
    %v789 = vadd.s32 %v788, 40
    %790 = vset.pattern.permute.xlu0 %v789
    %791 = vperm.xlu0 %790, %v756
    %v792 = vpop.permute.xlu0 %791
    %v793 = vlaneseq
    %v794 = vshrl.u32 %v793, 7
    %v795 = vadd.s32 %v794, 48
    %796 = vset.pattern.permute.xlu0 %v795
    %797 = vperm.xlu0 %796, %v756
    %v798 = vpop.permute.xlu0 %797
    %v799 = vlaneseq
    %v800 = vshrl.u32 %v799, 7
    %v801 = vadd.s32 %v800, 56
    %802 = vset.pattern.permute.xlu0 %v801
    %803 = vperm.xlu0 %802, %v756
    %v804 = vpop.permute.xlu0 %803
    %v805 = vlaneseq
    %v806 = vshrl.u32 %v805, 7
    %v807 = vadd.s32 %v806, 64
    %808 = vset.pattern.permute.xlu0 %v807
    %809 = vperm.xlu0 %808, %v756
    %v810 = vpop.permute.xlu0 %809
    %v811 = vlaneseq
    %v812 = vshrl.u32 %v811, 7
    %v813 = vadd.s32 %v812, 72
    %814 = vset.pattern.permute.xlu0 %v813
    %815 = vperm.xlu0 %814, %v756
    %v816 = vpop.permute.xlu0 %815
    %v817 = vlaneseq
    %v818 = vshrl.u32 %v817, 7
    %v819 = vadd.s32 %v818, 80
    %820 = vset.pattern.permute.xlu0 %v819
    %821 = vperm.xlu0 %820, %v756
    %v822 = vpop.permute.xlu0 %821
    %v823 = vlaneseq
    %v824 = vshrl.u32 %v823, 7
    %v825 = vadd.s32 %v824, 88
    %826 = vset.pattern.permute.xlu0 %v825
    %827 = vperm.xlu0 %826, %v756
    %v828 = vpop.permute.xlu0 %827
    %v829 = vlaneseq
    %v830 = vshrl.u32 %v829, 7
    %v831 = vadd.s32 %v830, 96
    %832 = vset.pattern.permute.xlu0 %v831
    %833 = vperm.xlu0 %832, %v756
    %v834 = vpop.permute.xlu0 %833
    %v835 = vlaneseq
    %v836 = vshrl.u32 %v835, 7
    %v837 = vadd.s32 %v836, 104
    %838 = vset.pattern.permute.xlu0 %v837
    %839 = vperm.xlu0 %838, %v756
    %v840 = vpop.permute.xlu0 %839
    %v841 = vlaneseq
    %v842 = vshrl.u32 %v841, 7
    %v843 = vadd.s32 %v842, 112
    %844 = vset.pattern.permute.xlu0 %v843
    %845 = vperm.xlu0 %844, %v756
    %v846 = vpop.permute.xlu0 %845
    %v847 = vlaneseq
    %v848 = vshrl.u32 %v847, 7
    %v849 = vadd.s32 %v848, 120
    %850 = vset.pattern.permute.xlu0 %v849
    %851 = vperm.xlu0 %850, %v756
    %v852 = vpop.permute.xlu0 %851
    %v853 = vperm.slane %v68, 0
    %v854 = vperm.slane %v70, 0
    %v855 = vperm.slane %v71, 0
    %v856 = vperm.slane %v72, 0
    %v857 = vperm.slane %v73, 0
    %v858 = vperm.slane %v74, 0
    %v859 = vperm.slane %v75, 0
    %v860 = vperm.slane %v76, 0
    %v869 = vsub.f32 %v853, %v83
    %v870 = vsub.f32 %v853, %v89
    %v871 = vsub.f32 %v853, %v95
    %v872 = vsub.f32 %v853, %v101
    %v873 = vsub.f32 %v853, %v107
    %v874 = vsub.f32 %v853, %v113
    %v875 = vsub.f32 %v853, %v119
    %v876 = vsub.f32 %v853, %v125
    %v877 = vsub.f32 %v853, %v131
    %v878 = vsub.f32 %v853, %v137
    %v879 = vsub.f32 %v853, %v143
    %v880 = vsub.f32 %v853, %v149
    %v881 = vsub.f32 %v853, %v155
    %v882 = vsub.f32 %v853, %v161
    %v883 = vsub.f32 %v853, %v167
    %v884 = vsub.f32 %v853, %v173
    %v885 = vsub.f32 %v854, %v180
    %v886 = vsub.f32 %v854, %v186
    %v887 = vsub.f32 %v854, %v192
    %v888 = vsub.f32 %v854, %v198
    %v889 = vsub.f32 %v854, %v204
    %v890 = vsub.f32 %v854, %v210
    %v891 = vsub.f32 %v854, %v216
    %v892 = vsub.f32 %v854, %v222
    %v893 = vsub.f32 %v854, %v228
    %v894 = vsub.f32 %v854, %v234
    %v895 = vsub.f32 %v854, %v240
    %v896 = vsub.f32 %v854, %v246
    %v897 = vsub.f32 %v854, %v252
    %v898 = vsub.f32 %v854, %v258
    %v899 = vsub.f32 %v854, %v264
    %v900 = vsub.f32 %v854, %v270
    %v901 = vsub.f32 %v855, %v277
    %v902 = vsub.f32 %v855, %v283
    %v903 = vsub.f32 %v855, %v289
    %v904 = vsub.f32 %v855, %v295
    %v905 = vsub.f32 %v855, %v301
    %v906 = vsub.f32 %v855, %v307
    %v907 = vsub.f32 %v855, %v313
    %v908 = vsub.f32 %v855, %v319
    %v909 = vsub.f32 %v855, %v325
    %v910 = vsub.f32 %v855, %v331
    %v911 = vsub.f32 %v855, %v337
    %v912 = vsub.f32 %v855, %v343
    %v913 = vsub.f32 %v855, %v349
    %v914 = vsub.f32 %v855, %v355
    %v915 = vsub.f32 %v855, %v361
    %v916 = vsub.f32 %v855, %v367
    %v917 = vsub.f32 %v856, %v374
    %v918 = vsub.f32 %v856, %v380
    %v919 = vsub.f32 %v856, %v386
    %v920 = vsub.f32 %v856, %v392
    %v921 = vsub.f32 %v856, %v398
    %v922 = vsub.f32 %v856, %v404
    %v923 = vsub.f32 %v856, %v410
    %v924 = vsub.f32 %v856, %v416
    %v925 = vsub.f32 %v856, %v422
    %v926 = vsub.f32 %v856, %v428
    %v927 = vsub.f32 %v856, %v434
    %v928 = vsub.f32 %v856, %v440
    %v929 = vsub.f32 %v856, %v446
    %v930 = vsub.f32 %v856, %v452
    %v931 = vsub.f32 %v856, %v458
    %v932 = vsub.f32 %v856, %v464
    %v933 = vsub.f32 %v857, %v471
    %v934 = vsub.f32 %v857, %v477
    %v935 = vsub.f32 %v857, %v483
    %v936 = vsub.f32 %v857, %v489
    %v937 = vsub.f32 %v857, %v495
    %v938 = vsub.f32 %v857, %v501
    %v939 = vsub.f32 %v857, %v507
    %v940 = vsub.f32 %v857, %v513
    %v941 = vsub.f32 %v857, %v519
    %v942 = vsub.f32 %v857, %v525
    %v943 = vsub.f32 %v857, %v531
    %v944 = vsub.f32 %v857, %v537
    %v945 = vsub.f32 %v857, %v543
    %v946 = vsub.f32 %v857, %v549
    %v947 = vsub.f32 %v857, %v555
    %v948 = vsub.f32 %v857, %v561
    %v949 = vsub.f32 %v858, %v568
    %v950 = vsub.f32 %v858, %v574
    %v951 = vsub.f32 %v858, %v580
    %v952 = vsub.f32 %v858, %v586
    %v953 = vsub.f32 %v858, %v592
    %v954 = vsub.f32 %v858, %v598
    %v955 = vsub.f32 %v858, %v604
    %v956 = vsub.f32 %v858, %v610
    %v957 = vsub.f32 %v858, %v616
    %v958 = vsub.f32 %v858, %v622
    %v959 = vsub.f32 %v858, %v628
    %v960 = vsub.f32 %v858, %v634
    %v961 = vsub.f32 %v858, %v640
    %v962 = vsub.f32 %v858, %v646
    %v963 = vsub.f32 %v858, %v652
    %v964 = vsub.f32 %v858, %v658
    %v965 = vsub.f32 %v859, %v665
    %v966 = vsub.f32 %v859, %v671
    %v967 = vsub.f32 %v859, %v677
    %v968 = vsub.f32 %v859, %v683
    %v969 = vsub.f32 %v859, %v689
    %v970 = vsub.f32 %v859, %v695
    %v971 = vsub.f32 %v859, %v701
    %v972 = vsub.f32 %v859, %v707
    %v973 = vsub.f32 %v859, %v713
    %v974 = vsub.f32 %v859, %v719
    %v975 = vsub.f32 %v859, %v725
    %v976 = vsub.f32 %v859, %v731
    %v977 = vsub.f32 %v859, %v737
    %v978 = vsub.f32 %v859, %v743
    %v979 = vsub.f32 %v859, %v749
    %v980 = vsub.f32 %v859, %v755
    %v981 = vsub.f32 %v860, %v762
    %v982 = vsub.f32 %v860, %v768
    %v983 = vsub.f32 %v860, %v774
    %v984 = vsub.f32 %v860, %v780
    %v985 = vsub.f32 %v860, %v786
    %v986 = vsub.f32 %v860, %v792
    %v987 = vsub.f32 %v860, %v798
    %v988 = vsub.f32 %v860, %v804
    %v989 = vsub.f32 %v860, %v810
    %v990 = vsub.f32 %v860, %v816
    %v991 = vsub.f32 %v860, %v822
    %v992 = vsub.f32 %v860, %v828
    %v993 = vsub.f32 %v860, %v834
    %v994 = vsub.f32 %v860, %v840
    %v995 = vsub.f32 %v860, %v846
    %v996 = vsub.f32 %v860, %v852
    %v997 = vxor.u32 %v869, 2147483648
    %v998 = vxor.u32 %v870, 2147483648
    %v999 = vxor.u32 %v871, 2147483648
    %v1000 = vxor.u32 %v872, 2147483648
    %v1001 = vxor.u32 %v873, 2147483648
    %v1002 = vxor.u32 %v874, 2147483648
    %v1003 = vxor.u32 %v875, 2147483648
    %v1004 = vxor.u32 %v876, 2147483648
    %v1005 = vxor.u32 %v877, 2147483648
    %v1006 = vxor.u32 %v878, 2147483648
    %v1007 = vxor.u32 %v879, 2147483648
    %v1008 = vxor.u32 %v880, 2147483648
    %v1009 = vxor.u32 %v881, 2147483648
    %v1010 = vxor.u32 %v882, 2147483648
    %v1011 = vxor.u32 %v883, 2147483648
    %v1012 = vxor.u32 %v884, 2147483648
    %v1013 = vxor.u32 %v885, 2147483648
    %v1014 = vxor.u32 %v886, 2147483648
    %v1015 = vxor.u32 %v887, 2147483648
    %v1016 = vxor.u32 %v888, 2147483648
    %v1017 = vxor.u32 %v889, 2147483648
    %v1018 = vxor.u32 %v890, 2147483648
    %v1019 = vxor.u32 %v891, 2147483648
    %v1020 = vxor.u32 %v892, 2147483648
    %v1021 = vxor.u32 %v893, 2147483648
    %v1022 = vxor.u32 %v894, 2147483648
    %v1023 = vxor.u32 %v895, 2147483648
    %v1024 = vxor.u32 %v896, 2147483648
    %v1025 = vxor.u32 %v897, 2147483648
    %v1026 = vxor.u32 %v898, 2147483648
    %v1027 = vxor.u32 %v899, 2147483648
    %v1028 = vxor.u32 %v900, 2147483648
    %v1029 = vxor.u32 %v901, 2147483648
    %v1030 = vxor.u32 %v902, 2147483648
    %v1031 = vxor.u32 %v903, 2147483648
    %v1032 = vxor.u32 %v904, 2147483648
    %v1033 = vxor.u32 %v905, 2147483648
    %v1034 = vxor.u32 %v906, 2147483648
    %v1035 = vxor.u32 %v907, 2147483648
    %v1036 = vxor.u32 %v908, 2147483648
    %v1037 = vxor.u32 %v909, 2147483648
    %v1038 = vxor.u32 %v910, 2147483648
    %v1039 = vxor.u32 %v911, 2147483648
    %v1040 = vxor.u32 %v912, 2147483648
    %v1041 = vxor.u32 %v913, 2147483648
    %v1042 = vxor.u32 %v914, 2147483648
    %v1043 = vxor.u32 %v915, 2147483648
    %v1044 = vxor.u32 %v916, 2147483648
    %v1045 = vxor.u32 %v917, 2147483648
    %v1046 = vxor.u32 %v918, 2147483648
    %v1047 = vxor.u32 %v919, 2147483648
    %v1048 = vxor.u32 %v920, 2147483648
    %v1049 = vxor.u32 %v921, 2147483648
    %v1050 = vxor.u32 %v922, 2147483648
    %v1051 = vxor.u32 %v923, 2147483648
    %v1052 = vxor.u32 %v924, 2147483648
    %v1053 = vxor.u32 %v925, 2147483648
    %v1054 = vxor.u32 %v926, 2147483648
    %v1055 = vxor.u32 %v927, 2147483648
    %v1056 = vxor.u32 %v928, 2147483648
    %v1057 = vxor.u32 %v929, 2147483648
    %v1058 = vxor.u32 %v930, 2147483648
    %v1059 = vxor.u32 %v931, 2147483648
    %v1060 = vxor.u32 %v932, 2147483648
    %v1061 = vxor.u32 %v933, 2147483648
    %v1062 = vxor.u32 %v934, 2147483648
    %v1063 = vxor.u32 %v935, 2147483648
    %v1064 = vxor.u32 %v936, 2147483648
    %v1065 = vxor.u32 %v937, 2147483648
    %v1066 = vxor.u32 %v938, 2147483648
    %v1067 = vxor.u32 %v939, 2147483648
    %v1068 = vxor.u32 %v940, 2147483648
    %v1069 = vxor.u32 %v941, 2147483648
    %v1070 = vxor.u32 %v942, 2147483648
    %v1071 = vxor.u32 %v943, 2147483648
    %v1072 = vxor.u32 %v944, 2147483648
    %v1073 = vxor.u32 %v945, 2147483648
    %v1074 = vxor.u32 %v946, 2147483648
    %v1075 = vxor.u32 %v947, 2147483648
    %v1076 = vxor.u32 %v948, 2147483648
    %v1077 = vxor.u32 %v949, 2147483648
    %v1078 = vxor.u32 %v950, 2147483648
    %v1079 = vxor.u32 %v951, 2147483648
    %v1080 = vxor.u32 %v952, 2147483648
    %v1081 = vxor.u32 %v953, 2147483648
    %v1082 = vxor.u32 %v954, 2147483648
    %v1083 = vxor.u32 %v955, 2147483648
    %v1084 = vxor.u32 %v956, 2147483648
    %v1085 = vxor.u32 %v957, 2147483648
    %v1086 = vxor.u32 %v958, 2147483648
    %v1087 = vxor.u32 %v959, 2147483648
    %v1088 = vxor.u32 %v960, 2147483648
    %v1089 = vxor.u32 %v961, 2147483648
    %v1090 = vxor.u32 %v962, 2147483648
    %v1091 = vxor.u32 %v963, 2147483648
    %v1092 = vxor.u32 %v964, 2147483648
    %v1093 = vxor.u32 %v965, 2147483648
    %v1094 = vxor.u32 %v966, 2147483648
    %v1095 = vxor.u32 %v967, 2147483648
    %v1096 = vxor.u32 %v968, 2147483648
    %v1097 = vxor.u32 %v969, 2147483648
    %v1098 = vxor.u32 %v970, 2147483648
    %v1099 = vxor.u32 %v971, 2147483648
    %v1100 = vxor.u32 %v972, 2147483648
    %v1101 = vxor.u32 %v973, 2147483648
    %v1102 = vxor.u32 %v974, 2147483648
    %v1103 = vxor.u32 %v975, 2147483648
    %v1104 = vxor.u32 %v976, 2147483648
    %v1105 = vxor.u32 %v977, 2147483648
    %v1106 = vxor.u32 %v978, 2147483648
    %v1107 = vxor.u32 %v979, 2147483648
    %v1108 = vxor.u32 %v980, 2147483648
    %v1109 = vxor.u32 %v981, 2147483648
    %v1110 = vxor.u32 %v982, 2147483648
    %v1111 = vxor.u32 %v983, 2147483648
    %v1112 = vxor.u32 %v984, 2147483648
    %v1113 = vxor.u32 %v985, 2147483648
    %v1114 = vxor.u32 %v986, 2147483648
    %v1115 = vxor.u32 %v987, 2147483648
    %v1116 = vxor.u32 %v988, 2147483648
    %v1117 = vxor.u32 %v989, 2147483648
    %v1118 = vxor.u32 %v990, 2147483648
    %v1119 = vxor.u32 %v991, 2147483648
    %v1120 = vxor.u32 %v992, 2147483648
    %v1121 = vxor.u32 %v993, 2147483648
    %v1122 = vxor.u32 %v994, 2147483648
    %v1123 = vxor.u32 %v995, 2147483648
    %v1124 = vxor.u32 %v996, 2147483648
    %v1125 = vmul.f32 %v997, 1.442695
    %v1126 = vpow.pop %v1125
    %v1127 = vmul.f32 %v998, 1.442695
    %v1128 = vpow.pop %v1127
    %v1129 = vmul.f32 %v999, 1.442695
    %v1130 = vpow.pop %v1129
    %v1131 = vmul.f32 %v1000, 1.442695
    %v1132 = vpow.pop %v1131
    %v1133 = vmul.f32 %v1001, 1.442695
    %v1134 = vpow.pop %v1133
    %v1135 = vmul.f32 %v1002, 1.442695
    %v1136 = vpow.pop %v1135
    %v1137 = vmul.f32 %v1003, 1.442695
    %v1138 = vpow.pop %v1137
    %v1139 = vmul.f32 %v1004, 1.442695
    %v1140 = vpow.pop %v1139
    %v1141 = vmul.f32 %v1005, 1.442695
    %v1142 = vpow.pop %v1141
    %v1143 = vmul.f32 %v1006, 1.442695
    %v1144 = vpow.pop %v1143
    %v1145 = vmul.f32 %v1007, 1.442695
    %v1146 = vpow.pop %v1145
    %v1147 = vmul.f32 %v1008, 1.442695
    %v1148 = vpow.pop %v1147
    %v1149 = vmul.f32 %v1009, 1.442695
    %v1150 = vpow.pop %v1149
    %v1151 = vmul.f32 %v1010, 1.442695
    %v1152 = vpow.pop %v1151
    %v1153 = vmul.f32 %v1011, 1.442695
    %v1154 = vpow.pop %v1153
    %v1155 = vmul.f32 %v1012, 1.442695
    %v1156 = vpow.pop %v1155
    %v1157 = vmul.f32 %v1013, 1.442695
    %v1158 = vpow.pop %v1157
    %v1159 = vmul.f32 %v1014, 1.442695
    %v1160 = vpow.pop %v1159
    %v1161 = vmul.f32 %v1015, 1.442695
    %v1162 = vpow.pop %v1161
    %v1163 = vmul.f32 %v1016, 1.442695
    %v1164 = vpow.pop %v1163
    %v1165 = vmul.f32 %v1017, 1.442695
    %v1166 = vpow.pop %v1165
    %v1167 = vmul.f32 %v1018, 1.442695
    %v1168 = vpow.pop %v1167
    %v1169 = vmul.f32 %v1019, 1.442695
    %v1170 = vpow.pop %v1169
    %v1171 = vmul.f32 %v1020, 1.442695
    %v1172 = vpow.pop %v1171
    %v1173 = vmul.f32 %v1021, 1.442695
    %v1174 = vpow.pop %v1173
    %v1175 = vmul.f32 %v1022, 1.442695
    %v1176 = vpow.pop %v1175
    %v1177 = vmul.f32 %v1023, 1.442695
    %v1178 = vpow.pop %v1177
    %v1179 = vmul.f32 %v1024, 1.442695
    %v1180 = vpow.pop %v1179
    %v1181 = vmul.f32 %v1025, 1.442695
    %v1182 = vpow.pop %v1181
    %v1183 = vmul.f32 %v1026, 1.442695
    %v1184 = vpow.pop %v1183
    %v1185 = vmul.f32 %v1027, 1.442695
    %v1186 = vpow.pop %v1185
    %v1187 = vmul.f32 %v1028, 1.442695
    %v1188 = vpow.pop %v1187
    %v1189 = vmul.f32 %v1029, 1.442695
    %v1190 = vpow.pop %v1189
    %v1191 = vmul.f32 %v1030, 1.442695
    %v1192 = vpow.pop %v1191
    %v1193 = vmul.f32 %v1031, 1.442695
    %v1194 = vpow.pop %v1193
    %v1195 = vmul.f32 %v1032, 1.442695
    %v1196 = vpow.pop %v1195
    %v1197 = vmul.f32 %v1033, 1.442695
    %v1198 = vpow.pop %v1197
    %v1199 = vmul.f32 %v1034, 1.442695
    %v1200 = vpow.pop %v1199
    %v1201 = vmul.f32 %v1035, 1.442695
    %v1202 = vpow.pop %v1201
    %v1203 = vmul.f32 %v1036, 1.442695
    %v1204 = vpow.pop %v1203
    %v1205 = vmul.f32 %v1037, 1.442695
    %v1206 = vpow.pop %v1205
    %v1207 = vmul.f32 %v1038, 1.442695
    %v1208 = vpow.pop %v1207
    %v1209 = vmul.f32 %v1039, 1.442695
    %v1210 = vpow.pop %v1209
    %v1211 = vmul.f32 %v1040, 1.442695
    %v1212 = vpow.pop %v1211
    %v1213 = vmul.f32 %v1041, 1.442695
    %v1214 = vpow.pop %v1213
    %v1215 = vmul.f32 %v1042, 1.442695
    %v1216 = vpow.pop %v1215
    %v1217 = vmul.f32 %v1043, 1.442695
    %v1218 = vpow.pop %v1217
    %v1219 = vmul.f32 %v1044, 1.442695
    %v1220 = vpow.pop %v1219
    %v1221 = vmul.f32 %v1045, 1.442695
    %v1222 = vpow.pop %v1221
    %v1223 = vmul.f32 %v1046, 1.442695
    %v1224 = vpow.pop %v1223
    %v1225 = vmul.f32 %v1047, 1.442695
    %v1226 = vpow.pop %v1225
    %v1227 = vmul.f32 %v1048, 1.442695
    %v1228 = vpow.pop %v1227
    %v1229 = vmul.f32 %v1049, 1.442695
    %v1230 = vpow.pop %v1229
    %v1231 = vmul.f32 %v1050, 1.442695
    %v1232 = vpow.pop %v1231
    %v1233 = vmul.f32 %v1051, 1.442695
    %v1234 = vpow.pop %v1233
    %v1235 = vmul.f32 %v1052, 1.442695
    %v1236 = vpow.pop %v1235
    %v1237 = vmul.f32 %v1053, 1.442695
    %v1238 = vpow.pop %v1237
    %v1239 = vmul.f32 %v1054, 1.442695
    %v1240 = vpow.pop %v1239
    %v1241 = vmul.f32 %v1055, 1.442695
    %v1242 = vpow.pop %v1241
    %v1243 = vmul.f32 %v1056, 1.442695
    %v1244 = vpow.pop %v1243
    %v1245 = vmul.f32 %v1057, 1.442695
    %v1246 = vpow.pop %v1245
    %v1247 = vmul.f32 %v1058, 1.442695
    %v1248 = vpow.pop %v1247
    %v1249 = vmul.f32 %v1059, 1.442695
    %v1250 = vpow.pop %v1249
    %v1251 = vmul.f32 %v1060, 1.442695
    %v1252 = vpow.pop %v1251
    %v1253 = vmul.f32 %v1061, 1.442695
    %v1254 = vpow.pop %v1253
    %v1255 = vmul.f32 %v1062, 1.442695
    %v1256 = vpow.pop %v1255
    %v1257 = vmul.f32 %v1063, 1.442695
    %v1258 = vpow.pop %v1257
    %v1259 = vmul.f32 %v1064, 1.442695
    %v1260 = vpow.pop %v1259
    %v1261 = vmul.f32 %v1065, 1.442695
    %v1262 = vpow.pop %v1261
    %v1263 = vmul.f32 %v1066, 1.442695
    %v1264 = vpow.pop %v1263
    %v1265 = vmul.f32 %v1067, 1.442695
    %v1266 = vpow.pop %v1265
    %v1267 = vmul.f32 %v1068, 1.442695
    %v1268 = vpow.pop %v1267
    %v1269 = vmul.f32 %v1069, 1.442695
    %v1270 = vpow.pop %v1269
    %v1271 = vmul.f32 %v1070, 1.442695
    %v1272 = vpow.pop %v1271
    %v1273 = vmul.f32 %v1071, 1.442695
    %v1274 = vpow.pop %v1273
    %v1275 = vmul.f32 %v1072, 1.442695
    %v1276 = vpow.pop %v1275
    %v1277 = vmul.f32 %v1073, 1.442695
    %v1278 = vpow.pop %v1277
    %v1279 = vmul.f32 %v1074, 1.442695
    %v1280 = vpow.pop %v1279
    %v1281 = vmul.f32 %v1075, 1.442695
    %v1282 = vpow.pop %v1281
    %v1283 = vmul.f32 %v1076, 1.442695
    %v1284 = vpow.pop %v1283
    %v1285 = vmul.f32 %v1077, 1.442695
    %v1286 = vpow.pop %v1285
    %v1287 = vmul.f32 %v1078, 1.442695
    %v1288 = vpow.pop %v1287
    %v1289 = vmul.f32 %v1079, 1.442695
    %v1290 = vpow.pop %v1289
    %v1291 = vmul.f32 %v1080, 1.442695
    %v1292 = vpow.pop %v1291
    %v1293 = vmul.f32 %v1081, 1.442695
    %v1294 = vpow.pop %v1293
    %v1295 = vmul.f32 %v1082, 1.442695
    %v1296 = vpow.pop %v1295
    %v1297 = vmul.f32 %v1083, 1.442695
    %v1298 = vpow.pop %v1297
    %v1299 = vmul.f32 %v1084, 1.442695
    %v1300 = vpow.pop %v1299
    %v1301 = vmul.f32 %v1085, 1.442695
    %v1302 = vpow.pop %v1301
    %v1303 = vmul.f32 %v1086, 1.442695
    %v1304 = vpow.pop %v1303
    %v1305 = vmul.f32 %v1087, 1.442695
    %v1306 = vpow.pop %v1305
    %v1307 = vmul.f32 %v1088, 1.442695
    %v1308 = vpow.pop %v1307
    %v1309 = vmul.f32 %v1089, 1.442695
    %v1310 = vpow.pop %v1309
    %v1311 = vmul.f32 %v1090, 1.442695
    %v1312 = vpow.pop %v1311
    %v1313 = vmul.f32 %v1091, 1.442695
    %v1314 = vpow.pop %v1313
    %v1315 = vmul.f32 %v1092, 1.442695
    %v1316 = vpow.pop %v1315
    %v1317 = vmul.f32 %v1093, 1.442695
    %v1318 = vpow.pop %v1317
    %v1319 = vmul.f32 %v1094, 1.442695
    %v1320 = vpow.pop %v1319
    %v1321 = vmul.f32 %v1095, 1.442695
    %v1322 = vpow.pop %v1321
    %v1323 = vmul.f32 %v1096, 1.442695
    %v1324 = vpow.pop %v1323
    %v1325 = vmul.f32 %v1097, 1.442695
    %v1326 = vpow.pop %v1325
    %v1327 = vmul.f32 %v1098, 1.442695
    %v1328 = vpow.pop %v1327
    %v1329 = vmul.f32 %v1099, 1.442695
    %v1330 = vpow.pop %v1329
    %v1331 = vmul.f32 %v1100, 1.442695
    %v1332 = vpow.pop %v1331
    %v1333 = vmul.f32 %v1101, 1.442695
    %v1334 = vpow.pop %v1333
    %v1335 = vmul.f32 %v1102, 1.442695
    %v1336 = vpow.pop %v1335
    %v1337 = vmul.f32 %v1103, 1.442695
    %v1338 = vpow.pop %v1337
    %v1339 = vmul.f32 %v1104, 1.442695
    %v1340 = vpow.pop %v1339
    %v1341 = vmul.f32 %v1105, 1.442695
    %v1342 = vpow.pop %v1341
    %v1343 = vmul.f32 %v1106, 1.442695
    %v1344 = vpow.pop %v1343
    %v1345 = vmul.f32 %v1107, 1.442695
    %v1346 = vpow.pop %v1345
    %v1347 = vmul.f32 %v1108, 1.442695
    %v1348 = vpow.pop %v1347
    %v1349 = vmul.f32 %v1109, 1.442695
    %v1350 = vpow.pop %v1349
    %v1351 = vmul.f32 %v1110, 1.442695
    %v1352 = vpow.pop %v1351
    %v1353 = vmul.f32 %v1111, 1.442695
    %v1354 = vpow.pop %v1353
    %v1355 = vmul.f32 %v1112, 1.442695
    %v1356 = vpow.pop %v1355
    %v1357 = vmul.f32 %v1113, 1.442695
    %v1358 = vpow.pop %v1357
    %v1359 = vmul.f32 %v1114, 1.442695
    %v1360 = vpow.pop %v1359
    %v1361 = vmul.f32 %v1115, 1.442695
    %v1362 = vpow.pop %v1361
    %v1363 = vmul.f32 %v1116, 1.442695
    %v1364 = vpow.pop %v1363
    %v1365 = vmul.f32 %v1117, 1.442695
    %v1366 = vpow.pop %v1365
    %v1367 = vmul.f32 %v1118, 1.442695
    %v1368 = vpow.pop %v1367
    %v1369 = vmul.f32 %v1119, 1.442695
    %v1370 = vpow.pop %v1369
    %v1371 = vmul.f32 %v1120, 1.442695
    %v1372 = vpow.pop %v1371
    %v1373 = vmul.f32 %v1121, 1.442695
    %v1374 = vpow.pop %v1373
    %v1375 = vmul.f32 %v1122, 1.442695
    %v1376 = vpow.pop %v1375
    %v1377 = vmul.f32 %v1123, 1.442695
    %v1378 = vpow.pop %v1377
    %v1379 = vmul.f32 %v1124, 1.442695
    %v1380 = vpow.pop %v1379
    %v1381 = vadd.f32 %v1126, 1.0
    %v1382 = vadd.f32 %v1128, 1.0
    %v1383 = vadd.f32 %v1130, 1.0
    %v1384 = vadd.f32 %v1132, 1.0
    %v1385 = vadd.f32 %v1134, 1.0
    %v1386 = vadd.f32 %v1136, 1.0
    %v1387 = vadd.f32 %v1138, 1.0
    %v1388 = vadd.f32 %v1140, 1.0
    %v1389 = vadd.f32 %v1142, 1.0
    %v1390 = vadd.f32 %v1144, 1.0
    %v1391 = vadd.f32 %v1146, 1.0
    %v1392 = vadd.f32 %v1148, 1.0
    %v1393 = vadd.f32 %v1150, 1.0
    %v1394 = vadd.f32 %v1152, 1.0
    %v1395 = vadd.f32 %v1154, 1.0
    %v1396 = vadd.f32 %v1156, 1.0
    %v1397 = vadd.f32 %v1158, 1.0
    %v1398 = vadd.f32 %v1160, 1.0
    %v1399 = vadd.f32 %v1162, 1.0
    %v1400 = vadd.f32 %v1164, 1.0
    %v1401 = vadd.f32 %v1166, 1.0
    %v1402 = vadd.f32 %v1168, 1.0
    %v1403 = vadd.f32 %v1170, 1.0
    %v1404 = vadd.f32 %v1172, 1.0
    %v1405 = vadd.f32 %v1174, 1.0
    %v1406 = vadd.f32 %v1176, 1.0
    %v1407 = vadd.f32 %v1178, 1.0
    %v1408 = vadd.f32 %v1180, 1.0
    %v1409 = vadd.f32 %v1182, 1.0
    %v1410 = vadd.f32 %v1184, 1.0
    %v1411 = vadd.f32 %v1186, 1.0
    %v1412 = vadd.f32 %v1188, 1.0
    %v1413 = vadd.f32 %v1190, 1.0
    %v1414 = vadd.f32 %v1192, 1.0
    %v1415 = vadd.f32 %v1194, 1.0
    %v1416 = vadd.f32 %v1196, 1.0
    %v1417 = vadd.f32 %v1198, 1.0
    %v1418 = vadd.f32 %v1200, 1.0
    %v1419 = vadd.f32 %v1202, 1.0
    %v1420 = vadd.f32 %v1204, 1.0
    %v1421 = vadd.f32 %v1206, 1.0
    %v1422 = vadd.f32 %v1208, 1.0
    %v1423 = vadd.f32 %v1210, 1.0
    %v1424 = vadd.f32 %v1212, 1.0
    %v1425 = vadd.f32 %v1214, 1.0
    %v1426 = vadd.f32 %v1216, 1.0
    %v1427 = vadd.f32 %v1218, 1.0
    %v1428 = vadd.f32 %v1220, 1.0
    %v1429 = vadd.f32 %v1222, 1.0
    %v1430 = vadd.f32 %v1224, 1.0
    %v1431 = vadd.f32 %v1226, 1.0
    %v1432 = vadd.f32 %v1228, 1.0
    %v1433 = vadd.f32 %v1230, 1.0
    %v1434 = vadd.f32 %v1232, 1.0
    %v1435 = vadd.f32 %v1234, 1.0
    %v1436 = vadd.f32 %v1236, 1.0
    %v1437 = vadd.f32 %v1238, 1.0
    %v1438 = vadd.f32 %v1240, 1.0
    %v1439 = vadd.f32 %v1242, 1.0
    %v1440 = vadd.f32 %v1244, 1.0
    %v1441 = vadd.f32 %v1246, 1.0
    %v1442 = vadd.f32 %v1248, 1.0
    %v1443 = vadd.f32 %v1250, 1.0
    %v1444 = vadd.f32 %v1252, 1.0
    %v1445 = vadd.f32 %v1254, 1.0
    %v1446 = vadd.f32 %v1256, 1.0
    %v1447 = vadd.f32 %v1258, 1.0
    %v1448 = vadd.f32 %v1260, 1.0
    %v1449 = vadd.f32 %v1262, 1.0
    %v1450 = vadd.f32 %v1264, 1.0
    %v1451 = vadd.f32 %v1266, 1.0
    %v1452 = vadd.f32 %v1268, 1.0
    %v1453 = vadd.f32 %v1270, 1.0
    %v1454 = vadd.f32 %v1272, 1.0
    %v1455 = vadd.f32 %v1274, 1.0
    %v1456 = vadd.f32 %v1276, 1.0
    %v1457 = vadd.f32 %v1278, 1.0
    %v1458 = vadd.f32 %v1280, 1.0
    %v1459 = vadd.f32 %v1282, 1.0
    %v1460 = vadd.f32 %v1284, 1.0
    %v1461 = vadd.f32 %v1286, 1.0
    %v1462 = vadd.f32 %v1288, 1.0
    %v1463 = vadd.f32 %v1290, 1.0
    %v1464 = vadd.f32 %v1292, 1.0
    %v1465 = vadd.f32 %v1294, 1.0
    %v1466 = vadd.f32 %v1296, 1.0
    %v1467 = vadd.f32 %v1298, 1.0
    %v1468 = vadd.f32 %v1300, 1.0
    %v1469 = vadd.f32 %v1302, 1.0
    %v1470 = vadd.f32 %v1304, 1.0
    %v1471 = vadd.f32 %v1306, 1.0
    %v1472 = vadd.f32 %v1308, 1.0
    %v1473 = vadd.f32 %v1310, 1.0
    %v1474 = vadd.f32 %v1312, 1.0
    %v1475 = vadd.f32 %v1314, 1.0
    %v1476 = vadd.f32 %v1316, 1.0
    %v1477 = vadd.f32 %v1318, 1.0
    %v1478 = vadd.f32 %v1320, 1.0
    %v1479 = vadd.f32 %v1322, 1.0
    %v1480 = vadd.f32 %v1324, 1.0
    %v1481 = vadd.f32 %v1326, 1.0
    %v1482 = vadd.f32 %v1328, 1.0
    %v1483 = vadd.f32 %v1330, 1.0
    %v1484 = vadd.f32 %v1332, 1.0
    %v1485 = vadd.f32 %v1334, 1.0
    %v1486 = vadd.f32 %v1336, 1.0
    %v1487 = vadd.f32 %v1338, 1.0
    %v1488 = vadd.f32 %v1340, 1.0
    %v1489 = vadd.f32 %v1342, 1.0
    %v1490 = vadd.f32 %v1344, 1.0
    %v1491 = vadd.f32 %v1346, 1.0
    %v1492 = vadd.f32 %v1348, 1.0
    %v1493 = vadd.f32 %v1350, 1.0
    %v1494 = vadd.f32 %v1352, 1.0
    %v1495 = vadd.f32 %v1354, 1.0
    %v1496 = vadd.f32 %v1356, 1.0
    %v1497 = vadd.f32 %v1358, 1.0
    %v1498 = vadd.f32 %v1360, 1.0
    %v1499 = vadd.f32 %v1362, 1.0
    %v1500 = vadd.f32 %v1364, 1.0
    %v1501 = vadd.f32 %v1366, 1.0
    %v1502 = vadd.f32 %v1368, 1.0
    %v1503 = vadd.f32 %v1370, 1.0
    %v1504 = vadd.f32 %v1372, 1.0
    %v1505 = vadd.f32 %v1374, 1.0
    %v1506 = vadd.f32 %v1376, 1.0
    %v1507 = vadd.f32 %v1378, 1.0
    %v1508 = vadd.f32 %v1380, 1.0
    %v1509 = vrcp.pop %v1381
    %v1510 = vmul.f32 %v1381, %v1509
    %v1511 = vsub.f32 1.0, %v1510
    %v1512 = vmul.f32 %v1509, %v1511
    %v1513 = vadd.f32 %v1509, %v1512
    %vm1514 = vweird.f32 %v1381
    %vm1515 = vweird.f32 %v1509
    %vm1516 = vmor %vm1514, %vm1515
    %v1517 = vsel %vm1516, %v1509, %v1513
    %v1518 = vand.u32 2147483647, %v1381
    %vm1519 = vcmp.eq.f32.partialorder %v1518, 8.507059e+37
    %v1520 = vand.u32 %v1381, 2147483648
    %v1521 = vor.u32 1.1754944e-38, %v1520
    %v1522 = vsel %vm1519, %v1521, %v1517
    %v1523 = vmul.f32 1.0, %v1522
    %v1524 = vrcp.pop %v1382
    %v1525 = vmul.f32 %v1382, %v1524
    %v1526 = vsub.f32 1.0, %v1525
    %v1527 = vmul.f32 %v1524, %v1526
    %v1528 = vadd.f32 %v1524, %v1527
    %vm1529 = vweird.f32 %v1382
    %vm1530 = vweird.f32 %v1524
    %vm1531 = vmor %vm1529, %vm1530
    %v1532 = vsel %vm1531, %v1524, %v1528
    %v1533 = vand.u32 2147483647, %v1382
    %vm1534 = vcmp.eq.f32.partialorder %v1533, 8.507059e+37
    %v1535 = vand.u32 %v1382, 2147483648
    %v1536 = vor.u32 1.1754944e-38, %v1535
    %v1537 = vsel %vm1534, %v1536, %v1532
    %v1538 = vmul.f32 1.0, %v1537
    %v1539 = vrcp.pop %v1383
    %v1540 = vmul.f32 %v1383, %v1539
    %v1541 = vsub.f32 1.0, %v1540
    %v1542 = vmul.f32 %v1539, %v1541
    %v1543 = vadd.f32 %v1539, %v1542
    %vm1544 = vweird.f32 %v1383
    %vm1545 = vweird.f32 %v1539
    %vm1546 = vmor %vm1544, %vm1545
    %v1547 = vsel %vm1546, %v1539, %v1543
    %v1548 = vand.u32 2147483647, %v1383
    %vm1549 = vcmp.eq.f32.partialorder %v1548, 8.507059e+37
    %v1550 = vand.u32 %v1383, 2147483648
    %v1551 = vor.u32 1.1754944e-38, %v1550
    %v1552 = vsel %vm1549, %v1551, %v1547
    %v1553 = vmul.f32 1.0, %v1552
    %v1554 = vrcp.pop %v1384
    %v1555 = vmul.f32 %v1384, %v1554
    %v1556 = vsub.f32 1.0, %v1555
    %v1557 = vmul.f32 %v1554, %v1556
    %v1558 = vadd.f32 %v1554, %v1557
    %vm1559 = vweird.f32 %v1384
    %vm1560 = vweird.f32 %v1554
    %vm1561 = vmor %vm1559, %vm1560
    %v1562 = vsel %vm1561, %v1554, %v1558
    %v1563 = vand.u32 2147483647, %v1384
    %vm1564 = vcmp.eq.f32.partialorder %v1563, 8.507059e+37
    %v1565 = vand.u32 %v1384, 2147483648
    %v1566 = vor.u32 1.1754944e-38, %v1565
    %v1567 = vsel %vm1564, %v1566, %v1562
    %v1568 = vmul.f32 1.0, %v1567
    %v1569 = vrcp.pop %v1385
    %v1570 = vmul.f32 %v1385, %v1569
    %v1571 = vsub.f32 1.0, %v1570
    %v1572 = vmul.f32 %v1569, %v1571
    %v1573 = vadd.f32 %v1569, %v1572
    %vm1574 = vweird.f32 %v1385
    %vm1575 = vweird.f32 %v1569
    %vm1576 = vmor %vm1574, %vm1575
    %v1577 = vsel %vm1576, %v1569, %v1573
    %v1578 = vand.u32 2147483647, %v1385
    %vm1579 = vcmp.eq.f32.partialorder %v1578, 8.507059e+37
    %v1580 = vand.u32 %v1385, 2147483648
    %v1581 = vor.u32 1.1754944e-38, %v1580
    %v1582 = vsel %vm1579, %v1581, %v1577
    %v1583 = vmul.f32 1.0, %v1582
    %v1584 = vrcp.pop %v1386
    %v1585 = vmul.f32 %v1386, %v1584
    %v1586 = vsub.f32 1.0, %v1585
    %v1587 = vmul.f32 %v1584, %v1586
    %v1588 = vadd.f32 %v1584, %v1587
    %vm1589 = vweird.f32 %v1386
    %vm1590 = vweird.f32 %v1584
    %vm1591 = vmor %vm1589, %vm1590
    %v1592 = vsel %vm1591, %v1584, %v1588
    %v1593 = vand.u32 2147483647, %v1386
    %vm1594 = vcmp.eq.f32.partialorder %v1593, 8.507059e+37
    %v1595 = vand.u32 %v1386, 2147483648
    %v1596 = vor.u32 1.1754944e-38, %v1595
    %v1597 = vsel %vm1594, %v1596, %v1592
    %v1598 = vmul.f32 1.0, %v1597
    %v1599 = vrcp.pop %v1387
    %v1600 = vmul.f32 %v1387, %v1599
    %v1601 = vsub.f32 1.0, %v1600
    %v1602 = vmul.f32 %v1599, %v1601
    %v1603 = vadd.f32 %v1599, %v1602
    %vm1604 = vweird.f32 %v1387
    %vm1605 = vweird.f32 %v1599
    %vm1606 = vmor %vm1604, %vm1605
    %v1607 = vsel %vm1606, %v1599, %v1603
    %v1608 = vand.u32 2147483647, %v1387
    %vm1609 = vcmp.eq.f32.partialorder %v1608, 8.507059e+37
    %v1610 = vand.u32 %v1387, 2147483648
    %v1611 = vor.u32 1.1754944e-38, %v1610
    %v1612 = vsel %vm1609, %v1611, %v1607
    %v1613 = vmul.f32 1.0, %v1612
    %v1614 = vrcp.pop %v1388
    %v1615 = vmul.f32 %v1388, %v1614
    %v1616 = vsub.f32 1.0, %v1615
    %v1617 = vmul.f32 %v1614, %v1616
    %v1618 = vadd.f32 %v1614, %v1617
    %vm1619 = vweird.f32 %v1388
    %vm1620 = vweird.f32 %v1614
    %vm1621 = vmor %vm1619, %vm1620
    %v1622 = vsel %vm1621, %v1614, %v1618
    %v1623 = vand.u32 2147483647, %v1388
    %vm1624 = vcmp.eq.f32.partialorder %v1623, 8.507059e+37
    %v1625 = vand.u32 %v1388, 2147483648
    %v1626 = vor.u32 1.1754944e-38, %v1625
    %v1627 = vsel %vm1624, %v1626, %v1622
    %v1628 = vmul.f32 1.0, %v1627
    %v1629 = vrcp.pop %v1389
    %v1630 = vmul.f32 %v1389, %v1629
    %v1631 = vsub.f32 1.0, %v1630
    %v1632 = vmul.f32 %v1629, %v1631
    %v1633 = vadd.f32 %v1629, %v1632
    %vm1634 = vweird.f32 %v1389
    %vm1635 = vweird.f32 %v1629
    %vm1636 = vmor %vm1634, %vm1635
    %v1637 = vsel %vm1636, %v1629, %v1633
    %v1638 = vand.u32 2147483647, %v1389
    %vm1639 = vcmp.eq.f32.partialorder %v1638, 8.507059e+37
    %v1640 = vand.u32 %v1389, 2147483648
    %v1641 = vor.u32 1.1754944e-38, %v1640
    %v1642 = vsel %vm1639, %v1641, %v1637
    %v1643 = vmul.f32 1.0, %v1642
    %v1644 = vrcp.pop %v1390
    %v1645 = vmul.f32 %v1390, %v1644
    %v1646 = vsub.f32 1.0, %v1645
    %v1647 = vmul.f32 %v1644, %v1646
    %v1648 = vadd.f32 %v1644, %v1647
    %vm1649 = vweird.f32 %v1390
    %vm1650 = vweird.f32 %v1644
    %vm1651 = vmor %vm1649, %vm1650
    %v1652 = vsel %vm1651, %v1644, %v1648
    %v1653 = vand.u32 2147483647, %v1390
    %vm1654 = vcmp.eq.f32.partialorder %v1653, 8.507059e+37
    %v1655 = vand.u32 %v1390, 2147483648
    %v1656 = vor.u32 1.1754944e-38, %v1655
    %v1657 = vsel %vm1654, %v1656, %v1652
    %v1658 = vmul.f32 1.0, %v1657
    %v1659 = vrcp.pop %v1391
    %v1660 = vmul.f32 %v1391, %v1659
    %v1661 = vsub.f32 1.0, %v1660
    %v1662 = vmul.f32 %v1659, %v1661
    %v1663 = vadd.f32 %v1659, %v1662
    %vm1664 = vweird.f32 %v1391
    %vm1665 = vweird.f32 %v1659
    %vm1666 = vmor %vm1664, %vm1665
    %v1667 = vsel %vm1666, %v1659, %v1663
    %v1668 = vand.u32 2147483647, %v1391
    %vm1669 = vcmp.eq.f32.partialorder %v1668, 8.507059e+37
    %v1670 = vand.u32 %v1391, 2147483648
    %v1671 = vor.u32 1.1754944e-38, %v1670
    %v1672 = vsel %vm1669, %v1671, %v1667
    %v1673 = vmul.f32 1.0, %v1672
    %v1674 = vrcp.pop %v1392
    %v1675 = vmul.f32 %v1392, %v1674
    %v1676 = vsub.f32 1.0, %v1675
    %v1677 = vmul.f32 %v1674, %v1676
    %v1678 = vadd.f32 %v1674, %v1677
    %vm1679 = vweird.f32 %v1392
    %vm1680 = vweird.f32 %v1674
    %vm1681 = vmor %vm1679, %vm1680
    %v1682 = vsel %vm1681, %v1674, %v1678
    %v1683 = vand.u32 2147483647, %v1392
    %vm1684 = vcmp.eq.f32.partialorder %v1683, 8.507059e+37
    %v1685 = vand.u32 %v1392, 2147483648
    %v1686 = vor.u32 1.1754944e-38, %v1685
    %v1687 = vsel %vm1684, %v1686, %v1682
    %v1688 = vmul.f32 1.0, %v1687
    %v1689 = vrcp.pop %v1393
    %v1690 = vmul.f32 %v1393, %v1689
    %v1691 = vsub.f32 1.0, %v1690
    %v1692 = vmul.f32 %v1689, %v1691
    %v1693 = vadd.f32 %v1689, %v1692
    %vm1694 = vweird.f32 %v1393
    %vm1695 = vweird.f32 %v1689
    %vm1696 = vmor %vm1694, %vm1695
    %v1697 = vsel %vm1696, %v1689, %v1693
    %v1698 = vand.u32 2147483647, %v1393
    %vm1699 = vcmp.eq.f32.partialorder %v1698, 8.507059e+37
    %v1700 = vand.u32 %v1393, 2147483648
    %v1701 = vor.u32 1.1754944e-38, %v1700
    %v1702 = vsel %vm1699, %v1701, %v1697
    %v1703 = vmul.f32 1.0, %v1702
    %v1704 = vrcp.pop %v1394
    %v1705 = vmul.f32 %v1394, %v1704
    %v1706 = vsub.f32 1.0, %v1705
    %v1707 = vmul.f32 %v1704, %v1706
    %v1708 = vadd.f32 %v1704, %v1707
    %vm1709 = vweird.f32 %v1394
    %vm1710 = vweird.f32 %v1704
    %vm1711 = vmor %vm1709, %vm1710
    %v1712 = vsel %vm1711, %v1704, %v1708
    %v1713 = vand.u32 2147483647, %v1394
    %vm1714 = vcmp.eq.f32.partialorder %v1713, 8.507059e+37
    %v1715 = vand.u32 %v1394, 2147483648
    %v1716 = vor.u32 1.1754944e-38, %v1715
    %v1717 = vsel %vm1714, %v1716, %v1712
    %v1718 = vmul.f32 1.0, %v1717
    %v1719 = vrcp.pop %v1395
    %v1720 = vmul.f32 %v1395, %v1719
    %v1721 = vsub.f32 1.0, %v1720
    %v1722 = vmul.f32 %v1719, %v1721
    %v1723 = vadd.f32 %v1719, %v1722
    %vm1724 = vweird.f32 %v1395
    %vm1725 = vweird.f32 %v1719
    %vm1726 = vmor %vm1724, %vm1725
    %v1727 = vsel %vm1726, %v1719, %v1723
    %v1728 = vand.u32 2147483647, %v1395
    %vm1729 = vcmp.eq.f32.partialorder %v1728, 8.507059e+37
    %v1730 = vand.u32 %v1395, 2147483648
    %v1731 = vor.u32 1.1754944e-38, %v1730
    %v1732 = vsel %vm1729, %v1731, %v1727
    %v1733 = vmul.f32 1.0, %v1732
    %v1734 = vrcp.pop %v1396
    %v1735 = vmul.f32 %v1396, %v1734
    %v1736 = vsub.f32 1.0, %v1735
    %v1737 = vmul.f32 %v1734, %v1736
    %v1738 = vadd.f32 %v1734, %v1737
    %vm1739 = vweird.f32 %v1396
    %vm1740 = vweird.f32 %v1734
    %vm1741 = vmor %vm1739, %vm1740
    %v1742 = vsel %vm1741, %v1734, %v1738
    %v1743 = vand.u32 2147483647, %v1396
    %vm1744 = vcmp.eq.f32.partialorder %v1743, 8.507059e+37
    %v1745 = vand.u32 %v1396, 2147483648
    %v1746 = vor.u32 1.1754944e-38, %v1745
    %v1747 = vsel %vm1744, %v1746, %v1742
    %v1748 = vmul.f32 1.0, %v1747
    %v1749 = vrcp.pop %v1397
    %v1750 = vmul.f32 %v1397, %v1749
    %v1751 = vsub.f32 1.0, %v1750
    %v1752 = vmul.f32 %v1749, %v1751
    %v1753 = vadd.f32 %v1749, %v1752
    %vm1754 = vweird.f32 %v1397
    %vm1755 = vweird.f32 %v1749
    %vm1756 = vmor %vm1754, %vm1755
    %v1757 = vsel %vm1756, %v1749, %v1753
    %v1758 = vand.u32 2147483647, %v1397
    %vm1759 = vcmp.eq.f32.partialorder %v1758, 8.507059e+37
    %v1760 = vand.u32 %v1397, 2147483648
    %v1761 = vor.u32 1.1754944e-38, %v1760
    %v1762 = vsel %vm1759, %v1761, %v1757
    %v1763 = vmul.f32 1.0, %v1762
    %v1764 = vrcp.pop %v1398
    %v1765 = vmul.f32 %v1398, %v1764
    %v1766 = vsub.f32 1.0, %v1765
    %v1767 = vmul.f32 %v1764, %v1766
    %v1768 = vadd.f32 %v1764, %v1767
    %vm1769 = vweird.f32 %v1398
    %vm1770 = vweird.f32 %v1764
    %vm1771 = vmor %vm1769, %vm1770
    %v1772 = vsel %vm1771, %v1764, %v1768
    %v1773 = vand.u32 2147483647, %v1398
    %vm1774 = vcmp.eq.f32.partialorder %v1773, 8.507059e+37
    %v1775 = vand.u32 %v1398, 2147483648
    %v1776 = vor.u32 1.1754944e-38, %v1775
    %v1777 = vsel %vm1774, %v1776, %v1772
    %v1778 = vmul.f32 1.0, %v1777
    %v1779 = vrcp.pop %v1399
    %v1780 = vmul.f32 %v1399, %v1779
    %v1781 = vsub.f32 1.0, %v1780
    %v1782 = vmul.f32 %v1779, %v1781
    %v1783 = vadd.f32 %v1779, %v1782
    %vm1784 = vweird.f32 %v1399
    %vm1785 = vweird.f32 %v1779
    %vm1786 = vmor %vm1784, %vm1785
    %v1787 = vsel %vm1786, %v1779, %v1783
    %v1788 = vand.u32 2147483647, %v1399
    %vm1789 = vcmp.eq.f32.partialorder %v1788, 8.507059e+37
    %v1790 = vand.u32 %v1399, 2147483648
    %v1791 = vor.u32 1.1754944e-38, %v1790
    %v1792 = vsel %vm1789, %v1791, %v1787
    %v1793 = vmul.f32 1.0, %v1792
    %v1794 = vrcp.pop %v1400
    %v1795 = vmul.f32 %v1400, %v1794
    %v1796 = vsub.f32 1.0, %v1795
    %v1797 = vmul.f32 %v1794, %v1796
    %v1798 = vadd.f32 %v1794, %v1797
    %vm1799 = vweird.f32 %v1400
    %vm1800 = vweird.f32 %v1794
    %vm1801 = vmor %vm1799, %vm1800
    %v1802 = vsel %vm1801, %v1794, %v1798
    %v1803 = vand.u32 2147483647, %v1400
    %vm1804 = vcmp.eq.f32.partialorder %v1803, 8.507059e+37
    %v1805 = vand.u32 %v1400, 2147483648
    %v1806 = vor.u32 1.1754944e-38, %v1805
    %v1807 = vsel %vm1804, %v1806, %v1802
    %v1808 = vmul.f32 1.0, %v1807
    %v1809 = vrcp.pop %v1401
    %v1810 = vmul.f32 %v1401, %v1809
    %v1811 = vsub.f32 1.0, %v1810
    %v1812 = vmul.f32 %v1809, %v1811
    %v1813 = vadd.f32 %v1809, %v1812
    %vm1814 = vweird.f32 %v1401
    %vm1815 = vweird.f32 %v1809
    %vm1816 = vmor %vm1814, %vm1815
    %v1817 = vsel %vm1816, %v1809, %v1813
    %v1818 = vand.u32 2147483647, %v1401
    %vm1819 = vcmp.eq.f32.partialorder %v1818, 8.507059e+37
    %v1820 = vand.u32 %v1401, 2147483648
    %v1821 = vor.u32 1.1754944e-38, %v1820
    %v1822 = vsel %vm1819, %v1821, %v1817
    %v1823 = vmul.f32 1.0, %v1822
    %v1824 = vrcp.pop %v1402
    %v1825 = vmul.f32 %v1402, %v1824
    %v1826 = vsub.f32 1.0, %v1825
    %v1827 = vmul.f32 %v1824, %v1826
    %v1828 = vadd.f32 %v1824, %v1827
    %vm1829 = vweird.f32 %v1402
    %vm1830 = vweird.f32 %v1824
    %vm1831 = vmor %vm1829, %vm1830
    %v1832 = vsel %vm1831, %v1824, %v1828
    %v1833 = vand.u32 2147483647, %v1402
    %vm1834 = vcmp.eq.f32.partialorder %v1833, 8.507059e+37
    %v1835 = vand.u32 %v1402, 2147483648
    %v1836 = vor.u32 1.1754944e-38, %v1835
    %v1837 = vsel %vm1834, %v1836, %v1832
    %v1838 = vmul.f32 1.0, %v1837
    %v1839 = vrcp.pop %v1403
    %v1840 = vmul.f32 %v1403, %v1839
    %v1841 = vsub.f32 1.0, %v1840
    %v1842 = vmul.f32 %v1839, %v1841
    %v1843 = vadd.f32 %v1839, %v1842
    %vm1844 = vweird.f32 %v1403
    %vm1845 = vweird.f32 %v1839
    %vm1846 = vmor %vm1844, %vm1845
    %v1847 = vsel %vm1846, %v1839, %v1843
    %v1848 = vand.u32 2147483647, %v1403
    %vm1849 = vcmp.eq.f32.partialorder %v1848, 8.507059e+37
    %v1850 = vand.u32 %v1403, 2147483648
    %v1851 = vor.u32 1.1754944e-38, %v1850
    %v1852 = vsel %vm1849, %v1851, %v1847
    %v1853 = vmul.f32 1.0, %v1852
    %v1854 = vrcp.pop %v1404
    %v1855 = vmul.f32 %v1404, %v1854
    %v1856 = vsub.f32 1.0, %v1855
    %v1857 = vmul.f32 %v1854, %v1856
    %v1858 = vadd.f32 %v1854, %v1857
    %vm1859 = vweird.f32 %v1404
    %vm1860 = vweird.f32 %v1854
    %vm1861 = vmor %vm1859, %vm1860
    %v1862 = vsel %vm1861, %v1854, %v1858
    %v1863 = vand.u32 2147483647, %v1404
    %vm1864 = vcmp.eq.f32.partialorder %v1863, 8.507059e+37
    %v1865 = vand.u32 %v1404, 2147483648
    %v1866 = vor.u32 1.1754944e-38, %v1865
    %v1867 = vsel %vm1864, %v1866, %v1862
    %v1868 = vmul.f32 1.0, %v1867
    %v1869 = vrcp.pop %v1405
    %v1870 = vmul.f32 %v1405, %v1869
    %v1871 = vsub.f32 1.0, %v1870
    %v1872 = vmul.f32 %v1869, %v1871
    %v1873 = vadd.f32 %v1869, %v1872
    %vm1874 = vweird.f32 %v1405
    %vm1875 = vweird.f32 %v1869
    %vm1876 = vmor %vm1874, %vm1875
    %v1877 = vsel %vm1876, %v1869, %v1873
    %v1878 = vand.u32 2147483647, %v1405
    %vm1879 = vcmp.eq.f32.partialorder %v1878, 8.507059e+37
    %v1880 = vand.u32 %v1405, 2147483648
    %v1881 = vor.u32 1.1754944e-38, %v1880
    %v1882 = vsel %vm1879, %v1881, %v1877
    %v1883 = vmul.f32 1.0, %v1882
    %v1884 = vrcp.pop %v1406
    %v1885 = vmul.f32 %v1406, %v1884
    %v1886 = vsub.f32 1.0, %v1885
    %v1887 = vmul.f32 %v1884, %v1886
    %v1888 = vadd.f32 %v1884, %v1887
    %vm1889 = vweird.f32 %v1406
    %vm1890 = vweird.f32 %v1884
    %vm1891 = vmor %vm1889, %vm1890
    %v1892 = vsel %vm1891, %v1884, %v1888
    %v1893 = vand.u32 2147483647, %v1406
    %vm1894 = vcmp.eq.f32.partialorder %v1893, 8.507059e+37
    %v1895 = vand.u32 %v1406, 2147483648
    %v1896 = vor.u32 1.1754944e-38, %v1895
    %v1897 = vsel %vm1894, %v1896, %v1892
    %v1898 = vmul.f32 1.0, %v1897
    %v1899 = vrcp.pop %v1407
    %v1900 = vmul.f32 %v1407, %v1899
    %v1901 = vsub.f32 1.0, %v1900
    %v1902 = vmul.f32 %v1899, %v1901
    %v1903 = vadd.f32 %v1899, %v1902
    %vm1904 = vweird.f32 %v1407
    %vm1905 = vweird.f32 %v1899
    %vm1906 = vmor %vm1904, %vm1905
    %v1907 = vsel %vm1906, %v1899, %v1903
    %v1908 = vand.u32 2147483647, %v1407
    %vm1909 = vcmp.eq.f32.partialorder %v1908, 8.507059e+37
    %v1910 = vand.u32 %v1407, 2147483648
    %v1911 = vor.u32 1.1754944e-38, %v1910
    %v1912 = vsel %vm1909, %v1911, %v1907
    %v1913 = vmul.f32 1.0, %v1912
    %v1914 = vrcp.pop %v1408
    %v1915 = vmul.f32 %v1408, %v1914
    %v1916 = vsub.f32 1.0, %v1915
    %v1917 = vmul.f32 %v1914, %v1916
    %v1918 = vadd.f32 %v1914, %v1917
    %vm1919 = vweird.f32 %v1408
    %vm1920 = vweird.f32 %v1914
    %vm1921 = vmor %vm1919, %vm1920
    %v1922 = vsel %vm1921, %v1914, %v1918
    %v1923 = vand.u32 2147483647, %v1408
    %vm1924 = vcmp.eq.f32.partialorder %v1923, 8.507059e+37
    %v1925 = vand.u32 %v1408, 2147483648
    %v1926 = vor.u32 1.1754944e-38, %v1925
    %v1927 = vsel %vm1924, %v1926, %v1922
    %v1928 = vmul.f32 1.0, %v1927
    %v1929 = vrcp.pop %v1409
    %v1930 = vmul.f32 %v1409, %v1929
    %v1931 = vsub.f32 1.0, %v1930
    %v1932 = vmul.f32 %v1929, %v1931
    %v1933 = vadd.f32 %v1929, %v1932
    %vm1934 = vweird.f32 %v1409
    %vm1935 = vweird.f32 %v1929
    %vm1936 = vmor %vm1934, %vm1935
    %v1937 = vsel %vm1936, %v1929, %v1933
    %v1938 = vand.u32 2147483647, %v1409
    %vm1939 = vcmp.eq.f32.partialorder %v1938, 8.507059e+37
    %v1940 = vand.u32 %v1409, 2147483648
    %v1941 = vor.u32 1.1754944e-38, %v1940
    %v1942 = vsel %vm1939, %v1941, %v1937
    %v1943 = vmul.f32 1.0, %v1942
    %v1944 = vrcp.pop %v1410
    %v1945 = vmul.f32 %v1410, %v1944
    %v1946 = vsub.f32 1.0, %v1945
    %v1947 = vmul.f32 %v1944, %v1946
    %v1948 = vadd.f32 %v1944, %v1947
    %vm1949 = vweird.f32 %v1410
    %vm1950 = vweird.f32 %v1944
    %vm1951 = vmor %vm1949, %vm1950
    %v1952 = vsel %vm1951, %v1944, %v1948
    %v1953 = vand.u32 2147483647, %v1410
    %vm1954 = vcmp.eq.f32.partialorder %v1953, 8.507059e+37
    %v1955 = vand.u32 %v1410, 2147483648
    %v1956 = vor.u32 1.1754944e-38, %v1955
    %v1957 = vsel %vm1954, %v1956, %v1952
    %v1958 = vmul.f32 1.0, %v1957
    %v1959 = vrcp.pop %v1411
    %v1960 = vmul.f32 %v1411, %v1959
    %v1961 = vsub.f32 1.0, %v1960
    %v1962 = vmul.f32 %v1959, %v1961
    %v1963 = vadd.f32 %v1959, %v1962
    %vm1964 = vweird.f32 %v1411
    %vm1965 = vweird.f32 %v1959
    %vm1966 = vmor %vm1964, %vm1965
    %v1967 = vsel %vm1966, %v1959, %v1963
    %v1968 = vand.u32 2147483647, %v1411
    %vm1969 = vcmp.eq.f32.partialorder %v1968, 8.507059e+37
    %v1970 = vand.u32 %v1411, 2147483648
    %v1971 = vor.u32 1.1754944e-38, %v1970
    %v1972 = vsel %vm1969, %v1971, %v1967
    %v1973 = vmul.f32 1.0, %v1972
    %v1974 = vrcp.pop %v1412
    %v1975 = vmul.f32 %v1412, %v1974
    %v1976 = vsub.f32 1.0, %v1975
    %v1977 = vmul.f32 %v1974, %v1976
    %v1978 = vadd.f32 %v1974, %v1977
    %vm1979 = vweird.f32 %v1412
    %vm1980 = vweird.f32 %v1974
    %vm1981 = vmor %vm1979, %vm1980
    %v1982 = vsel %vm1981, %v1974, %v1978
    %v1983 = vand.u32 2147483647, %v1412
    %vm1984 = vcmp.eq.f32.partialorder %v1983, 8.507059e+37
    %v1985 = vand.u32 %v1412, 2147483648
    %v1986 = vor.u32 1.1754944e-38, %v1985
    %v1987 = vsel %vm1984, %v1986, %v1982
    %v1988 = vmul.f32 1.0, %v1987
    %v1989 = vrcp.pop %v1413
    %v1990 = vmul.f32 %v1413, %v1989
    %v1991 = vsub.f32 1.0, %v1990
    %v1992 = vmul.f32 %v1989, %v1991
    %v1993 = vadd.f32 %v1989, %v1992
    %vm1994 = vweird.f32 %v1413
    %vm1995 = vweird.f32 %v1989
    %vm1996 = vmor %vm1994, %vm1995
    %v1997 = vsel %vm1996, %v1989, %v1993
    %v1998 = vand.u32 2147483647, %v1413
    %vm1999 = vcmp.eq.f32.partialorder %v1998, 8.507059e+37
    %v2000 = vand.u32 %v1413, 2147483648
    %v2001 = vor.u32 1.1754944e-38, %v2000
    %v2002 = vsel %vm1999, %v2001, %v1997
    %v2003 = vmul.f32 1.0, %v2002
    %v2004 = vrcp.pop %v1414
    %v2005 = vmul.f32 %v1414, %v2004
    %v2006 = vsub.f32 1.0, %v2005
    %v2007 = vmul.f32 %v2004, %v2006
    %v2008 = vadd.f32 %v2004, %v2007
    %vm2009 = vweird.f32 %v1414
    %vm2010 = vweird.f32 %v2004
    %vm2011 = vmor %vm2009, %vm2010
    %v2012 = vsel %vm2011, %v2004, %v2008
    %v2013 = vand.u32 2147483647, %v1414
    %vm2014 = vcmp.eq.f32.partialorder %v2013, 8.507059e+37
    %v2015 = vand.u32 %v1414, 2147483648
    %v2016 = vor.u32 1.1754944e-38, %v2015
    %v2017 = vsel %vm2014, %v2016, %v2012
    %v2018 = vmul.f32 1.0, %v2017
    %v2019 = vrcp.pop %v1415
    %v2020 = vmul.f32 %v1415, %v2019
    %v2021 = vsub.f32 1.0, %v2020
    %v2022 = vmul.f32 %v2019, %v2021
    %v2023 = vadd.f32 %v2019, %v2022
    %vm2024 = vweird.f32 %v1415
    %vm2025 = vweird.f32 %v2019
    %vm2026 = vmor %vm2024, %vm2025
    %v2027 = vsel %vm2026, %v2019, %v2023
    %v2028 = vand.u32 2147483647, %v1415
    %vm2029 = vcmp.eq.f32.partialorder %v2028, 8.507059e+37
    %v2030 = vand.u32 %v1415, 2147483648
    %v2031 = vor.u32 1.1754944e-38, %v2030
    %v2032 = vsel %vm2029, %v2031, %v2027
    %v2033 = vmul.f32 1.0, %v2032
    %v2034 = vrcp.pop %v1416
    %v2035 = vmul.f32 %v1416, %v2034
    %v2036 = vsub.f32 1.0, %v2035
    %v2037 = vmul.f32 %v2034, %v2036
    %v2038 = vadd.f32 %v2034, %v2037
    %vm2039 = vweird.f32 %v1416
    %vm2040 = vweird.f32 %v2034
    %vm2041 = vmor %vm2039, %vm2040
    %v2042 = vsel %vm2041, %v2034, %v2038
    %v2043 = vand.u32 2147483647, %v1416
    %vm2044 = vcmp.eq.f32.partialorder %v2043, 8.507059e+37
    %v2045 = vand.u32 %v1416, 2147483648
    %v2046 = vor.u32 1.1754944e-38, %v2045
    %v2047 = vsel %vm2044, %v2046, %v2042
    %v2048 = vmul.f32 1.0, %v2047
    %v2049 = vrcp.pop %v1417
    %v2050 = vmul.f32 %v1417, %v2049
    %v2051 = vsub.f32 1.0, %v2050
    %v2052 = vmul.f32 %v2049, %v2051
    %v2053 = vadd.f32 %v2049, %v2052
    %vm2054 = vweird.f32 %v1417
    %vm2055 = vweird.f32 %v2049
    %vm2056 = vmor %vm2054, %vm2055
    %v2057 = vsel %vm2056, %v2049, %v2053
    %v2058 = vand.u32 2147483647, %v1417
    %vm2059 = vcmp.eq.f32.partialorder %v2058, 8.507059e+37
    %v2060 = vand.u32 %v1417, 2147483648
    %v2061 = vor.u32 1.1754944e-38, %v2060
    %v2062 = vsel %vm2059, %v2061, %v2057
    %v2063 = vmul.f32 1.0, %v2062
    %v2064 = vrcp.pop %v1418
    %v2065 = vmul.f32 %v1418, %v2064
    %v2066 = vsub.f32 1.0, %v2065
    %v2067 = vmul.f32 %v2064, %v2066
    %v2068 = vadd.f32 %v2064, %v2067
    %vm2069 = vweird.f32 %v1418
    %vm2070 = vweird.f32 %v2064
    %vm2071 = vmor %vm2069, %vm2070
    %v2072 = vsel %vm2071, %v2064, %v2068
    %v2073 = vand.u32 2147483647, %v1418
    %vm2074 = vcmp.eq.f32.partialorder %v2073, 8.507059e+37
    %v2075 = vand.u32 %v1418, 2147483648
    %v2076 = vor.u32 1.1754944e-38, %v2075
    %v2077 = vsel %vm2074, %v2076, %v2072
    %v2078 = vmul.f32 1.0, %v2077
    %v2079 = vrcp.pop %v1419
    %v2080 = vmul.f32 %v1419, %v2079
    %v2081 = vsub.f32 1.0, %v2080
    %v2082 = vmul.f32 %v2079, %v2081
    %v2083 = vadd.f32 %v2079, %v2082
    %vm2084 = vweird.f32 %v1419
    %vm2085 = vweird.f32 %v2079
    %vm2086 = vmor %vm2084, %vm2085
    %v2087 = vsel %vm2086, %v2079, %v2083
    %v2088 = vand.u32 2147483647, %v1419
    %vm2089 = vcmp.eq.f32.partialorder %v2088, 8.507059e+37
    %v2090 = vand.u32 %v1419, 2147483648
    %v2091 = vor.u32 1.1754944e-38, %v2090
    %v2092 = vsel %vm2089, %v2091, %v2087
    %v2093 = vmul.f32 1.0, %v2092
    %v2094 = vrcp.pop %v1420
    %v2095 = vmul.f32 %v1420, %v2094
    %v2096 = vsub.f32 1.0, %v2095
    %v2097 = vmul.f32 %v2094, %v2096
    %v2098 = vadd.f32 %v2094, %v2097
    %vm2099 = vweird.f32 %v1420
    %vm2100 = vweird.f32 %v2094
    %vm2101 = vmor %vm2099, %vm2100
    %v2102 = vsel %vm2101, %v2094, %v2098
    %v2103 = vand.u32 2147483647, %v1420
    %vm2104 = vcmp.eq.f32.partialorder %v2103, 8.507059e+37
    %v2105 = vand.u32 %v1420, 2147483648
    %v2106 = vor.u32 1.1754944e-38, %v2105
    %v2107 = vsel %vm2104, %v2106, %v2102
    %v2108 = vmul.f32 1.0, %v2107
    %v2109 = vrcp.pop %v1421
    %v2110 = vmul.f32 %v1421, %v2109
    %v2111 = vsub.f32 1.0, %v2110
    %v2112 = vmul.f32 %v2109, %v2111
    %v2113 = vadd.f32 %v2109, %v2112
    %vm2114 = vweird.f32 %v1421
    %vm2115 = vweird.f32 %v2109
    %vm2116 = vmor %vm2114, %vm2115
    %v2117 = vsel %vm2116, %v2109, %v2113
    %v2118 = vand.u32 2147483647, %v1421
    %vm2119 = vcmp.eq.f32.partialorder %v2118, 8.507059e+37
    %v2120 = vand.u32 %v1421, 2147483648
    %v2121 = vor.u32 1.1754944e-38, %v2120
    %v2122 = vsel %vm2119, %v2121, %v2117
    %v2123 = vmul.f32 1.0, %v2122
    %v2124 = vrcp.pop %v1422
    %v2125 = vmul.f32 %v1422, %v2124
    %v2126 = vsub.f32 1.0, %v2125
    %v2127 = vmul.f32 %v2124, %v2126
    %v2128 = vadd.f32 %v2124, %v2127
    %vm2129 = vweird.f32 %v1422
    %vm2130 = vweird.f32 %v2124
    %vm2131 = vmor %vm2129, %vm2130
    %v2132 = vsel %vm2131, %v2124, %v2128
    %v2133 = vand.u32 2147483647, %v1422
    %vm2134 = vcmp.eq.f32.partialorder %v2133, 8.507059e+37
    %v2135 = vand.u32 %v1422, 2147483648
    %v2136 = vor.u32 1.1754944e-38, %v2135
    %v2137 = vsel %vm2134, %v2136, %v2132
    %v2138 = vmul.f32 1.0, %v2137
    %v2139 = vrcp.pop %v1423
    %v2140 = vmul.f32 %v1423, %v2139
    %v2141 = vsub.f32 1.0, %v2140
    %v2142 = vmul.f32 %v2139, %v2141
    %v2143 = vadd.f32 %v2139, %v2142
    %vm2144 = vweird.f32 %v1423
    %vm2145 = vweird.f32 %v2139
    %vm2146 = vmor %vm2144, %vm2145
    %v2147 = vsel %vm2146, %v2139, %v2143
    %v2148 = vand.u32 2147483647, %v1423
    %vm2149 = vcmp.eq.f32.partialorder %v2148, 8.507059e+37
    %v2150 = vand.u32 %v1423, 2147483648
    %v2151 = vor.u32 1.1754944e-38, %v2150
    %v2152 = vsel %vm2149, %v2151, %v2147
    %v2153 = vmul.f32 1.0, %v2152
    %v2154 = vrcp.pop %v1424
    %v2155 = vmul.f32 %v1424, %v2154
    %v2156 = vsub.f32 1.0, %v2155
    %v2157 = vmul.f32 %v2154, %v2156
    %v2158 = vadd.f32 %v2154, %v2157
    %vm2159 = vweird.f32 %v1424
    %vm2160 = vweird.f32 %v2154
    %vm2161 = vmor %vm2159, %vm2160
    %v2162 = vsel %vm2161, %v2154, %v2158
    %v2163 = vand.u32 2147483647, %v1424
    %vm2164 = vcmp.eq.f32.partialorder %v2163, 8.507059e+37
    %v2165 = vand.u32 %v1424, 2147483648
    %v2166 = vor.u32 1.1754944e-38, %v2165
    %v2167 = vsel %vm2164, %v2166, %v2162
    %v2168 = vmul.f32 1.0, %v2167
    %v2169 = vrcp.pop %v1425
    %v2170 = vmul.f32 %v1425, %v2169
    %v2171 = vsub.f32 1.0, %v2170
    %v2172 = vmul.f32 %v2169, %v2171
    %v2173 = vadd.f32 %v2169, %v2172
    %vm2174 = vweird.f32 %v1425
    %vm2175 = vweird.f32 %v2169
    %vm2176 = vmor %vm2174, %vm2175
    %v2177 = vsel %vm2176, %v2169, %v2173
    %v2178 = vand.u32 2147483647, %v1425
    %vm2179 = vcmp.eq.f32.partialorder %v2178, 8.507059e+37
    %v2180 = vand.u32 %v1425, 2147483648
    %v2181 = vor.u32 1.1754944e-38, %v2180
    %v2182 = vsel %vm2179, %v2181, %v2177
    %v2183 = vmul.f32 1.0, %v2182
    %v2184 = vrcp.pop %v1426
    %v2185 = vmul.f32 %v1426, %v2184
    %v2186 = vsub.f32 1.0, %v2185
    %v2187 = vmul.f32 %v2184, %v2186
    %v2188 = vadd.f32 %v2184, %v2187
    %vm2189 = vweird.f32 %v1426
    %vm2190 = vweird.f32 %v2184
    %vm2191 = vmor %vm2189, %vm2190
    %v2192 = vsel %vm2191, %v2184, %v2188
    %v2193 = vand.u32 2147483647, %v1426
    %vm2194 = vcmp.eq.f32.partialorder %v2193, 8.507059e+37
    %v2195 = vand.u32 %v1426, 2147483648
    %v2196 = vor.u32 1.1754944e-38, %v2195
    %v2197 = vsel %vm2194, %v2196, %v2192
    %v2198 = vmul.f32 1.0, %v2197
    %v2199 = vrcp.pop %v1427
    %v2200 = vmul.f32 %v1427, %v2199
    %v2201 = vsub.f32 1.0, %v2200
    %v2202 = vmul.f32 %v2199, %v2201
    %v2203 = vadd.f32 %v2199, %v2202
    %vm2204 = vweird.f32 %v1427
    %vm2205 = vweird.f32 %v2199
    %vm2206 = vmor %vm2204, %vm2205
    %v2207 = vsel %vm2206, %v2199, %v2203
    %v2208 = vand.u32 2147483647, %v1427
    %vm2209 = vcmp.eq.f32.partialorder %v2208, 8.507059e+37
    %v2210 = vand.u32 %v1427, 2147483648
    %v2211 = vor.u32 1.1754944e-38, %v2210
    %v2212 = vsel %vm2209, %v2211, %v2207
    %v2213 = vmul.f32 1.0, %v2212
    %v2214 = vrcp.pop %v1428
    %v2215 = vmul.f32 %v1428, %v2214
    %v2216 = vsub.f32 1.0, %v2215
    %v2217 = vmul.f32 %v2214, %v2216
    %v2218 = vadd.f32 %v2214, %v2217
    %vm2219 = vweird.f32 %v1428
    %vm2220 = vweird.f32 %v2214
    %vm2221 = vmor %vm2219, %vm2220
    %v2222 = vsel %vm2221, %v2214, %v2218
    %v2223 = vand.u32 2147483647, %v1428
    %vm2224 = vcmp.eq.f32.partialorder %v2223, 8.507059e+37
    %v2225 = vand.u32 %v1428, 2147483648
    %v2226 = vor.u32 1.1754944e-38, %v2225
    %v2227 = vsel %vm2224, %v2226, %v2222
    %v2228 = vmul.f32 1.0, %v2227
    %v2229 = vrcp.pop %v1429
    %v2230 = vmul.f32 %v1429, %v2229
    %v2231 = vsub.f32 1.0, %v2230
    %v2232 = vmul.f32 %v2229, %v2231
    %v2233 = vadd.f32 %v2229, %v2232
    %vm2234 = vweird.f32 %v1429
    %vm2235 = vweird.f32 %v2229
    %vm2236 = vmor %vm2234, %vm2235
    %v2237 = vsel %vm2236, %v2229, %v2233
    %v2238 = vand.u32 2147483647, %v1429
    %vm2239 = vcmp.eq.f32.partialorder %v2238, 8.507059e+37
    %v2240 = vand.u32 %v1429, 2147483648
    %v2241 = vor.u32 1.1754944e-38, %v2240
    %v2242 = vsel %vm2239, %v2241, %v2237
    %v2243 = vmul.f32 1.0, %v2242
    %v2244 = vrcp.pop %v1430
    %v2245 = vmul.f32 %v1430, %v2244
    %v2246 = vsub.f32 1.0, %v2245
    %v2247 = vmul.f32 %v2244, %v2246
    %v2248 = vadd.f32 %v2244, %v2247
    %vm2249 = vweird.f32 %v1430
    %vm2250 = vweird.f32 %v2244
    %vm2251 = vmor %vm2249, %vm2250
    %v2252 = vsel %vm2251, %v2244, %v2248
    %v2253 = vand.u32 2147483647, %v1430
    %vm2254 = vcmp.eq.f32.partialorder %v2253, 8.507059e+37
    %v2255 = vand.u32 %v1430, 2147483648
    %v2256 = vor.u32 1.1754944e-38, %v2255
    %v2257 = vsel %vm2254, %v2256, %v2252
    %v2258 = vmul.f32 1.0, %v2257
    %v2259 = vrcp.pop %v1431
    %v2260 = vmul.f32 %v1431, %v2259
    %v2261 = vsub.f32 1.0, %v2260
    %v2262 = vmul.f32 %v2259, %v2261
    %v2263 = vadd.f32 %v2259, %v2262
    %vm2264 = vweird.f32 %v1431
    %vm2265 = vweird.f32 %v2259
    %vm2266 = vmor %vm2264, %vm2265
    %v2267 = vsel %vm2266, %v2259, %v2263
    %v2268 = vand.u32 2147483647, %v1431
    %vm2269 = vcmp.eq.f32.partialorder %v2268, 8.507059e+37
    %v2270 = vand.u32 %v1431, 2147483648
    %v2271 = vor.u32 1.1754944e-38, %v2270
    %v2272 = vsel %vm2269, %v2271, %v2267
    %v2273 = vmul.f32 1.0, %v2272
    %v2274 = vrcp.pop %v1432
    %v2275 = vmul.f32 %v1432, %v2274
    %v2276 = vsub.f32 1.0, %v2275
    %v2277 = vmul.f32 %v2274, %v2276
    %v2278 = vadd.f32 %v2274, %v2277
    %vm2279 = vweird.f32 %v1432
    %vm2280 = vweird.f32 %v2274
    %vm2281 = vmor %vm2279, %vm2280
    %v2282 = vsel %vm2281, %v2274, %v2278
    %v2283 = vand.u32 2147483647, %v1432
    %vm2284 = vcmp.eq.f32.partialorder %v2283, 8.507059e+37
    %v2285 = vand.u32 %v1432, 2147483648
    %v2286 = vor.u32 1.1754944e-38, %v2285
    %v2287 = vsel %vm2284, %v2286, %v2282
    %v2288 = vmul.f32 1.0, %v2287
    %v2289 = vrcp.pop %v1433
    %v2290 = vmul.f32 %v1433, %v2289
    %v2291 = vsub.f32 1.0, %v2290
    %v2292 = vmul.f32 %v2289, %v2291
    %v2293 = vadd.f32 %v2289, %v2292
    %vm2294 = vweird.f32 %v1433
    %vm2295 = vweird.f32 %v2289
    %vm2296 = vmor %vm2294, %vm2295
    %v2297 = vsel %vm2296, %v2289, %v2293
    %v2298 = vand.u32 2147483647, %v1433
    %vm2299 = vcmp.eq.f32.partialorder %v2298, 8.507059e+37
    %v2300 = vand.u32 %v1433, 2147483648
    %v2301 = vor.u32 1.1754944e-38, %v2300
    %v2302 = vsel %vm2299, %v2301, %v2297
    %v2303 = vmul.f32 1.0, %v2302
    %v2304 = vrcp.pop %v1434
    %v2305 = vmul.f32 %v1434, %v2304
    %v2306 = vsub.f32 1.0, %v2305
    %v2307 = vmul.f32 %v2304, %v2306
    %v2308 = vadd.f32 %v2304, %v2307
    %vm2309 = vweird.f32 %v1434
    %vm2310 = vweird.f32 %v2304
    %vm2311 = vmor %vm2309, %vm2310
    %v2312 = vsel %vm2311, %v2304, %v2308
    %v2313 = vand.u32 2147483647, %v1434
    %vm2314 = vcmp.eq.f32.partialorder %v2313, 8.507059e+37
    %v2315 = vand.u32 %v1434, 2147483648
    %v2316 = vor.u32 1.1754944e-38, %v2315
    %v2317 = vsel %vm2314, %v2316, %v2312
    %v2318 = vmul.f32 1.0, %v2317
    %v2319 = vrcp.pop %v1435
    %v2320 = vmul.f32 %v1435, %v2319
    %v2321 = vsub.f32 1.0, %v2320
    %v2322 = vmul.f32 %v2319, %v2321
    %v2323 = vadd.f32 %v2319, %v2322
    %vm2324 = vweird.f32 %v1435
    %vm2325 = vweird.f32 %v2319
    %vm2326 = vmor %vm2324, %vm2325
    %v2327 = vsel %vm2326, %v2319, %v2323
    %v2328 = vand.u32 2147483647, %v1435
    %vm2329 = vcmp.eq.f32.partialorder %v2328, 8.507059e+37
    %v2330 = vand.u32 %v1435, 2147483648
    %v2331 = vor.u32 1.1754944e-38, %v2330
    %v2332 = vsel %vm2329, %v2331, %v2327
    %v2333 = vmul.f32 1.0, %v2332
    %v2334 = vrcp.pop %v1436
    %v2335 = vmul.f32 %v1436, %v2334
    %v2336 = vsub.f32 1.0, %v2335
    %v2337 = vmul.f32 %v2334, %v2336
    %v2338 = vadd.f32 %v2334, %v2337
    %vm2339 = vweird.f32 %v1436
    %vm2340 = vweird.f32 %v2334
    %vm2341 = vmor %vm2339, %vm2340
    %v2342 = vsel %vm2341, %v2334, %v2338
    %v2343 = vand.u32 2147483647, %v1436
    %vm2344 = vcmp.eq.f32.partialorder %v2343, 8.507059e+37
    %v2345 = vand.u32 %v1436, 2147483648
    %v2346 = vor.u32 1.1754944e-38, %v2345
    %v2347 = vsel %vm2344, %v2346, %v2342
    %v2348 = vmul.f32 1.0, %v2347
    %v2349 = vrcp.pop %v1437
    %v2350 = vmul.f32 %v1437, %v2349
    %v2351 = vsub.f32 1.0, %v2350
    %v2352 = vmul.f32 %v2349, %v2351
    %v2353 = vadd.f32 %v2349, %v2352
    %vm2354 = vweird.f32 %v1437
    %vm2355 = vweird.f32 %v2349
    %vm2356 = vmor %vm2354, %vm2355
    %v2357 = vsel %vm2356, %v2349, %v2353
    %v2358 = vand.u32 2147483647, %v1437
    %vm2359 = vcmp.eq.f32.partialorder %v2358, 8.507059e+37
    %v2360 = vand.u32 %v1437, 2147483648
    %v2361 = vor.u32 1.1754944e-38, %v2360
    %v2362 = vsel %vm2359, %v2361, %v2357
    %v2363 = vmul.f32 1.0, %v2362
    %v2364 = vrcp.pop %v1438
    %v2365 = vmul.f32 %v1438, %v2364
    %v2366 = vsub.f32 1.0, %v2365
    %v2367 = vmul.f32 %v2364, %v2366
    %v2368 = vadd.f32 %v2364, %v2367
    %vm2369 = vweird.f32 %v1438
    %vm2370 = vweird.f32 %v2364
    %vm2371 = vmor %vm2369, %vm2370
    %v2372 = vsel %vm2371, %v2364, %v2368
    %v2373 = vand.u32 2147483647, %v1438
    %vm2374 = vcmp.eq.f32.partialorder %v2373, 8.507059e+37
    %v2375 = vand.u32 %v1438, 2147483648
    %v2376 = vor.u32 1.1754944e-38, %v2375
    %v2377 = vsel %vm2374, %v2376, %v2372
    %v2378 = vmul.f32 1.0, %v2377
    %v2379 = vrcp.pop %v1439
    %v2380 = vmul.f32 %v1439, %v2379
    %v2381 = vsub.f32 1.0, %v2380
    %v2382 = vmul.f32 %v2379, %v2381
    %v2383 = vadd.f32 %v2379, %v2382
    %vm2384 = vweird.f32 %v1439
    %vm2385 = vweird.f32 %v2379
    %vm2386 = vmor %vm2384, %vm2385
    %v2387 = vsel %vm2386, %v2379, %v2383
    %v2388 = vand.u32 2147483647, %v1439
    %vm2389 = vcmp.eq.f32.partialorder %v2388, 8.507059e+37
    %v2390 = vand.u32 %v1439, 2147483648
    %v2391 = vor.u32 1.1754944e-38, %v2390
    %v2392 = vsel %vm2389, %v2391, %v2387
    %v2393 = vmul.f32 1.0, %v2392
    %v2394 = vrcp.pop %v1440
    %v2395 = vmul.f32 %v1440, %v2394
    %v2396 = vsub.f32 1.0, %v2395
    %v2397 = vmul.f32 %v2394, %v2396
    %v2398 = vadd.f32 %v2394, %v2397
    %vm2399 = vweird.f32 %v1440
    %vm2400 = vweird.f32 %v2394
    %vm2401 = vmor %vm2399, %vm2400
    %v2402 = vsel %vm2401, %v2394, %v2398
    %v2403 = vand.u32 2147483647, %v1440
    %vm2404 = vcmp.eq.f32.partialorder %v2403, 8.507059e+37
    %v2405 = vand.u32 %v1440, 2147483648
    %v2406 = vor.u32 1.1754944e-38, %v2405
    %v2407 = vsel %vm2404, %v2406, %v2402
    %v2408 = vmul.f32 1.0, %v2407
    %v2409 = vrcp.pop %v1441
    %v2410 = vmul.f32 %v1441, %v2409
    %v2411 = vsub.f32 1.0, %v2410
    %v2412 = vmul.f32 %v2409, %v2411
    %v2413 = vadd.f32 %v2409, %v2412
    %vm2414 = vweird.f32 %v1441
    %vm2415 = vweird.f32 %v2409
    %vm2416 = vmor %vm2414, %vm2415
    %v2417 = vsel %vm2416, %v2409, %v2413
    %v2418 = vand.u32 2147483647, %v1441
    %vm2419 = vcmp.eq.f32.partialorder %v2418, 8.507059e+37
    %v2420 = vand.u32 %v1441, 2147483648
    %v2421 = vor.u32 1.1754944e-38, %v2420
    %v2422 = vsel %vm2419, %v2421, %v2417
    %v2423 = vmul.f32 1.0, %v2422
    %v2424 = vrcp.pop %v1442
    %v2425 = vmul.f32 %v1442, %v2424
    %v2426 = vsub.f32 1.0, %v2425
    %v2427 = vmul.f32 %v2424, %v2426
    %v2428 = vadd.f32 %v2424, %v2427
    %vm2429 = vweird.f32 %v1442
    %vm2430 = vweird.f32 %v2424
    %vm2431 = vmor %vm2429, %vm2430
    %v2432 = vsel %vm2431, %v2424, %v2428
    %v2433 = vand.u32 2147483647, %v1442
    %vm2434 = vcmp.eq.f32.partialorder %v2433, 8.507059e+37
    %v2435 = vand.u32 %v1442, 2147483648
    %v2436 = vor.u32 1.1754944e-38, %v2435
    %v2437 = vsel %vm2434, %v2436, %v2432
    %v2438 = vmul.f32 1.0, %v2437
    %v2439 = vrcp.pop %v1443
    %v2440 = vmul.f32 %v1443, %v2439
    %v2441 = vsub.f32 1.0, %v2440
    %v2442 = vmul.f32 %v2439, %v2441
    %v2443 = vadd.f32 %v2439, %v2442
    %vm2444 = vweird.f32 %v1443
    %vm2445 = vweird.f32 %v2439
    %vm2446 = vmor %vm2444, %vm2445
    %v2447 = vsel %vm2446, %v2439, %v2443
    %v2448 = vand.u32 2147483647, %v1443
    %vm2449 = vcmp.eq.f32.partialorder %v2448, 8.507059e+37
    %v2450 = vand.u32 %v1443, 2147483648
    %v2451 = vor.u32 1.1754944e-38, %v2450
    %v2452 = vsel %vm2449, %v2451, %v2447
    %v2453 = vmul.f32 1.0, %v2452
    %v2454 = vrcp.pop %v1444
    %v2455 = vmul.f32 %v1444, %v2454
    %v2456 = vsub.f32 1.0, %v2455
    %v2457 = vmul.f32 %v2454, %v2456
    %v2458 = vadd.f32 %v2454, %v2457
    %vm2459 = vweird.f32 %v1444
    %vm2460 = vweird.f32 %v2454
    %vm2461 = vmor %vm2459, %vm2460
    %v2462 = vsel %vm2461, %v2454, %v2458
    %v2463 = vand.u32 2147483647, %v1444
    %vm2464 = vcmp.eq.f32.partialorder %v2463, 8.507059e+37
    %v2465 = vand.u32 %v1444, 2147483648
    %v2466 = vor.u32 1.1754944e-38, %v2465
    %v2467 = vsel %vm2464, %v2466, %v2462
    %v2468 = vmul.f32 1.0, %v2467
    %v2469 = vrcp.pop %v1445
    %v2470 = vmul.f32 %v1445, %v2469
    %v2471 = vsub.f32 1.0, %v2470
    %v2472 = vmul.f32 %v2469, %v2471
    %v2473 = vadd.f32 %v2469, %v2472
    %vm2474 = vweird.f32 %v1445
    %vm2475 = vweird.f32 %v2469
    %vm2476 = vmor %vm2474, %vm2475
    %v2477 = vsel %vm2476, %v2469, %v2473
    %v2478 = vand.u32 2147483647, %v1445
    %vm2479 = vcmp.eq.f32.partialorder %v2478, 8.507059e+37
    %v2480 = vand.u32 %v1445, 2147483648
    %v2481 = vor.u32 1.1754944e-38, %v2480
    %v2482 = vsel %vm2479, %v2481, %v2477
    %v2483 = vmul.f32 1.0, %v2482
    %v2484 = vrcp.pop %v1446
    %v2485 = vmul.f32 %v1446, %v2484
    %v2486 = vsub.f32 1.0, %v2485
    %v2487 = vmul.f32 %v2484, %v2486
    %v2488 = vadd.f32 %v2484, %v2487
    %vm2489 = vweird.f32 %v1446
    %vm2490 = vweird.f32 %v2484
    %vm2491 = vmor %vm2489, %vm2490
    %v2492 = vsel %vm2491, %v2484, %v2488
    %v2493 = vand.u32 2147483647, %v1446
    %vm2494 = vcmp.eq.f32.partialorder %v2493, 8.507059e+37
    %v2495 = vand.u32 %v1446, 2147483648
    %v2496 = vor.u32 1.1754944e-38, %v2495
    %v2497 = vsel %vm2494, %v2496, %v2492
    %v2498 = vmul.f32 1.0, %v2497
    %v2499 = vrcp.pop %v1447
    %v2500 = vmul.f32 %v1447, %v2499
    %v2501 = vsub.f32 1.0, %v2500
    %v2502 = vmul.f32 %v2499, %v2501
    %v2503 = vadd.f32 %v2499, %v2502
    %vm2504 = vweird.f32 %v1447
    %vm2505 = vweird.f32 %v2499
    %vm2506 = vmor %vm2504, %vm2505
    %v2507 = vsel %vm2506, %v2499, %v2503
    %v2508 = vand.u32 2147483647, %v1447
    %vm2509 = vcmp.eq.f32.partialorder %v2508, 8.507059e+37
    %v2510 = vand.u32 %v1447, 2147483648
    %v2511 = vor.u32 1.1754944e-38, %v2510
    %v2512 = vsel %vm2509, %v2511, %v2507
    %v2513 = vmul.f32 1.0, %v2512
    %v2514 = vrcp.pop %v1448
    %v2515 = vmul.f32 %v1448, %v2514
    %v2516 = vsub.f32 1.0, %v2515
    %v2517 = vmul.f32 %v2514, %v2516
    %v2518 = vadd.f32 %v2514, %v2517
    %vm2519 = vweird.f32 %v1448
    %vm2520 = vweird.f32 %v2514
    %vm2521 = vmor %vm2519, %vm2520
    %v2522 = vsel %vm2521, %v2514, %v2518
    %v2523 = vand.u32 2147483647, %v1448
    %vm2524 = vcmp.eq.f32.partialorder %v2523, 8.507059e+37
    %v2525 = vand.u32 %v1448, 2147483648
    %v2526 = vor.u32 1.1754944e-38, %v2525
    %v2527 = vsel %vm2524, %v2526, %v2522
    %v2528 = vmul.f32 1.0, %v2527
    %v2529 = vrcp.pop %v1449
    %v2530 = vmul.f32 %v1449, %v2529
    %v2531 = vsub.f32 1.0, %v2530
    %v2532 = vmul.f32 %v2529, %v2531
    %v2533 = vadd.f32 %v2529, %v2532
    %vm2534 = vweird.f32 %v1449
    %vm2535 = vweird.f32 %v2529
    %vm2536 = vmor %vm2534, %vm2535
    %v2537 = vsel %vm2536, %v2529, %v2533
    %v2538 = vand.u32 2147483647, %v1449
    %vm2539 = vcmp.eq.f32.partialorder %v2538, 8.507059e+37
    %v2540 = vand.u32 %v1449, 2147483648
    %v2541 = vor.u32 1.1754944e-38, %v2540
    %v2542 = vsel %vm2539, %v2541, %v2537
    %v2543 = vmul.f32 1.0, %v2542
    %v2544 = vrcp.pop %v1450
    %v2545 = vmul.f32 %v1450, %v2544
    %v2546 = vsub.f32 1.0, %v2545
    %v2547 = vmul.f32 %v2544, %v2546
    %v2548 = vadd.f32 %v2544, %v2547
    %vm2549 = vweird.f32 %v1450
    %vm2550 = vweird.f32 %v2544
    %vm2551 = vmor %vm2549, %vm2550
    %v2552 = vsel %vm2551, %v2544, %v2548
    %v2553 = vand.u32 2147483647, %v1450
    %vm2554 = vcmp.eq.f32.partialorder %v2553, 8.507059e+37
    %v2555 = vand.u32 %v1450, 2147483648
    %v2556 = vor.u32 1.1754944e-38, %v2555
    %v2557 = vsel %vm2554, %v2556, %v2552
    %v2558 = vmul.f32 1.0, %v2557
    %v2559 = vrcp.pop %v1451
    %v2560 = vmul.f32 %v1451, %v2559
    %v2561 = vsub.f32 1.0, %v2560
    %v2562 = vmul.f32 %v2559, %v2561
    %v2563 = vadd.f32 %v2559, %v2562
    %vm2564 = vweird.f32 %v1451
    %vm2565 = vweird.f32 %v2559
    %vm2566 = vmor %vm2564, %vm2565
    %v2567 = vsel %vm2566, %v2559, %v2563
    %v2568 = vand.u32 2147483647, %v1451
    %vm2569 = vcmp.eq.f32.partialorder %v2568, 8.507059e+37
    %v2570 = vand.u32 %v1451, 2147483648
    %v2571 = vor.u32 1.1754944e-38, %v2570
    %v2572 = vsel %vm2569, %v2571, %v2567
    %v2573 = vmul.f32 1.0, %v2572
    %v2574 = vrcp.pop %v1452
    %v2575 = vmul.f32 %v1452, %v2574
    %v2576 = vsub.f32 1.0, %v2575
    %v2577 = vmul.f32 %v2574, %v2576
    %v2578 = vadd.f32 %v2574, %v2577
    %vm2579 = vweird.f32 %v1452
    %vm2580 = vweird.f32 %v2574
    %vm2581 = vmor %vm2579, %vm2580
    %v2582 = vsel %vm2581, %v2574, %v2578
    %v2583 = vand.u32 2147483647, %v1452
    %vm2584 = vcmp.eq.f32.partialorder %v2583, 8.507059e+37
    %v2585 = vand.u32 %v1452, 2147483648
    %v2586 = vor.u32 1.1754944e-38, %v2585
    %v2587 = vsel %vm2584, %v2586, %v2582
    %v2588 = vmul.f32 1.0, %v2587
    %v2589 = vrcp.pop %v1453
    %v2590 = vmul.f32 %v1453, %v2589
    %v2591 = vsub.f32 1.0, %v2590
    %v2592 = vmul.f32 %v2589, %v2591
    %v2593 = vadd.f32 %v2589, %v2592
    %vm2594 = vweird.f32 %v1453
    %vm2595 = vweird.f32 %v2589
    %vm2596 = vmor %vm2594, %vm2595
    %v2597 = vsel %vm2596, %v2589, %v2593
    %v2598 = vand.u32 2147483647, %v1453
    %vm2599 = vcmp.eq.f32.partialorder %v2598, 8.507059e+37
    %v2600 = vand.u32 %v1453, 2147483648
    %v2601 = vor.u32 1.1754944e-38, %v2600
    %v2602 = vsel %vm2599, %v2601, %v2597
    %v2603 = vmul.f32 1.0, %v2602
    %v2604 = vrcp.pop %v1454
    %v2605 = vmul.f32 %v1454, %v2604
    %v2606 = vsub.f32 1.0, %v2605
    %v2607 = vmul.f32 %v2604, %v2606
    %v2608 = vadd.f32 %v2604, %v2607
    %vm2609 = vweird.f32 %v1454
    %vm2610 = vweird.f32 %v2604
    %vm2611 = vmor %vm2609, %vm2610
    %v2612 = vsel %vm2611, %v2604, %v2608
    %v2613 = vand.u32 2147483647, %v1454
    %vm2614 = vcmp.eq.f32.partialorder %v2613, 8.507059e+37
    %v2615 = vand.u32 %v1454, 2147483648
    %v2616 = vor.u32 1.1754944e-38, %v2615
    %v2617 = vsel %vm2614, %v2616, %v2612
    %v2618 = vmul.f32 1.0, %v2617
    %v2619 = vrcp.pop %v1455
    %v2620 = vmul.f32 %v1455, %v2619
    %v2621 = vsub.f32 1.0, %v2620
    %v2622 = vmul.f32 %v2619, %v2621
    %v2623 = vadd.f32 %v2619, %v2622
    %vm2624 = vweird.f32 %v1455
    %vm2625 = vweird.f32 %v2619
    %vm2626 = vmor %vm2624, %vm2625
    %v2627 = vsel %vm2626, %v2619, %v2623
    %v2628 = vand.u32 2147483647, %v1455
    %vm2629 = vcmp.eq.f32.partialorder %v2628, 8.507059e+37
    %v2630 = vand.u32 %v1455, 2147483648
    %v2631 = vor.u32 1.1754944e-38, %v2630
    %v2632 = vsel %vm2629, %v2631, %v2627
    %v2633 = vmul.f32 1.0, %v2632
    %v2634 = vrcp.pop %v1456
    %v2635 = vmul.f32 %v1456, %v2634
    %v2636 = vsub.f32 1.0, %v2635
    %v2637 = vmul.f32 %v2634, %v2636
    %v2638 = vadd.f32 %v2634, %v2637
    %vm2639 = vweird.f32 %v1456
    %vm2640 = vweird.f32 %v2634
    %vm2641 = vmor %vm2639, %vm2640
    %v2642 = vsel %vm2641, %v2634, %v2638
    %v2643 = vand.u32 2147483647, %v1456
    %vm2644 = vcmp.eq.f32.partialorder %v2643, 8.507059e+37
    %v2645 = vand.u32 %v1456, 2147483648
    %v2646 = vor.u32 1.1754944e-38, %v2645
    %v2647 = vsel %vm2644, %v2646, %v2642
    %v2648 = vmul.f32 1.0, %v2647
    %v2649 = vrcp.pop %v1457
    %v2650 = vmul.f32 %v1457, %v2649
    %v2651 = vsub.f32 1.0, %v2650
    %v2652 = vmul.f32 %v2649, %v2651
    %v2653 = vadd.f32 %v2649, %v2652
    %vm2654 = vweird.f32 %v1457
    %vm2655 = vweird.f32 %v2649
    %vm2656 = vmor %vm2654, %vm2655
    %v2657 = vsel %vm2656, %v2649, %v2653
    %v2658 = vand.u32 2147483647, %v1457
    %vm2659 = vcmp.eq.f32.partialorder %v2658, 8.507059e+37
    %v2660 = vand.u32 %v1457, 2147483648
    %v2661 = vor.u32 1.1754944e-38, %v2660
    %v2662 = vsel %vm2659, %v2661, %v2657
    %v2663 = vmul.f32 1.0, %v2662
    %v2664 = vrcp.pop %v1458
    %v2665 = vmul.f32 %v1458, %v2664
    %v2666 = vsub.f32 1.0, %v2665
    %v2667 = vmul.f32 %v2664, %v2666
    %v2668 = vadd.f32 %v2664, %v2667
    %vm2669 = vweird.f32 %v1458
    %vm2670 = vweird.f32 %v2664
    %vm2671 = vmor %vm2669, %vm2670
    %v2672 = vsel %vm2671, %v2664, %v2668
    %v2673 = vand.u32 2147483647, %v1458
    %vm2674 = vcmp.eq.f32.partialorder %v2673, 8.507059e+37
    %v2675 = vand.u32 %v1458, 2147483648
    %v2676 = vor.u32 1.1754944e-38, %v2675
    %v2677 = vsel %vm2674, %v2676, %v2672
    %v2678 = vmul.f32 1.0, %v2677
    %v2679 = vrcp.pop %v1459
    %v2680 = vmul.f32 %v1459, %v2679
    %v2681 = vsub.f32 1.0, %v2680
    %v2682 = vmul.f32 %v2679, %v2681
    %v2683 = vadd.f32 %v2679, %v2682
    %vm2684 = vweird.f32 %v1459
    %vm2685 = vweird.f32 %v2679
    %vm2686 = vmor %vm2684, %vm2685
    %v2687 = vsel %vm2686, %v2679, %v2683
    %v2688 = vand.u32 2147483647, %v1459
    %vm2689 = vcmp.eq.f32.partialorder %v2688, 8.507059e+37
    %v2690 = vand.u32 %v1459, 2147483648
    %v2691 = vor.u32 1.1754944e-38, %v2690
    %v2692 = vsel %vm2689, %v2691, %v2687
    %v2693 = vmul.f32 1.0, %v2692
    %v2694 = vrcp.pop %v1460
    %v2695 = vmul.f32 %v1460, %v2694
    %v2696 = vsub.f32 1.0, %v2695
    %v2697 = vmul.f32 %v2694, %v2696
    %v2698 = vadd.f32 %v2694, %v2697
    %vm2699 = vweird.f32 %v1460
    %vm2700 = vweird.f32 %v2694
    %vm2701 = vmor %vm2699, %vm2700
    %v2702 = vsel %vm2701, %v2694, %v2698
    %v2703 = vand.u32 2147483647, %v1460
    %vm2704 = vcmp.eq.f32.partialorder %v2703, 8.507059e+37
    %v2705 = vand.u32 %v1460, 2147483648
    %v2706 = vor.u32 1.1754944e-38, %v2705
    %v2707 = vsel %vm2704, %v2706, %v2702
    %v2708 = vmul.f32 1.0, %v2707
    %v2709 = vrcp.pop %v1461
    %v2710 = vmul.f32 %v1461, %v2709
    %v2711 = vsub.f32 1.0, %v2710
    %v2712 = vmul.f32 %v2709, %v2711
    %v2713 = vadd.f32 %v2709, %v2712
    %vm2714 = vweird.f32 %v1461
    %vm2715 = vweird.f32 %v2709
    %vm2716 = vmor %vm2714, %vm2715
    %v2717 = vsel %vm2716, %v2709, %v2713
    %v2718 = vand.u32 2147483647, %v1461
    %vm2719 = vcmp.eq.f32.partialorder %v2718, 8.507059e+37
    %v2720 = vand.u32 %v1461, 2147483648
    %v2721 = vor.u32 1.1754944e-38, %v2720
    %v2722 = vsel %vm2719, %v2721, %v2717
    %v2723 = vmul.f32 1.0, %v2722
    %v2724 = vrcp.pop %v1462
    %v2725 = vmul.f32 %v1462, %v2724
    %v2726 = vsub.f32 1.0, %v2725
    %v2727 = vmul.f32 %v2724, %v2726
    %v2728 = vadd.f32 %v2724, %v2727
    %vm2729 = vweird.f32 %v1462
    %vm2730 = vweird.f32 %v2724
    %vm2731 = vmor %vm2729, %vm2730
    %v2732 = vsel %vm2731, %v2724, %v2728
    %v2733 = vand.u32 2147483647, %v1462
    %vm2734 = vcmp.eq.f32.partialorder %v2733, 8.507059e+37
    %v2735 = vand.u32 %v1462, 2147483648
    %v2736 = vor.u32 1.1754944e-38, %v2735
    %v2737 = vsel %vm2734, %v2736, %v2732
    %v2738 = vmul.f32 1.0, %v2737
    %v2739 = vrcp.pop %v1463
    %v2740 = vmul.f32 %v1463, %v2739
    %v2741 = vsub.f32 1.0, %v2740
    %v2742 = vmul.f32 %v2739, %v2741
    %v2743 = vadd.f32 %v2739, %v2742
    %vm2744 = vweird.f32 %v1463
    %vm2745 = vweird.f32 %v2739
    %vm2746 = vmor %vm2744, %vm2745
    %v2747 = vsel %vm2746, %v2739, %v2743
    %v2748 = vand.u32 2147483647, %v1463
    %vm2749 = vcmp.eq.f32.partialorder %v2748, 8.507059e+37
    %v2750 = vand.u32 %v1463, 2147483648
    %v2751 = vor.u32 1.1754944e-38, %v2750
    %v2752 = vsel %vm2749, %v2751, %v2747
    %v2753 = vmul.f32 1.0, %v2752
    %v2754 = vrcp.pop %v1464
    %v2755 = vmul.f32 %v1464, %v2754
    %v2756 = vsub.f32 1.0, %v2755
    %v2757 = vmul.f32 %v2754, %v2756
    %v2758 = vadd.f32 %v2754, %v2757
    %vm2759 = vweird.f32 %v1464
    %vm2760 = vweird.f32 %v2754
    %vm2761 = vmor %vm2759, %vm2760
    %v2762 = vsel %vm2761, %v2754, %v2758
    %v2763 = vand.u32 2147483647, %v1464
    %vm2764 = vcmp.eq.f32.partialorder %v2763, 8.507059e+37
    %v2765 = vand.u32 %v1464, 2147483648
    %v2766 = vor.u32 1.1754944e-38, %v2765
    %v2767 = vsel %vm2764, %v2766, %v2762
    %v2768 = vmul.f32 1.0, %v2767
    %v2769 = vrcp.pop %v1465
    %v2770 = vmul.f32 %v1465, %v2769
    %v2771 = vsub.f32 1.0, %v2770
    %v2772 = vmul.f32 %v2769, %v2771
    %v2773 = vadd.f32 %v2769, %v2772
    %vm2774 = vweird.f32 %v1465
    %vm2775 = vweird.f32 %v2769
    %vm2776 = vmor %vm2774, %vm2775
    %v2777 = vsel %vm2776, %v2769, %v2773
    %v2778 = vand.u32 2147483647, %v1465
    %vm2779 = vcmp.eq.f32.partialorder %v2778, 8.507059e+37
    %v2780 = vand.u32 %v1465, 2147483648
    %v2781 = vor.u32 1.1754944e-38, %v2780
    %v2782 = vsel %vm2779, %v2781, %v2777
    %v2783 = vmul.f32 1.0, %v2782
    %v2784 = vrcp.pop %v1466
    %v2785 = vmul.f32 %v1466, %v2784
    %v2786 = vsub.f32 1.0, %v2785
    %v2787 = vmul.f32 %v2784, %v2786
    %v2788 = vadd.f32 %v2784, %v2787
    %vm2789 = vweird.f32 %v1466
    %vm2790 = vweird.f32 %v2784
    %vm2791 = vmor %vm2789, %vm2790
    %v2792 = vsel %vm2791, %v2784, %v2788
    %v2793 = vand.u32 2147483647, %v1466
    %vm2794 = vcmp.eq.f32.partialorder %v2793, 8.507059e+37
    %v2795 = vand.u32 %v1466, 2147483648
    %v2796 = vor.u32 1.1754944e-38, %v2795
    %v2797 = vsel %vm2794, %v2796, %v2792
    %v2798 = vmul.f32 1.0, %v2797
    %v2799 = vrcp.pop %v1467
    %v2800 = vmul.f32 %v1467, %v2799
    %v2801 = vsub.f32 1.0, %v2800
    %v2802 = vmul.f32 %v2799, %v2801
    %v2803 = vadd.f32 %v2799, %v2802
    %vm2804 = vweird.f32 %v1467
    %vm2805 = vweird.f32 %v2799
    %vm2806 = vmor %vm2804, %vm2805
    %v2807 = vsel %vm2806, %v2799, %v2803
    %v2808 = vand.u32 2147483647, %v1467
    %vm2809 = vcmp.eq.f32.partialorder %v2808, 8.507059e+37
    %v2810 = vand.u32 %v1467, 2147483648
    %v2811 = vor.u32 1.1754944e-38, %v2810
    %v2812 = vsel %vm2809, %v2811, %v2807
    %v2813 = vmul.f32 1.0, %v2812
    %v2814 = vrcp.pop %v1468
    %v2815 = vmul.f32 %v1468, %v2814
    %v2816 = vsub.f32 1.0, %v2815
    %v2817 = vmul.f32 %v2814, %v2816
    %v2818 = vadd.f32 %v2814, %v2817
    %vm2819 = vweird.f32 %v1468
    %vm2820 = vweird.f32 %v2814
    %vm2821 = vmor %vm2819, %vm2820
    %v2822 = vsel %vm2821, %v2814, %v2818
    %v2823 = vand.u32 2147483647, %v1468
    %vm2824 = vcmp.eq.f32.partialorder %v2823, 8.507059e+37
    %v2825 = vand.u32 %v1468, 2147483648
    %v2826 = vor.u32 1.1754944e-38, %v2825
    %v2827 = vsel %vm2824, %v2826, %v2822
    %v2828 = vmul.f32 1.0, %v2827
    %v2829 = vrcp.pop %v1469
    %v2830 = vmul.f32 %v1469, %v2829
    %v2831 = vsub.f32 1.0, %v2830
    %v2832 = vmul.f32 %v2829, %v2831
    %v2833 = vadd.f32 %v2829, %v2832
    %vm2834 = vweird.f32 %v1469
    %vm2835 = vweird.f32 %v2829
    %vm2836 = vmor %vm2834, %vm2835
    %v2837 = vsel %vm2836, %v2829, %v2833
    %v2838 = vand.u32 2147483647, %v1469
    %vm2839 = vcmp.eq.f32.partialorder %v2838, 8.507059e+37
    %v2840 = vand.u32 %v1469, 2147483648
    %v2841 = vor.u32 1.1754944e-38, %v2840
    %v2842 = vsel %vm2839, %v2841, %v2837
    %v2843 = vmul.f32 1.0, %v2842
    %v2844 = vrcp.pop %v1470
    %v2845 = vmul.f32 %v1470, %v2844
    %v2846 = vsub.f32 1.0, %v2845
    %v2847 = vmul.f32 %v2844, %v2846
    %v2848 = vadd.f32 %v2844, %v2847
    %vm2849 = vweird.f32 %v1470
    %vm2850 = vweird.f32 %v2844
    %vm2851 = vmor %vm2849, %vm2850
    %v2852 = vsel %vm2851, %v2844, %v2848
    %v2853 = vand.u32 2147483647, %v1470
    %vm2854 = vcmp.eq.f32.partialorder %v2853, 8.507059e+37
    %v2855 = vand.u32 %v1470, 2147483648
    %v2856 = vor.u32 1.1754944e-38, %v2855
    %v2857 = vsel %vm2854, %v2856, %v2852
    %v2858 = vmul.f32 1.0, %v2857
    %v2859 = vrcp.pop %v1471
    %v2860 = vmul.f32 %v1471, %v2859
    %v2861 = vsub.f32 1.0, %v2860
    %v2862 = vmul.f32 %v2859, %v2861
    %v2863 = vadd.f32 %v2859, %v2862
    %vm2864 = vweird.f32 %v1471
    %vm2865 = vweird.f32 %v2859
    %vm2866 = vmor %vm2864, %vm2865
    %v2867 = vsel %vm2866, %v2859, %v2863
    %v2868 = vand.u32 2147483647, %v1471
    %vm2869 = vcmp.eq.f32.partialorder %v2868, 8.507059e+37
    %v2870 = vand.u32 %v1471, 2147483648
    %v2871 = vor.u32 1.1754944e-38, %v2870
    %v2872 = vsel %vm2869, %v2871, %v2867
    %v2873 = vmul.f32 1.0, %v2872
    %v2874 = vrcp.pop %v1472
    %v2875 = vmul.f32 %v1472, %v2874
    %v2876 = vsub.f32 1.0, %v2875
    %v2877 = vmul.f32 %v2874, %v2876
    %v2878 = vadd.f32 %v2874, %v2877
    %vm2879 = vweird.f32 %v1472
    %vm2880 = vweird.f32 %v2874
    %vm2881 = vmor %vm2879, %vm2880
    %v2882 = vsel %vm2881, %v2874, %v2878
    %v2883 = vand.u32 2147483647, %v1472
    %vm2884 = vcmp.eq.f32.partialorder %v2883, 8.507059e+37
    %v2885 = vand.u32 %v1472, 2147483648
    %v2886 = vor.u32 1.1754944e-38, %v2885
    %v2887 = vsel %vm2884, %v2886, %v2882
    %v2888 = vmul.f32 1.0, %v2887
    %v2889 = vrcp.pop %v1473
    %v2890 = vmul.f32 %v1473, %v2889
    %v2891 = vsub.f32 1.0, %v2890
    %v2892 = vmul.f32 %v2889, %v2891
    %v2893 = vadd.f32 %v2889, %v2892
    %vm2894 = vweird.f32 %v1473
    %vm2895 = vweird.f32 %v2889
    %vm2896 = vmor %vm2894, %vm2895
    %v2897 = vsel %vm2896, %v2889, %v2893
    %v2898 = vand.u32 2147483647, %v1473
    %vm2899 = vcmp.eq.f32.partialorder %v2898, 8.507059e+37
    %v2900 = vand.u32 %v1473, 2147483648
    %v2901 = vor.u32 1.1754944e-38, %v2900
    %v2902 = vsel %vm2899, %v2901, %v2897
    %v2903 = vmul.f32 1.0, %v2902
    %v2904 = vrcp.pop %v1474
    %v2905 = vmul.f32 %v1474, %v2904
    %v2906 = vsub.f32 1.0, %v2905
    %v2907 = vmul.f32 %v2904, %v2906
    %v2908 = vadd.f32 %v2904, %v2907
    %vm2909 = vweird.f32 %v1474
    %vm2910 = vweird.f32 %v2904
    %vm2911 = vmor %vm2909, %vm2910
    %v2912 = vsel %vm2911, %v2904, %v2908
    %v2913 = vand.u32 2147483647, %v1474
    %vm2914 = vcmp.eq.f32.partialorder %v2913, 8.507059e+37
    %v2915 = vand.u32 %v1474, 2147483648
    %v2916 = vor.u32 1.1754944e-38, %v2915
    %v2917 = vsel %vm2914, %v2916, %v2912
    %v2918 = vmul.f32 1.0, %v2917
    %v2919 = vrcp.pop %v1475
    %v2920 = vmul.f32 %v1475, %v2919
    %v2921 = vsub.f32 1.0, %v2920
    %v2922 = vmul.f32 %v2919, %v2921
    %v2923 = vadd.f32 %v2919, %v2922
    %vm2924 = vweird.f32 %v1475
    %vm2925 = vweird.f32 %v2919
    %vm2926 = vmor %vm2924, %vm2925
    %v2927 = vsel %vm2926, %v2919, %v2923
    %v2928 = vand.u32 2147483647, %v1475
    %vm2929 = vcmp.eq.f32.partialorder %v2928, 8.507059e+37
    %v2930 = vand.u32 %v1475, 2147483648
    %v2931 = vor.u32 1.1754944e-38, %v2930
    %v2932 = vsel %vm2929, %v2931, %v2927
    %v2933 = vmul.f32 1.0, %v2932
    %v2934 = vrcp.pop %v1476
    %v2935 = vmul.f32 %v1476, %v2934
    %v2936 = vsub.f32 1.0, %v2935
    %v2937 = vmul.f32 %v2934, %v2936
    %v2938 = vadd.f32 %v2934, %v2937
    %vm2939 = vweird.f32 %v1476
    %vm2940 = vweird.f32 %v2934
    %vm2941 = vmor %vm2939, %vm2940
    %v2942 = vsel %vm2941, %v2934, %v2938
    %v2943 = vand.u32 2147483647, %v1476
    %vm2944 = vcmp.eq.f32.partialorder %v2943, 8.507059e+37
    %v2945 = vand.u32 %v1476, 2147483648
    %v2946 = vor.u32 1.1754944e-38, %v2945
    %v2947 = vsel %vm2944, %v2946, %v2942
    %v2948 = vmul.f32 1.0, %v2947
    %v2949 = vrcp.pop %v1477
    %v2950 = vmul.f32 %v1477, %v2949
    %v2951 = vsub.f32 1.0, %v2950
    %v2952 = vmul.f32 %v2949, %v2951
    %v2953 = vadd.f32 %v2949, %v2952
    %vm2954 = vweird.f32 %v1477
    %vm2955 = vweird.f32 %v2949
    %vm2956 = vmor %vm2954, %vm2955
    %v2957 = vsel %vm2956, %v2949, %v2953
    %v2958 = vand.u32 2147483647, %v1477
    %vm2959 = vcmp.eq.f32.partialorder %v2958, 8.507059e+37
    %v2960 = vand.u32 %v1477, 2147483648
    %v2961 = vor.u32 1.1754944e-38, %v2960
    %v2962 = vsel %vm2959, %v2961, %v2957
    %v2963 = vmul.f32 1.0, %v2962
    %v2964 = vrcp.pop %v1478
    %v2965 = vmul.f32 %v1478, %v2964
    %v2966 = vsub.f32 1.0, %v2965
    %v2967 = vmul.f32 %v2964, %v2966
    %v2968 = vadd.f32 %v2964, %v2967
    %vm2969 = vweird.f32 %v1478
    %vm2970 = vweird.f32 %v2964
    %vm2971 = vmor %vm2969, %vm2970
    %v2972 = vsel %vm2971, %v2964, %v2968
    %v2973 = vand.u32 2147483647, %v1478
    %vm2974 = vcmp.eq.f32.partialorder %v2973, 8.507059e+37
    %v2975 = vand.u32 %v1478, 2147483648
    %v2976 = vor.u32 1.1754944e-38, %v2975
    %v2977 = vsel %vm2974, %v2976, %v2972
    %v2978 = vmul.f32 1.0, %v2977
    %v2979 = vrcp.pop %v1479
    %v2980 = vmul.f32 %v1479, %v2979
    %v2981 = vsub.f32 1.0, %v2980
    %v2982 = vmul.f32 %v2979, %v2981
    %v2983 = vadd.f32 %v2979, %v2982
    %vm2984 = vweird.f32 %v1479
    %vm2985 = vweird.f32 %v2979
    %vm2986 = vmor %vm2984, %vm2985
    %v2987 = vsel %vm2986, %v2979, %v2983
    %v2988 = vand.u32 2147483647, %v1479
    %vm2989 = vcmp.eq.f32.partialorder %v2988, 8.507059e+37
    %v2990 = vand.u32 %v1479, 2147483648
    %v2991 = vor.u32 1.1754944e-38, %v2990
    %v2992 = vsel %vm2989, %v2991, %v2987
    %v2993 = vmul.f32 1.0, %v2992
    %v2994 = vrcp.pop %v1480
    %v2995 = vmul.f32 %v1480, %v2994
    %v2996 = vsub.f32 1.0, %v2995
    %v2997 = vmul.f32 %v2994, %v2996
    %v2998 = vadd.f32 %v2994, %v2997
    %vm2999 = vweird.f32 %v1480
    %vm3000 = vweird.f32 %v2994
    %vm3001 = vmor %vm2999, %vm3000
    %v3002 = vsel %vm3001, %v2994, %v2998
    %v3003 = vand.u32 2147483647, %v1480
    %vm3004 = vcmp.eq.f32.partialorder %v3003, 8.507059e+37
    %v3005 = vand.u32 %v1480, 2147483648
    %v3006 = vor.u32 1.1754944e-38, %v3005
    %v3007 = vsel %vm3004, %v3006, %v3002
    %v3008 = vmul.f32 1.0, %v3007
    %v3009 = vrcp.pop %v1481
    %v3010 = vmul.f32 %v1481, %v3009
    %v3011 = vsub.f32 1.0, %v3010
    %v3012 = vmul.f32 %v3009, %v3011
    %v3013 = vadd.f32 %v3009, %v3012
    %vm3014 = vweird.f32 %v1481
    %vm3015 = vweird.f32 %v3009
    %vm3016 = vmor %vm3014, %vm3015
    %v3017 = vsel %vm3016, %v3009, %v3013
    %v3018 = vand.u32 2147483647, %v1481
    %vm3019 = vcmp.eq.f32.partialorder %v3018, 8.507059e+37
    %v3020 = vand.u32 %v1481, 2147483648
    %v3021 = vor.u32 1.1754944e-38, %v3020
    %v3022 = vsel %vm3019, %v3021, %v3017
    %v3023 = vmul.f32 1.0, %v3022
    %v3024 = vrcp.pop %v1482
    %v3025 = vmul.f32 %v1482, %v3024
    %v3026 = vsub.f32 1.0, %v3025
    %v3027 = vmul.f32 %v3024, %v3026
    %v3028 = vadd.f32 %v3024, %v3027
    %vm3029 = vweird.f32 %v1482
    %vm3030 = vweird.f32 %v3024
    %vm3031 = vmor %vm3029, %vm3030
    %v3032 = vsel %vm3031, %v3024, %v3028
    %v3033 = vand.u32 2147483647, %v1482
    %vm3034 = vcmp.eq.f32.partialorder %v3033, 8.507059e+37
    %v3035 = vand.u32 %v1482, 2147483648
    %v3036 = vor.u32 1.1754944e-38, %v3035
    %v3037 = vsel %vm3034, %v3036, %v3032
    %v3038 = vmul.f32 1.0, %v3037
    %v3039 = vrcp.pop %v1483
    %v3040 = vmul.f32 %v1483, %v3039
    %v3041 = vsub.f32 1.0, %v3040
    %v3042 = vmul.f32 %v3039, %v3041
    %v3043 = vadd.f32 %v3039, %v3042
    %vm3044 = vweird.f32 %v1483
    %vm3045 = vweird.f32 %v3039
    %vm3046 = vmor %vm3044, %vm3045
    %v3047 = vsel %vm3046, %v3039, %v3043
    %v3048 = vand.u32 2147483647, %v1483
    %vm3049 = vcmp.eq.f32.partialorder %v3048, 8.507059e+37
    %v3050 = vand.u32 %v1483, 2147483648
    %v3051 = vor.u32 1.1754944e-38, %v3050
    %v3052 = vsel %vm3049, %v3051, %v3047
    %v3053 = vmul.f32 1.0, %v3052
    %v3054 = vrcp.pop %v1484
    %v3055 = vmul.f32 %v1484, %v3054
    %v3056 = vsub.f32 1.0, %v3055
    %v3057 = vmul.f32 %v3054, %v3056
    %v3058 = vadd.f32 %v3054, %v3057
    %vm3059 = vweird.f32 %v1484
    %vm3060 = vweird.f32 %v3054
    %vm3061 = vmor %vm3059, %vm3060
    %v3062 = vsel %vm3061, %v3054, %v3058
    %v3063 = vand.u32 2147483647, %v1484
    %vm3064 = vcmp.eq.f32.partialorder %v3063, 8.507059e+37
    %v3065 = vand.u32 %v1484, 2147483648
    %v3066 = vor.u32 1.1754944e-38, %v3065
    %v3067 = vsel %vm3064, %v3066, %v3062
    %v3068 = vmul.f32 1.0, %v3067
    %v3069 = vrcp.pop %v1485
    %v3070 = vmul.f32 %v1485, %v3069
    %v3071 = vsub.f32 1.0, %v3070
    %v3072 = vmul.f32 %v3069, %v3071
    %v3073 = vadd.f32 %v3069, %v3072
    %vm3074 = vweird.f32 %v1485
    %vm3075 = vweird.f32 %v3069
    %vm3076 = vmor %vm3074, %vm3075
    %v3077 = vsel %vm3076, %v3069, %v3073
    %v3078 = vand.u32 2147483647, %v1485
    %vm3079 = vcmp.eq.f32.partialorder %v3078, 8.507059e+37
    %v3080 = vand.u32 %v1485, 2147483648
    %v3081 = vor.u32 1.1754944e-38, %v3080
    %v3082 = vsel %vm3079, %v3081, %v3077
    %v3083 = vmul.f32 1.0, %v3082
    %v3084 = vrcp.pop %v1486
    %v3085 = vmul.f32 %v1486, %v3084
    %v3086 = vsub.f32 1.0, %v3085
    %v3087 = vmul.f32 %v3084, %v3086
    %v3088 = vadd.f32 %v3084, %v3087
    %vm3089 = vweird.f32 %v1486
    %vm3090 = vweird.f32 %v3084
    %vm3091 = vmor %vm3089, %vm3090
    %v3092 = vsel %vm3091, %v3084, %v3088
    %v3093 = vand.u32 2147483647, %v1486
    %vm3094 = vcmp.eq.f32.partialorder %v3093, 8.507059e+37
    %v3095 = vand.u32 %v1486, 2147483648
    %v3096 = vor.u32 1.1754944e-38, %v3095
    %v3097 = vsel %vm3094, %v3096, %v3092
    %v3098 = vmul.f32 1.0, %v3097
    %v3099 = vrcp.pop %v1487
    %v3100 = vmul.f32 %v1487, %v3099
    %v3101 = vsub.f32 1.0, %v3100
    %v3102 = vmul.f32 %v3099, %v3101
    %v3103 = vadd.f32 %v3099, %v3102
    %vm3104 = vweird.f32 %v1487
    %vm3105 = vweird.f32 %v3099
    %vm3106 = vmor %vm3104, %vm3105
    %v3107 = vsel %vm3106, %v3099, %v3103
    %v3108 = vand.u32 2147483647, %v1487
    %vm3109 = vcmp.eq.f32.partialorder %v3108, 8.507059e+37
    %v3110 = vand.u32 %v1487, 2147483648
    %v3111 = vor.u32 1.1754944e-38, %v3110
    %v3112 = vsel %vm3109, %v3111, %v3107
    %v3113 = vmul.f32 1.0, %v3112
    %v3114 = vrcp.pop %v1488
    %v3115 = vmul.f32 %v1488, %v3114
    %v3116 = vsub.f32 1.0, %v3115
    %v3117 = vmul.f32 %v3114, %v3116
    %v3118 = vadd.f32 %v3114, %v3117
    %vm3119 = vweird.f32 %v1488
    %vm3120 = vweird.f32 %v3114
    %vm3121 = vmor %vm3119, %vm3120
    %v3122 = vsel %vm3121, %v3114, %v3118
    %v3123 = vand.u32 2147483647, %v1488
    %vm3124 = vcmp.eq.f32.partialorder %v3123, 8.507059e+37
    %v3125 = vand.u32 %v1488, 2147483648
    %v3126 = vor.u32 1.1754944e-38, %v3125
    %v3127 = vsel %vm3124, %v3126, %v3122
    %v3128 = vmul.f32 1.0, %v3127
    %v3129 = vrcp.pop %v1489
    %v3130 = vmul.f32 %v1489, %v3129
    %v3131 = vsub.f32 1.0, %v3130
    %v3132 = vmul.f32 %v3129, %v3131
    %v3133 = vadd.f32 %v3129, %v3132
    %vm3134 = vweird.f32 %v1489
    %vm3135 = vweird.f32 %v3129
    %vm3136 = vmor %vm3134, %vm3135
    %v3137 = vsel %vm3136, %v3129, %v3133
    %v3138 = vand.u32 2147483647, %v1489
    %vm3139 = vcmp.eq.f32.partialorder %v3138, 8.507059e+37
    %v3140 = vand.u32 %v1489, 2147483648
    %v3141 = vor.u32 1.1754944e-38, %v3140
    %v3142 = vsel %vm3139, %v3141, %v3137
    %v3143 = vmul.f32 1.0, %v3142
    %v3144 = vrcp.pop %v1490
    %v3145 = vmul.f32 %v1490, %v3144
    %v3146 = vsub.f32 1.0, %v3145
    %v3147 = vmul.f32 %v3144, %v3146
    %v3148 = vadd.f32 %v3144, %v3147
    %vm3149 = vweird.f32 %v1490
    %vm3150 = vweird.f32 %v3144
    %vm3151 = vmor %vm3149, %vm3150
    %v3152 = vsel %vm3151, %v3144, %v3148
    %v3153 = vand.u32 2147483647, %v1490
    %vm3154 = vcmp.eq.f32.partialorder %v3153, 8.507059e+37
    %v3155 = vand.u32 %v1490, 2147483648
    %v3156 = vor.u32 1.1754944e-38, %v3155
    %v3157 = vsel %vm3154, %v3156, %v3152
    %v3158 = vmul.f32 1.0, %v3157
    %v3159 = vrcp.pop %v1491
    %v3160 = vmul.f32 %v1491, %v3159
    %v3161 = vsub.f32 1.0, %v3160
    %v3162 = vmul.f32 %v3159, %v3161
    %v3163 = vadd.f32 %v3159, %v3162
    %vm3164 = vweird.f32 %v1491
    %vm3165 = vweird.f32 %v3159
    %vm3166 = vmor %vm3164, %vm3165
    %v3167 = vsel %vm3166, %v3159, %v3163
    %v3168 = vand.u32 2147483647, %v1491
    %vm3169 = vcmp.eq.f32.partialorder %v3168, 8.507059e+37
    %v3170 = vand.u32 %v1491, 2147483648
    %v3171 = vor.u32 1.1754944e-38, %v3170
    %v3172 = vsel %vm3169, %v3171, %v3167
    %v3173 = vmul.f32 1.0, %v3172
    %v3174 = vrcp.pop %v1492
    %v3175 = vmul.f32 %v1492, %v3174
    %v3176 = vsub.f32 1.0, %v3175
    %v3177 = vmul.f32 %v3174, %v3176
    %v3178 = vadd.f32 %v3174, %v3177
    %vm3179 = vweird.f32 %v1492
    %vm3180 = vweird.f32 %v3174
    %vm3181 = vmor %vm3179, %vm3180
    %v3182 = vsel %vm3181, %v3174, %v3178
    %v3183 = vand.u32 2147483647, %v1492
    %vm3184 = vcmp.eq.f32.partialorder %v3183, 8.507059e+37
    %v3185 = vand.u32 %v1492, 2147483648
    %v3186 = vor.u32 1.1754944e-38, %v3185
    %v3187 = vsel %vm3184, %v3186, %v3182
    %v3188 = vmul.f32 1.0, %v3187
    %v3189 = vrcp.pop %v1493
    %v3190 = vmul.f32 %v1493, %v3189
    %v3191 = vsub.f32 1.0, %v3190
    %v3192 = vmul.f32 %v3189, %v3191
    %v3193 = vadd.f32 %v3189, %v3192
    %vm3194 = vweird.f32 %v1493
    %vm3195 = vweird.f32 %v3189
    %vm3196 = vmor %vm3194, %vm3195
    %v3197 = vsel %vm3196, %v3189, %v3193
    %v3198 = vand.u32 2147483647, %v1493
    %vm3199 = vcmp.eq.f32.partialorder %v3198, 8.507059e+37
    %v3200 = vand.u32 %v1493, 2147483648
    %v3201 = vor.u32 1.1754944e-38, %v3200
    %v3202 = vsel %vm3199, %v3201, %v3197
    %v3203 = vmul.f32 1.0, %v3202
    %v3204 = vrcp.pop %v1494
    %v3205 = vmul.f32 %v1494, %v3204
    %v3206 = vsub.f32 1.0, %v3205
    %v3207 = vmul.f32 %v3204, %v3206
    %v3208 = vadd.f32 %v3204, %v3207
    %vm3209 = vweird.f32 %v1494
    %vm3210 = vweird.f32 %v3204
    %vm3211 = vmor %vm3209, %vm3210
    %v3212 = vsel %vm3211, %v3204, %v3208
    %v3213 = vand.u32 2147483647, %v1494
    %vm3214 = vcmp.eq.f32.partialorder %v3213, 8.507059e+37
    %v3215 = vand.u32 %v1494, 2147483648
    %v3216 = vor.u32 1.1754944e-38, %v3215
    %v3217 = vsel %vm3214, %v3216, %v3212
    %v3218 = vmul.f32 1.0, %v3217
    %v3219 = vrcp.pop %v1495
    %v3220 = vmul.f32 %v1495, %v3219
    %v3221 = vsub.f32 1.0, %v3220
    %v3222 = vmul.f32 %v3219, %v3221
    %v3223 = vadd.f32 %v3219, %v3222
    %vm3224 = vweird.f32 %v1495
    %vm3225 = vweird.f32 %v3219
    %vm3226 = vmor %vm3224, %vm3225
    %v3227 = vsel %vm3226, %v3219, %v3223
    %v3228 = vand.u32 2147483647, %v1495
    %vm3229 = vcmp.eq.f32.partialorder %v3228, 8.507059e+37
    %v3230 = vand.u32 %v1495, 2147483648
    %v3231 = vor.u32 1.1754944e-38, %v3230
    %v3232 = vsel %vm3229, %v3231, %v3227
    %v3233 = vmul.f32 1.0, %v3232
    %v3234 = vrcp.pop %v1496
    %v3235 = vmul.f32 %v1496, %v3234
    %v3236 = vsub.f32 1.0, %v3235
    %v3237 = vmul.f32 %v3234, %v3236
    %v3238 = vadd.f32 %v3234, %v3237
    %vm3239 = vweird.f32 %v1496
    %vm3240 = vweird.f32 %v3234
    %vm3241 = vmor %vm3239, %vm3240
    %v3242 = vsel %vm3241, %v3234, %v3238
    %v3243 = vand.u32 2147483647, %v1496
    %vm3244 = vcmp.eq.f32.partialorder %v3243, 8.507059e+37
    %v3245 = vand.u32 %v1496, 2147483648
    %v3246 = vor.u32 1.1754944e-38, %v3245
    %v3247 = vsel %vm3244, %v3246, %v3242
    %v3248 = vmul.f32 1.0, %v3247
    %v3249 = vrcp.pop %v1497
    %v3250 = vmul.f32 %v1497, %v3249
    %v3251 = vsub.f32 1.0, %v3250
    %v3252 = vmul.f32 %v3249, %v3251
    %v3253 = vadd.f32 %v3249, %v3252
    %vm3254 = vweird.f32 %v1497
    %vm3255 = vweird.f32 %v3249
    %vm3256 = vmor %vm3254, %vm3255
    %v3257 = vsel %vm3256, %v3249, %v3253
    %v3258 = vand.u32 2147483647, %v1497
    %vm3259 = vcmp.eq.f32.partialorder %v3258, 8.507059e+37
    %v3260 = vand.u32 %v1497, 2147483648
    %v3261 = vor.u32 1.1754944e-38, %v3260
    %v3262 = vsel %vm3259, %v3261, %v3257
    %v3263 = vmul.f32 1.0, %v3262
    %v3264 = vrcp.pop %v1498
    %v3265 = vmul.f32 %v1498, %v3264
    %v3266 = vsub.f32 1.0, %v3265
    %v3267 = vmul.f32 %v3264, %v3266
    %v3268 = vadd.f32 %v3264, %v3267
    %vm3269 = vweird.f32 %v1498
    %vm3270 = vweird.f32 %v3264
    %vm3271 = vmor %vm3269, %vm3270
    %v3272 = vsel %vm3271, %v3264, %v3268
    %v3273 = vand.u32 2147483647, %v1498
    %vm3274 = vcmp.eq.f32.partialorder %v3273, 8.507059e+37
    %v3275 = vand.u32 %v1498, 2147483648
    %v3276 = vor.u32 1.1754944e-38, %v3275
    %v3277 = vsel %vm3274, %v3276, %v3272
    %v3278 = vmul.f32 1.0, %v3277
    %v3279 = vrcp.pop %v1499
    %v3280 = vmul.f32 %v1499, %v3279
    %v3281 = vsub.f32 1.0, %v3280
    %v3282 = vmul.f32 %v3279, %v3281
    %v3283 = vadd.f32 %v3279, %v3282
    %vm3284 = vweird.f32 %v1499
    %vm3285 = vweird.f32 %v3279
    %vm3286 = vmor %vm3284, %vm3285
    %v3287 = vsel %vm3286, %v3279, %v3283
    %v3288 = vand.u32 2147483647, %v1499
    %vm3289 = vcmp.eq.f32.partialorder %v3288, 8.507059e+37
    %v3290 = vand.u32 %v1499, 2147483648
    %v3291 = vor.u32 1.1754944e-38, %v3290
    %v3292 = vsel %vm3289, %v3291, %v3287
    %v3293 = vmul.f32 1.0, %v3292
    %v3294 = vrcp.pop %v1500
    %v3295 = vmul.f32 %v1500, %v3294
    %v3296 = vsub.f32 1.0, %v3295
    %v3297 = vmul.f32 %v3294, %v3296
    %v3298 = vadd.f32 %v3294, %v3297
    %vm3299 = vweird.f32 %v1500
    %vm3300 = vweird.f32 %v3294
    %vm3301 = vmor %vm3299, %vm3300
    %v3302 = vsel %vm3301, %v3294, %v3298
    %v3303 = vand.u32 2147483647, %v1500
    %vm3304 = vcmp.eq.f32.partialorder %v3303, 8.507059e+37
    %v3305 = vand.u32 %v1500, 2147483648
    %v3306 = vor.u32 1.1754944e-38, %v3305
    %v3307 = vsel %vm3304, %v3306, %v3302
    %v3308 = vmul.f32 1.0, %v3307
    %v3309 = vrcp.pop %v1501
    %v3310 = vmul.f32 %v1501, %v3309
    %v3311 = vsub.f32 1.0, %v3310
    %v3312 = vmul.f32 %v3309, %v3311
    %v3313 = vadd.f32 %v3309, %v3312
    %vm3314 = vweird.f32 %v1501
    %vm3315 = vweird.f32 %v3309
    %vm3316 = vmor %vm3314, %vm3315
    %v3317 = vsel %vm3316, %v3309, %v3313
    %v3318 = vand.u32 2147483647, %v1501
    %vm3319 = vcmp.eq.f32.partialorder %v3318, 8.507059e+37
    %v3320 = vand.u32 %v1501, 2147483648
    %v3321 = vor.u32 1.1754944e-38, %v3320
    %v3322 = vsel %vm3319, %v3321, %v3317
    %v3323 = vmul.f32 1.0, %v3322
    %v3324 = vrcp.pop %v1502
    %v3325 = vmul.f32 %v1502, %v3324
    %v3326 = vsub.f32 1.0, %v3325
    %v3327 = vmul.f32 %v3324, %v3326
    %v3328 = vadd.f32 %v3324, %v3327
    %vm3329 = vweird.f32 %v1502
    %vm3330 = vweird.f32 %v3324
    %vm3331 = vmor %vm3329, %vm3330
    %v3332 = vsel %vm3331, %v3324, %v3328
    %v3333 = vand.u32 2147483647, %v1502
    %vm3334 = vcmp.eq.f32.partialorder %v3333, 8.507059e+37
    %v3335 = vand.u32 %v1502, 2147483648
    %v3336 = vor.u32 1.1754944e-38, %v3335
    %v3337 = vsel %vm3334, %v3336, %v3332
    %v3338 = vmul.f32 1.0, %v3337
    %v3339 = vrcp.pop %v1503
    %v3340 = vmul.f32 %v1503, %v3339
    %v3341 = vsub.f32 1.0, %v3340
    %v3342 = vmul.f32 %v3339, %v3341
    %v3343 = vadd.f32 %v3339, %v3342
    %vm3344 = vweird.f32 %v1503
    %vm3345 = vweird.f32 %v3339
    %vm3346 = vmor %vm3344, %vm3345
    %v3347 = vsel %vm3346, %v3339, %v3343
    %v3348 = vand.u32 2147483647, %v1503
    %vm3349 = vcmp.eq.f32.partialorder %v3348, 8.507059e+37
    %v3350 = vand.u32 %v1503, 2147483648
    %v3351 = vor.u32 1.1754944e-38, %v3350
    %v3352 = vsel %vm3349, %v3351, %v3347
    %v3353 = vmul.f32 1.0, %v3352
    %v3354 = vrcp.pop %v1504
    %v3355 = vmul.f32 %v1504, %v3354
    %v3356 = vsub.f32 1.0, %v3355
    %v3357 = vmul.f32 %v3354, %v3356
    %v3358 = vadd.f32 %v3354, %v3357
    %vm3359 = vweird.f32 %v1504
    %vm3360 = vweird.f32 %v3354
    %vm3361 = vmor %vm3359, %vm3360
    %v3362 = vsel %vm3361, %v3354, %v3358
    %v3363 = vand.u32 2147483647, %v1504
    %vm3364 = vcmp.eq.f32.partialorder %v3363, 8.507059e+37
    %v3365 = vand.u32 %v1504, 2147483648
    %v3366 = vor.u32 1.1754944e-38, %v3365
    %v3367 = vsel %vm3364, %v3366, %v3362
    %v3368 = vmul.f32 1.0, %v3367
    %v3369 = vrcp.pop %v1505
    %v3370 = vmul.f32 %v1505, %v3369
    %v3371 = vsub.f32 1.0, %v3370
    %v3372 = vmul.f32 %v3369, %v3371
    %v3373 = vadd.f32 %v3369, %v3372
    %vm3374 = vweird.f32 %v1505
    %vm3375 = vweird.f32 %v3369
    %vm3376 = vmor %vm3374, %vm3375
    %v3377 = vsel %vm3376, %v3369, %v3373
    %v3378 = vand.u32 2147483647, %v1505
    %vm3379 = vcmp.eq.f32.partialorder %v3378, 8.507059e+37
    %v3380 = vand.u32 %v1505, 2147483648
    %v3381 = vor.u32 1.1754944e-38, %v3380
    %v3382 = vsel %vm3379, %v3381, %v3377
    %v3383 = vmul.f32 1.0, %v3382
    %v3384 = vrcp.pop %v1506
    %v3385 = vmul.f32 %v1506, %v3384
    %v3386 = vsub.f32 1.0, %v3385
    %v3387 = vmul.f32 %v3384, %v3386
    %v3388 = vadd.f32 %v3384, %v3387
    %vm3389 = vweird.f32 %v1506
    %vm3390 = vweird.f32 %v3384
    %vm3391 = vmor %vm3389, %vm3390
    %v3392 = vsel %vm3391, %v3384, %v3388
    %v3393 = vand.u32 2147483647, %v1506
    %vm3394 = vcmp.eq.f32.partialorder %v3393, 8.507059e+37
    %v3395 = vand.u32 %v1506, 2147483648
    %v3396 = vor.u32 1.1754944e-38, %v3395
    %v3397 = vsel %vm3394, %v3396, %v3392
    %v3398 = vmul.f32 1.0, %v3397
    %v3399 = vrcp.pop %v1507
    %v3400 = vmul.f32 %v1507, %v3399
    %v3401 = vsub.f32 1.0, %v3400
    %v3402 = vmul.f32 %v3399, %v3401
    %v3403 = vadd.f32 %v3399, %v3402
    %vm3404 = vweird.f32 %v1507
    %vm3405 = vweird.f32 %v3399
    %vm3406 = vmor %vm3404, %vm3405
    %v3407 = vsel %vm3406, %v3399, %v3403
    %v3408 = vand.u32 2147483647, %v1507
    %vm3409 = vcmp.eq.f32.partialorder %v3408, 8.507059e+37
    %v3410 = vand.u32 %v1507, 2147483648
    %v3411 = vor.u32 1.1754944e-38, %v3410
    %v3412 = vsel %vm3409, %v3411, %v3407
    %v3413 = vmul.f32 1.0, %v3412
    %v3414 = vrcp.pop %v1508
    %v3415 = vmul.f32 %v1508, %v3414
    %v3416 = vsub.f32 1.0, %v3415
    %v3417 = vmul.f32 %v3414, %v3416
    %v3418 = vadd.f32 %v3414, %v3417
    %vm3419 = vweird.f32 %v1508
    %vm3420 = vweird.f32 %v3414
    %vm3421 = vmor %vm3419, %vm3420
    %v3422 = vsel %vm3421, %v3414, %v3418
    %v3423 = vand.u32 2147483647, %v1508
    %vm3424 = vcmp.eq.f32.partialorder %v3423, 8.507059e+37
    %v3425 = vand.u32 %v1508, 2147483648
    %v3426 = vor.u32 1.1754944e-38, %v3425
    %v3427 = vsel %vm3424, %v3426, %v3422
    %v3428 = vmul.f32 1.0, %v3427
    %v3429 = vld [vmem:[#allocation2] sm:$0xff]
    %3430 = vadd.xlane.f32.xlu0 %v1523
    %v3431 = vpop.xlane.xlu0 %3430
    %3432 = vadd.xlane.f32.xlu0 %v1538
    %v3433 = vpop.xlane.xlu0 %3432
    %3434 = vadd.xlane.f32.xlu0 %v1553
    %v3435 = vpop.xlane.xlu0 %3434
    %3436 = vadd.xlane.f32.xlu0 %v1568
    %v3437 = vpop.xlane.xlu0 %3436
    %3438 = vadd.xlane.f32.xlu0 %v1583
    %v3439 = vpop.xlane.xlu0 %3438
    %3440 = vadd.xlane.f32.xlu0 %v1598
    %v3441 = vpop.xlane.xlu0 %3440
    %3442 = vadd.xlane.f32.xlu0 %v1613
    %v3443 = vpop.xlane.xlu0 %3442
    %3444 = vadd.xlane.f32.xlu0 %v1628
    %v3445 = vpop.xlane.xlu0 %3444
    %3446 = vadd.xlane.f32.xlu0 %v1643
    %v3447 = vpop.xlane.xlu0 %3446
    %3448 = vadd.xlane.f32.xlu0 %v1658
    %v3449 = vpop.xlane.xlu0 %3448
    %3450 = vadd.xlane.f32.xlu0 %v1673
    %v3451 = vpop.xlane.xlu0 %3450
    %3452 = vadd.xlane.f32.xlu0 %v1688
    %v3453 = vpop.xlane.xlu0 %3452
    %3454 = vadd.xlane.f32.xlu0 %v1703
    %v3455 = vpop.xlane.xlu0 %3454
    %3456 = vadd.xlane.f32.xlu0 %v1718
    %v3457 = vpop.xlane.xlu0 %3456
    %3458 = vadd.xlane.f32.xlu0 %v1733
    %v3459 = vpop.xlane.xlu0 %3458
    %3460 = vadd.xlane.f32.xlu0 %v1748
    %v3461 = vpop.xlane.xlu0 %3460
    %3462 = vadd.xlane.f32.xlu0 %v1763
    %v3463 = vpop.xlane.xlu0 %3462
    %3464 = vadd.xlane.f32.xlu0 %v1778
    %v3465 = vpop.xlane.xlu0 %3464
    %3466 = vadd.xlane.f32.xlu0 %v1793
    %v3467 = vpop.xlane.xlu0 %3466
    %3468 = vadd.xlane.f32.xlu0 %v1808
    %v3469 = vpop.xlane.xlu0 %3468
    %3470 = vadd.xlane.f32.xlu0 %v1823
    %v3471 = vpop.xlane.xlu0 %3470
    %3472 = vadd.xlane.f32.xlu0 %v1838
    %v3473 = vpop.xlane.xlu0 %3472
    %3474 = vadd.xlane.f32.xlu0 %v1853
    %v3475 = vpop.xlane.xlu0 %3474
    %3476 = vadd.xlane.f32.xlu0 %v1868
    %v3477 = vpop.xlane.xlu0 %3476
    %3478 = vadd.xlane.f32.xlu0 %v1883
    %v3479 = vpop.xlane.xlu0 %3478
    %3480 = vadd.xlane.f32.xlu0 %v1898
    %v3481 = vpop.xlane.xlu0 %3480
    %3482 = vadd.xlane.f32.xlu0 %v1913
    %v3483 = vpop.xlane.xlu0 %3482
    %3484 = vadd.xlane.f32.xlu0 %v1928
    %v3485 = vpop.xlane.xlu0 %3484
    %3486 = vadd.xlane.f32.xlu0 %v1943
    %v3487 = vpop.xlane.xlu0 %3486
    %3488 = vadd.xlane.f32.xlu0 %v1958
    %v3489 = vpop.xlane.xlu0 %3488
    %3490 = vadd.xlane.f32.xlu0 %v1973
    %v3491 = vpop.xlane.xlu0 %3490
    %3492 = vadd.xlane.f32.xlu0 %v1988
    %v3493 = vpop.xlane.xlu0 %3492
    %3494 = vadd.xlane.f32.xlu0 %v2003
    %v3495 = vpop.xlane.xlu0 %3494
    %3496 = vadd.xlane.f32.xlu0 %v2018
    %v3497 = vpop.xlane.xlu0 %3496
    %3498 = vadd.xlane.f32.xlu0 %v2033
    %v3499 = vpop.xlane.xlu0 %3498
    %3500 = vadd.xlane.f32.xlu0 %v2048
    %v3501 = vpop.xlane.xlu0 %3500
    %3502 = vadd.xlane.f32.xlu0 %v2063
    %v3503 = vpop.xlane.xlu0 %3502
    %3504 = vadd.xlane.f32.xlu0 %v2078
    %v3505 = vpop.xlane.xlu0 %3504
    %3506 = vadd.xlane.f32.xlu0 %v2093
    %v3507 = vpop.xlane.xlu0 %3506
    %3508 = vadd.xlane.f32.xlu0 %v2108
    %v3509 = vpop.xlane.xlu0 %3508
    %3510 = vadd.xlane.f32.xlu0 %v2123
    %v3511 = vpop.xlane.xlu0 %3510
    %3512 = vadd.xlane.f32.xlu0 %v2138
    %v3513 = vpop.xlane.xlu0 %3512
    %3514 = vadd.xlane.f32.xlu0 %v2153
    %v3515 = vpop.xlane.xlu0 %3514
    %3516 = vadd.xlane.f32.xlu0 %v2168
    %v3517 = vpop.xlane.xlu0 %3516
    %3518 = vadd.xlane.f32.xlu0 %v2183
    %v3519 = vpop.xlane.xlu0 %3518
    %3520 = vadd.xlane.f32.xlu0 %v2198
    %v3521 = vpop.xlane.xlu0 %3520
    %3522 = vadd.xlane.f32.xlu0 %v2213
    %v3523 = vpop.xlane.xlu0 %3522
    %3524 = vadd.xlane.f32.xlu0 %v2228
    %v3525 = vpop.xlane.xlu0 %3524
    %3526 = vadd.xlane.f32.xlu0 %v2243
    %v3527 = vpop.xlane.xlu0 %3526
    %3528 = vadd.xlane.f32.xlu0 %v2258
    %v3529 = vpop.xlane.xlu0 %3528
    %3530 = vadd.xlane.f32.xlu0 %v2273
    %v3531 = vpop.xlane.xlu0 %3530
    %3532 = vadd.xlane.f32.xlu0 %v2288
    %v3533 = vpop.xlane.xlu0 %3532
    %3534 = vadd.xlane.f32.xlu0 %v2303
    %v3535 = vpop.xlane.xlu0 %3534
    %3536 = vadd.xlane.f32.xlu0 %v2318
    %v3537 = vpop.xlane.xlu0 %3536
    %3538 = vadd.xlane.f32.xlu0 %v2333
    %v3539 = vpop.xlane.xlu0 %3538
    %3540 = vadd.xlane.f32.xlu0 %v2348
    %v3541 = vpop.xlane.xlu0 %3540
    %3542 = vadd.xlane.f32.xlu0 %v2363
    %v3543 = vpop.xlane.xlu0 %3542
    %3544 = vadd.xlane.f32.xlu0 %v2378
    %v3545 = vpop.xlane.xlu0 %3544
    %3546 = vadd.xlane.f32.xlu0 %v2393
    %v3547 = vpop.xlane.xlu0 %3546
    %3548 = vadd.xlane.f32.xlu0 %v2408
    %v3549 = vpop.xlane.xlu0 %3548
    %3550 = vadd.xlane.f32.xlu0 %v2423
    %v3551 = vpop.xlane.xlu0 %3550
    %3552 = vadd.xlane.f32.xlu0 %v2438
    %v3553 = vpop.xlane.xlu0 %3552
    %3554 = vadd.xlane.f32.xlu0 %v2453
    %v3555 = vpop.xlane.xlu0 %3554
    %3556 = vadd.xlane.f32.xlu0 %v2468
    %v3557 = vpop.xlane.xlu0 %3556
    %3558 = vadd.xlane.f32.xlu0 %v2483
    %v3559 = vpop.xlane.xlu0 %3558
    %3560 = vadd.xlane.f32.xlu0 %v2498
    %v3561 = vpop.xlane.xlu0 %3560
    %3562 = vadd.xlane.f32.xlu0 %v2513
    %v3563 = vpop.xlane.xlu0 %3562
    %3564 = vadd.xlane.f32.xlu0 %v2528
    %v3565 = vpop.xlane.xlu0 %3564
    %3566 = vadd.xlane.f32.xlu0 %v2543
    %v3567 = vpop.xlane.xlu0 %3566
    %3568 = vadd.xlane.f32.xlu0 %v2558
    %v3569 = vpop.xlane.xlu0 %3568
    %3570 = vadd.xlane.f32.xlu0 %v2573
    %v3571 = vpop.xlane.xlu0 %3570
    %3572 = vadd.xlane.f32.xlu0 %v2588
    %v3573 = vpop.xlane.xlu0 %3572
    %3574 = vadd.xlane.f32.xlu0 %v2603
    %v3575 = vpop.xlane.xlu0 %3574
    %3576 = vadd.xlane.f32.xlu0 %v2618
    %v3577 = vpop.xlane.xlu0 %3576
    %3578 = vadd.xlane.f32.xlu0 %v2633
    %v3579 = vpop.xlane.xlu0 %3578
    %3580 = vadd.xlane.f32.xlu0 %v2648
    %v3581 = vpop.xlane.xlu0 %3580
    %3582 = vadd.xlane.f32.xlu0 %v2663
    %v3583 = vpop.xlane.xlu0 %3582
    %3584 = vadd.xlane.f32.xlu0 %v2678
    %v3585 = vpop.xlane.xlu0 %3584
    %3586 = vadd.xlane.f32.xlu0 %v2693
    %v3587 = vpop.xlane.xlu0 %3586
    %3588 = vadd.xlane.f32.xlu0 %v2708
    %v3589 = vpop.xlane.xlu0 %3588
    %3590 = vadd.xlane.f32.xlu0 %v2723
    %v3591 = vpop.xlane.xlu0 %3590
    %3592 = vadd.xlane.f32.xlu0 %v2738
    %v3593 = vpop.xlane.xlu0 %3592
    %3594 = vadd.xlane.f32.xlu0 %v2753
    %v3595 = vpop.xlane.xlu0 %3594
    %3596 = vadd.xlane.f32.xlu0 %v2768
    %v3597 = vpop.xlane.xlu0 %3596
    %3598 = vadd.xlane.f32.xlu0 %v2783
    %v3599 = vpop.xlane.xlu0 %3598
    %3600 = vadd.xlane.f32.xlu0 %v2798
    %v3601 = vpop.xlane.xlu0 %3600
    %3602 = vadd.xlane.f32.xlu0 %v2813
    %v3603 = vpop.xlane.xlu0 %3602
    %3604 = vadd.xlane.f32.xlu0 %v2828
    %v3605 = vpop.xlane.xlu0 %3604
    %3606 = vadd.xlane.f32.xlu0 %v2843
    %v3607 = vpop.xlane.xlu0 %3606
    %3608 = vadd.xlane.f32.xlu0 %v2858
    %v3609 = vpop.xlane.xlu0 %3608
    %3610 = vadd.xlane.f32.xlu0 %v2873
    %v3611 = vpop.xlane.xlu0 %3610
    %3612 = vadd.xlane.f32.xlu0 %v2888
    %v3613 = vpop.xlane.xlu0 %3612
    %3614 = vadd.xlane.f32.xlu0 %v2903
    %v3615 = vpop.xlane.xlu0 %3614
    %3616 = vadd.xlane.f32.xlu0 %v2918
    %v3617 = vpop.xlane.xlu0 %3616
    %3618 = vadd.xlane.f32.xlu0 %v2933
    %v3619 = vpop.xlane.xlu0 %3618
    %3620 = vadd.xlane.f32.xlu0 %v2948
    %v3621 = vpop.xlane.xlu0 %3620
    %3622 = vadd.xlane.f32.xlu0 %v2963
    %v3623 = vpop.xlane.xlu0 %3622
    %3624 = vadd.xlane.f32.xlu0 %v2978
    %v3625 = vpop.xlane.xlu0 %3624
    %3626 = vadd.xlane.f32.xlu0 %v2993
    %v3627 = vpop.xlane.xlu0 %3626
    %3628 = vadd.xlane.f32.xlu0 %v3008
    %v3629 = vpop.xlane.xlu0 %3628
    %3630 = vadd.xlane.f32.xlu0 %v3023
    %v3631 = vpop.xlane.xlu0 %3630
    %3632 = vadd.xlane.f32.xlu0 %v3038
    %v3633 = vpop.xlane.xlu0 %3632
    %3634 = vadd.xlane.f32.xlu0 %v3053
    %v3635 = vpop.xlane.xlu0 %3634
    %3636 = vadd.xlane.f32.xlu0 %v3068
    %v3637 = vpop.xlane.xlu0 %3636
    %3638 = vadd.xlane.f32.xlu0 %v3083
    %v3639 = vpop.xlane.xlu0 %3638
    %3640 = vadd.xlane.f32.xlu0 %v3098
    %v3641 = vpop.xlane.xlu0 %3640
    %3642 = vadd.xlane.f32.xlu0 %v3113
    %v3643 = vpop.xlane.xlu0 %3642
    %3644 = vadd.xlane.f32.xlu0 %v3128
    %v3645 = vpop.xlane.xlu0 %3644
    %3646 = vadd.xlane.f32.xlu0 %v3143
    %v3647 = vpop.xlane.xlu0 %3646
    %3648 = vadd.xlane.f32.xlu0 %v3158
    %v3649 = vpop.xlane.xlu0 %3648
    %3650 = vadd.xlane.f32.xlu0 %v3173
    %v3651 = vpop.xlane.xlu0 %3650
    %3652 = vadd.xlane.f32.xlu0 %v3188
    %v3653 = vpop.xlane.xlu0 %3652
    %3654 = vadd.xlane.f32.xlu0 %v3203
    %v3655 = vpop.xlane.xlu0 %3654
    %3656 = vadd.xlane.f32.xlu0 %v3218
    %v3657 = vpop.xlane.xlu0 %3656
    %3658 = vadd.xlane.f32.xlu0 %v3233
    %v3659 = vpop.xlane.xlu0 %3658
    %3660 = vadd.xlane.f32.xlu0 %v3248
    %v3661 = vpop.xlane.xlu0 %3660
    %3662 = vadd.xlane.f32.xlu0 %v3263
    %v3663 = vpop.xlane.xlu0 %3662
    %3664 = vadd.xlane.f32.xlu0 %v3278
    %v3665 = vpop.xlane.xlu0 %3664
    %3666 = vadd.xlane.f32.xlu0 %v3293
    %v3667 = vpop.xlane.xlu0 %3666
    %3668 = vadd.xlane.f32.xlu0 %v3308
    %v3669 = vpop.xlane.xlu0 %3668
    %3670 = vadd.xlane.f32.xlu0 %v3323
    %v3671 = vpop.xlane.xlu0 %3670
    %3672 = vadd.xlane.f32.xlu0 %v3338
    %v3673 = vpop.xlane.xlu0 %3672
    %3674 = vadd.xlane.f32.xlu0 %v3353
    %v3675 = vpop.xlane.xlu0 %3674
    %3676 = vadd.xlane.f32.xlu0 %v3368
    %v3677 = vpop.xlane.xlu0 %3676
    %3678 = vadd.xlane.f32.xlu0 %v3383
    %v3679 = vpop.xlane.xlu0 %3678
    %3680 = vadd.xlane.f32.xlu0 %v3398
    %v3681 = vpop.xlane.xlu0 %3680
    %3682 = vadd.xlane.f32.xlu0 %v3413
    %v3683 = vpop.xlane.xlu0 %3682
    %3684 = vadd.xlane.f32.xlu0 %v3428
    %v3685 = vpop.xlane.xlu0 %3684
    %v3814 = vlaneseq
    %v3815 = vand.u32 %v3814, 127
    %v3816 = vperm.slane %v3431, %v3815
    %v3817 = vadd.s32 %v3815, 4294967288
    %v3818 = vperm.slane %v3433, %v3817
    %vm3819 = vcmask 130112
    %v3820 = vsel %vm3819, %v3818, %v3816
    %v3821 = vadd.s32 %v3815, 4294967280
    %v3822 = vperm.slane %v3435, %v3821
    %vm3823 = vcmask 195712
    %v3824 = vsel %vm3823, %v3822, %v3820
    %v3825 = vadd.s32 %v3815, 4294967272
    %v3826 = vperm.slane %v3437, %v3825
    %vm3827 = vcmask 261312
    %v3828 = vsel %vm3827, %v3826, %v3824
    %v3829 = vadd.s32 %v3815, 4294967264
    %v3830 = vperm.slane %v3439, %v3829
    %vm3831 = vcmask 326912
    %v3832 = vsel %vm3831, %v3830, %v3828
    %v3833 = vadd.s32 %v3815, 4294967256
    %v3834 = vperm.slane %v3441, %v3833
    %vm3835 = vcmask 392512
    %v3836 = vsel %vm3835, %v3834, %v3832
    %v3837 = vadd.s32 %v3815, 4294967248
    %v3838 = vperm.slane %v3443, %v3837
    %vm3839 = vcmask 458112
    %v3840 = vsel %vm3839, %v3838, %v3836
    %v3841 = vadd.s32 %v3815, 4294967240
    %v3842 = vperm.slane %v3445, %v3841
    %vm3843 = vcmask 523712
    %v3844 = vsel %vm3843, %v3842, %v3840
    %v3845 = vadd.s32 %v3815, 4294967232
    %v3846 = vperm.slane %v3447, %v3845
    %vm3847 = vcmask 589312
    %v3848 = vsel %vm3847, %v3846, %v3844
    %v3849 = vadd.s32 %v3815, 4294967224
    %v3850 = vperm.slane %v3449, %v3849
    %vm3851 = vcmask 654912
    %v3852 = vsel %vm3851, %v3850, %v3848
    %v3853 = vadd.s32 %v3815, 4294967216
    %v3854 = vperm.slane %v3451, %v3853
    %vm3855 = vcmask 720512
    %v3856 = vsel %vm3855, %v3854, %v3852
    %v3857 = vadd.s32 %v3815, 4294967208
    %v3858 = vperm.slane %v3453, %v3857
    %vm3859 = vcmask 786112
    %v3860 = vsel %vm3859, %v3858, %v3856
    %v3861 = vadd.s32 %v3815, 4294967200
    %v3862 = vperm.slane %v3455, %v3861
    %vm3863 = vcmask 851712
    %v3864 = vsel %vm3863, %v3862, %v3860
    %v3865 = vadd.s32 %v3815, 4294967192
    %v3866 = vperm.slane %v3457, %v3865
    %vm3867 = vcmask 917312
    %v3868 = vsel %vm3867, %v3866, %v3864
    %v3869 = vadd.s32 %v3815, 4294967184
    %v3870 = vperm.slane %v3459, %v3869
    %vm3871 = vcmask 982912
    %v3872 = vsel %vm3871, %v3870, %v3868
    %v3873 = vadd.s32 %v3815, 4294967176
    %v3874 = vperm.slane %v3461, %v3873
    %vm3875 = vcmask 1048512
    %v3876 = vsel %vm3875, %v3874, %v3872
    %v3877 = vperm.slane %v3463, %v3815
    %v3878 = vperm.slane %v3465, %v3817
    %v3879 = vsel %vm3819, %v3878, %v3877
    %v3880 = vperm.slane %v3467, %v3821
    %v3881 = vsel %vm3823, %v3880, %v3879
    %v3882 = vperm.slane %v3469, %v3825
    %v3883 = vsel %vm3827, %v3882, %v3881
    %v3884 = vperm.slane %v3471, %v3829
    %v3885 = vsel %vm3831, %v3884, %v3883
    %v3886 = vperm.slane %v3473, %v3833
    %v3887 = vsel %vm3835, %v3886, %v3885
    %v3888 = vperm.slane %v3475, %v3837
    %v3889 = vsel %vm3839, %v3888, %v3887
    %v3890 = vperm.slane %v3477, %v3841
    %v3891 = vsel %vm3843, %v3890, %v3889
    %v3892 = vperm.slane %v3479, %v3845
    %v3893 = vsel %vm3847, %v3892, %v3891
    %v3894 = vperm.slane %v3481, %v3849
    %v3895 = vsel %vm3851, %v3894, %v3893
    %v3896 = vperm.slane %v3483, %v3853
    %v3897 = vsel %vm3855, %v3896, %v3895
    %v3898 = vperm.slane %v3485, %v3857
    %v3899 = vsel %vm3859, %v3898, %v3897
    %v3900 = vperm.slane %v3487, %v3861
    %v3901 = vsel %vm3863, %v3900, %v3899
    %v3902 = vperm.slane %v3489, %v3865
    %v3903 = vsel %vm3867, %v3902, %v3901
    %v3904 = vperm.slane %v3491, %v3869
    %v3905 = vsel %vm3871, %v3904, %v3903
    %v3906 = vperm.slane %v3493, %v3873
    %v3907 = vsel %vm3875, %v3906, %v3905
    %v3908 = vperm.slane %v3495, %v3815
    %v3909 = vperm.slane %v3497, %v3817
    %v3910 = vsel %vm3819, %v3909, %v3908
    %v3911 = vperm.slane %v3499, %v3821
    %v3912 = vsel %vm3823, %v3911, %v3910
    %v3913 = vperm.slane %v3501, %v3825
    %v3914 = vsel %vm3827, %v3913, %v3912
    %v3915 = vperm.slane %v3503, %v3829
    %v3916 = vsel %vm3831, %v3915, %v3914
    %v3917 = vperm.slane %v3505, %v3833
    %v3918 = vsel %vm3835, %v3917, %v3916
    %v3919 = vperm.slane %v3507, %v3837
    %v3920 = vsel %vm3839, %v3919, %v3918
    %v3921 = vperm.slane %v3509, %v3841
    %v3922 = vsel %vm3843, %v3921, %v3920
    %v3923 = vperm.slane %v3511, %v3845
    %v3924 = vsel %vm3847, %v3923, %v3922
    %v3925 = vperm.slane %v3513, %v3849
    %v3926 = vsel %vm3851, %v3925, %v3924
    %v3927 = vperm.slane %v3515, %v3853
    %v3928 = vsel %vm3855, %v3927, %v3926
    %v3929 = vperm.slane %v3517, %v3857
    %v3930 = vsel %vm3859, %v3929, %v3928
    %v3931 = vperm.slane %v3519, %v3861
    %v3932 = vsel %vm3863, %v3931, %v3930
    %v3933 = vperm.slane %v3521, %v3865
    %v3934 = vsel %vm3867, %v3933, %v3932
    %v3935 = vperm.slane %v3523, %v3869
    %v3936 = vsel %vm3871, %v3935, %v3934
    %v3937 = vperm.slane %v3525, %v3873
    %v3938 = vsel %vm3875, %v3937, %v3936
    %v3939 = vperm.slane %v3527, %v3815
    %v3940 = vperm.slane %v3529, %v3817
    %v3941 = vsel %vm3819, %v3940, %v3939
    %v3942 = vperm.slane %v3531, %v3821
    %v3943 = vsel %vm3823, %v3942, %v3941
    %v3944 = vperm.slane %v3533, %v3825
    %v3945 = vsel %vm3827, %v3944, %v3943
    %v3946 = vperm.slane %v3535, %v3829
    %v3947 = vsel %vm3831, %v3946, %v3945
    %v3948 = vperm.slane %v3537, %v3833
    %v3949 = vsel %vm3835, %v3948, %v3947
    %v3950 = vperm.slane %v3539, %v3837
    %v3951 = vsel %vm3839, %v3950, %v3949
    %v3952 = vperm.slane %v3541, %v3841
    %v3953 = vsel %vm3843, %v3952, %v3951
    %v3954 = vperm.slane %v3543, %v3845
    %v3955 = vsel %vm3847, %v3954, %v3953
    %v3956 = vperm.slane %v3545, %v3849
    %v3957 = vsel %vm3851, %v3956, %v3955
    %v3958 = vperm.slane %v3547, %v3853
    %v3959 = vsel %vm3855, %v3958, %v3957
    %v3960 = vperm.slane %v3549, %v3857
    %v3961 = vsel %vm3859, %v3960, %v3959
    %v3962 = vperm.slane %v3551, %v3861
    %v3963 = vsel %vm3863, %v3962, %v3961
    %v3964 = vperm.slane %v3553, %v3865
    %v3965 = vsel %vm3867, %v3964, %v3963
    %v3966 = vperm.slane %v3555, %v3869
    %v3967 = vsel %vm3871, %v3966, %v3965
    %v3968 = vperm.slane %v3557, %v3873
    %v3969 = vsel %vm3875, %v3968, %v3967
    %v3970 = vperm.slane %v3559, %v3815
    %v3971 = vperm.slane %v3561, %v3817
    %v3972 = vsel %vm3819, %v3971, %v3970
    %v3973 = vperm.slane %v3563, %v3821
    %v3974 = vsel %vm3823, %v3973, %v3972
    %v3975 = vperm.slane %v3565, %v3825
    %v3976 = vsel %vm3827, %v3975, %v3974
    %v3977 = vperm.slane %v3567, %v3829
    %v3978 = vsel %vm3831, %v3977, %v3976
    %v3979 = vperm.slane %v3569, %v3833
    %v3980 = vsel %vm3835, %v3979, %v3978
    %v3981 = vperm.slane %v3571, %v3837
    %v3982 = vsel %vm3839, %v3981, %v3980
    %v3983 = vperm.slane %v3573, %v3841
    %v3984 = vsel %vm3843, %v3983, %v3982
    %v3985 = vperm.slane %v3575, %v3845
    %v3986 = vsel %vm3847, %v3985, %v3984
    %v3987 = vperm.slane %v3577, %v3849
    %v3988 = vsel %vm3851, %v3987, %v3986
    %v3989 = vperm.slane %v3579, %v3853
    %v3990 = vsel %vm3855, %v3989, %v3988
    %v3991 = vperm.slane %v3581, %v3857
    %v3992 = vsel %vm3859, %v3991, %v3990
    %v3993 = vperm.slane %v3583, %v3861
    %v3994 = vsel %vm3863, %v3993, %v3992
    %v3995 = vperm.slane %v3585, %v3865
    %v3996 = vsel %vm3867, %v3995, %v3994
    %v3997 = vperm.slane %v3587, %v3869
    %v3998 = vsel %vm3871, %v3997, %v3996
    %v3999 = vperm.slane %v3589, %v3873
    %v4000 = vsel %vm3875, %v3999, %v3998
    %v4001 = vperm.slane %v3591, %v3815
    %v4002 = vperm.slane %v3593, %v3817
    %v4003 = vsel %vm3819, %v4002, %v4001
    %v4004 = vperm.slane %v3595, %v3821
    %v4005 = vsel %vm3823, %v4004, %v4003
    %v4006 = vperm.slane %v3597, %v3825
    %v4007 = vsel %vm3827, %v4006, %v4005
    %v4008 = vperm.slane %v3599, %v3829
    %v4009 = vsel %vm3831, %v4008, %v4007
    %v4010 = vperm.slane %v3601, %v3833
    %v4011 = vsel %vm3835, %v4010, %v4009
    %v4012 = vperm.slane %v3603, %v3837
    %v4013 = vsel %vm3839, %v4012, %v4011
    %v4014 = vperm.slane %v3605, %v3841
    %v4015 = vsel %vm3843, %v4014, %v4013
    %v4016 = vperm.slane %v3607, %v3845
    %v4017 = vsel %vm3847, %v4016, %v4015
    %v4018 = vperm.slane %v3609, %v3849
    %v4019 = vsel %vm3851, %v4018, %v4017
    %v4020 = vperm.slane %v3611, %v3853
    %v4021 = vsel %vm3855, %v4020, %v4019
    %v4022 = vperm.slane %v3613, %v3857
    %v4023 = vsel %vm3859, %v4022, %v4021
    %v4024 = vperm.slane %v3615, %v3861
    %v4025 = vsel %vm3863, %v4024, %v4023
    %v4026 = vperm.slane %v3617, %v3865
    %v4027 = vsel %vm3867, %v4026, %v4025
    %v4028 = vperm.slane %v3619, %v3869
    %v4029 = vsel %vm3871, %v4028, %v4027
    %v4030 = vperm.slane %v3621, %v3873
    %v4031 = vsel %vm3875, %v4030, %v4029
    %v4032 = vperm.slane %v3623, %v3815
    %v4033 = vperm.slane %v3625, %v3817
    %v4034 = vsel %vm3819, %v4033, %v4032
    %v4035 = vperm.slane %v3627, %v3821
    %v4036 = vsel %vm3823, %v4035, %v4034
    %v4037 = vperm.slane %v3629, %v3825
    %v4038 = vsel %vm3827, %v4037, %v4036
    %v4039 = vperm.slane %v3631, %v3829
    %v4040 = vsel %vm3831, %v4039, %v4038
    %v4041 = vperm.slane %v3633, %v3833
    %v4042 = vsel %vm3835, %v4041, %v4040
    %v4043 = vperm.slane %v3635, %v3837
    %v4044 = vsel %vm3839, %v4043, %v4042
    %v4045 = vperm.slane %v3637, %v3841
    %v4046 = vsel %vm3843, %v4045, %v4044
    %v4047 = vperm.slane %v3639, %v3845
    %v4048 = vsel %vm3847, %v4047, %v4046
    %v4049 = vperm.slane %v3641, %v3849
    %v4050 = vsel %vm3851, %v4049, %v4048
    %v4051 = vperm.slane %v3643, %v3853
    %v4052 = vsel %vm3855, %v4051, %v4050
    %v4053 = vperm.slane %v3645, %v3857
    %v4054 = vsel %vm3859, %v4053, %v4052
    %v4055 = vperm.slane %v3647, %v3861
    %v4056 = vsel %vm3863, %v4055, %v4054
    %v4057 = vperm.slane %v3649, %v3865
    %v4058 = vsel %vm3867, %v4057, %v4056
    %v4059 = vperm.slane %v3651, %v3869
    %v4060 = vsel %vm3871, %v4059, %v4058
    %v4061 = vperm.slane %v3653, %v3873
    %v4062 = vsel %vm3875, %v4061, %v4060
    %v4063 = vperm.slane %v3655, %v3815
    %v4064 = vperm.slane %v3657, %v3817
    %v4065 = vsel %vm3819, %v4064, %v4063
    %v4066 = vperm.slane %v3659, %v3821
    %v4067 = vsel %vm3823, %v4066, %v4065
    %v4068 = vperm.slane %v3661, %v3825
    %v4069 = vsel %vm3827, %v4068, %v4067
    %v4070 = vperm.slane %v3663, %v3829
    %v4071 = vsel %vm3831, %v4070, %v4069
    %v4072 = vperm.slane %v3665, %v3833
    %v4073 = vsel %vm3835, %v4072, %v4071
    %v4074 = vperm.slane %v3667, %v3837
    %v4075 = vsel %vm3839, %v4074, %v4073
    %v4076 = vperm.slane %v3669, %v3841
    %v4077 = vsel %vm3843, %v4076, %v4075
    %v4078 = vperm.slane %v3671, %v3845
    %v4079 = vsel %vm3847, %v4078, %v4077
    %v4080 = vperm.slane %v3673, %v3849
    %v4081 = vsel %vm3851, %v4080, %v4079
    %v4082 = vperm.slane %v3675, %v3853
    %v4083 = vsel %vm3855, %v4082, %v4081
    %v4084 = vperm.slane %v3677, %v3857
    %v4085 = vsel %vm3859, %v4084, %v4083
    %v4086 = vperm.slane %v3679, %v3861
    %v4087 = vsel %vm3863, %v4086, %v4085
    %v4088 = vperm.slane %v3681, %v3865
    %v4089 = vsel %vm3867, %v4088, %v4087
    %v4090 = vperm.slane %v3683, %v3869
    %v4091 = vsel %vm3871, %v4090, %v4089
    %v4092 = vperm.slane %v3685, %v3873
    %v4093 = vsel %vm3875, %v4092, %v4091
    %vm4094 = vcmask 1041409
    %v4095 = vsel %vm4094, %v3907, %v3876
    %vm4096 = vcmask 1042434
    %v4097 = vsel %vm4096, %v3938, %v4095
    %vm4098 = vcmask 1043459
    %v4099 = vsel %vm4098, %v3969, %v4097
    %vm4100 = vcmask 1044484
    %v4101 = vsel %vm4100, %v4000, %v4099
    %vm4102 = vcmask 1045509
    %v4103 = vsel %vm4102, %v4031, %v4101
    %vm4104 = vcmask 1046534
    %v4105 = vsel %vm4104, %v4062, %v4103
    %vm4106 = vcmask 1047559
    %v4107 = vsel %vm4106, %v4093, %v4105
    %v4109 = vadd.f32 %v3429, %v4107
    %4110 = vst [vmem:[#allocation2] sm:$0xff] %v4109
    // Predicated region
    $region34: #{tpu_custom_call.1} parent=1 // pred_check
      %p4111 = pneg %p56
    $region35: #{tpu_custom_call.1} parent=1 // pred_check_branch
      %4113 = sbr.rel (%p4111) target = $region37
    $region36: #{tpu_custom_call.1} parent=1 // pred_region
      %v4114 = vld [vmem:[#allocation8] sm:$0xff]
      %vm4115 = vcmp.gt.f32.partialorder %v4114, 0.0
      %v4116 = vld [vmem:[#allocation2] sm:$0xff]
      %v4117 = vsel %vm4115, %v4116, 3e+38
      %4118 = vmin.xlane.f32.xlu0 %v4117
      %v4119 = vpop.xlane.xlu0 %4118
      %v4120 = vld [vmem:[#allocation3] sm:$0xff]
      %v4121 = vmin.f32 %v4120, %v4119
      %vm4122 = vcmask 7168
      %4123 = vst.msk [vmem:[#allocation3] sm:$0xff] %vm4122, %v4121
    $region37: #{tpu_custom_call.1} parent=1 // pred_fallthru
      _
    // Predicated region
    $region38: #{tpu_custom_call.1} parent=1 // pred_check
      _
    $region39: #{tpu_custom_call.1} parent=1 // pred_check_branch
      %4125 = sbr.rel (%p57) target = $region41
    $region40: #{tpu_custom_call.1} parent=1 // pred_region
      %v4126 = vld [vmem:[#allocation3] sm:$0xff]
      %vm4127 = vcmp.lt.f32.partialorder %v4126, 3e+38
      %v4128 = vrcp.pop %v4126
      %v4129 = vsel %vm4127, %v4128, 0.0
      %v4130 = vsub.f32 1.0, %v4129
      %vm4131 = vcmask 7168
      %4132 = vst.msk [vmem:[%s3] sm:$0xff] %vm4131, %v4130
    $region41: #{tpu_custom_call.1} parent=1 // pred_fallthru
      _
    // Predicated region
    $region42: #{tpu_custom_call.1} parent=1 // pred_check
      _
    $region43: #{tpu_custom_call.1} parent=1 // pred_check_branch
      %4134 = sbr.rel (0) target = $region45
    $region44: #{tpu_custom_call.1} parent=1 // pred_region
      _
    $region45: #{tpu_custom_call.1} parent=1 // pred_fallthru
      _
    // Predicated region
    $region46: #{tpu_custom_call.1} parent=1 // pred_check
      _
    $region47: #{tpu_custom_call.1} parent=1 // pred_check_branch
      %4136 = sbr.rel (0) target = $region49
    $region48: #{tpu_custom_call.1} parent=1 // pred_region
      _
    $region49: #{tpu_custom_call.1} parent=1 // pred_fallthru
      _
    %4137 = vsyncpa [#allocation5], 1
    %4138 = vsyncpa [#allocation7], 1

</llo_original>
